<compile_context>
chip_gen: v6e
topology: v6e:2x2x1
jax: 0.10.0
libtpu: 0.0.40
codegen_flags: <defaults>
</compile_context>

<pallas_src>
import jax
import jax.numpy as jnp
from jax.experimental import pallas as pl
from jax.experimental.pallas import tpu as pltpu

# ---- model config (small, consistent with the module) ----
B = 2          # batch
S = 8          # sequence length
D_MODEL = 32
NUM_HEADS = 4
D_K = D_MODEL // NUM_HEADS
D_FF = 64
NUM_LAYERS = 2
LN_EPS = 1e-5

# row layout of the per-layer (8, 128) `vec` slab
_ROW_BQKV, _ROW_B1, _ROW_BO, _ROW_B2, _ROW_G1, _ROW_BE1, _ROW_G2, _ROW_BE2 = range(8)


def _layernorm(x, gamma, beta):
    # one-pass variance: E[x^2] - mu^2 (saves one centered-square pass)
    mu = jnp.mean(x, axis=-1, keepdims=True)
    ms = jnp.mean(x * x, axis=-1, keepdims=True)
    var = ms - mu * mu
    return (x - mu) * jax.lax.rsqrt(var + LN_EPS) * gamma + beta


def transformer_kernel(x_ref, w_attn_ref, w_ff_ref, vec_ref, o_ref):
    # x_ref: (B, S, D_MODEL) -> flatten batch*seq onto sublanes (layout-trivial)
    x = x_ref[...].reshape(B * S, D_MODEL)

    for l in range(NUM_LAYERS):                       # static unroll over layers
        # ---- lane-dense packed weights / vectors for layer l ----
        w_qkv = w_attn_ref[l, :, 0:3 * D_MODEL]                  # (32, 96)
        w_o   = w_attn_ref[l, :, 3 * D_MODEL:4 * D_MODEL]        # (32, 32)
        w1    = w_ff_ref[l, 0:D_MODEL, 0:D_FF]                   # (32, 64)
        w2    = w_ff_ref[l, :, D_FF:D_FF + D_MODEL]              # (64, 32)

        b_qkv = vec_ref[l, _ROW_BQKV:_ROW_BQKV + 1, 0:3 * D_MODEL]   # (1, 96)
        b1    = vec_ref[l, _ROW_B1:_ROW_B1 + 1, 0:D_FF]              # (1, 64)
        b_o   = vec_ref[l, _ROW_BO:_ROW_BO + 1, 0:D_MODEL]           # (1, 32)
        b2    = vec_ref[l, _ROW_B2:_ROW_B2 + 1, 0:D_MODEL]
        g1    = vec_ref[l, _ROW_G1:_ROW_G1 + 1, 0:D_MODEL]
        be1   = vec_ref[l, _ROW_BE1:_ROW_BE1 + 1, 0:D_MODEL]
        g2    = vec_ref[l, _ROW_G2:_ROW_G2 + 1, 0:D_MODEL]
        be2   = vec_ref[l, _ROW_BE2:_ROW_BE2 + 1, 0:D_MODEL]

        # ---- fused Q/K/V projection (1/sqrt(D_K) already folded into Q) ----
        qkv = jnp.dot(x, w_qkv, preferred_element_type=jnp.float32) + b_qkv  # (B*S, 96)

        def heads(off):
            # per-head lane slices stacked onto a leading (head-major) batch dim
            return jnp.concatenate(
                [qkv[:, off + h * D_K:off + (h + 1) * D_K].reshape(B, S, D_K)
                 for h in range(NUM_HEADS)], axis=0)              # (H*B, S, D_K)

        qh = heads(0)
        kh = heads(D_MODEL)
        vh = heads(2 * D_MODEL)

        # ---- attention batched over B*NUM_HEADS ----
        s = jnp.einsum("bqd,bkd->bqk", qh, kh,
                       preferred_element_type=jnp.float32)        # (H*B, S, S)
        s = s - jnp.max(s, axis=-1, keepdims=True)
        p = jnp.exp(s)
        p = p * pl.reciprocal(jnp.sum(p, axis=-1, keepdims=True), approx=True)
        oh = jnp.einsum("bqk,bkd->bqd", p, vh,
                        preferred_element_type=jnp.float32)       # (H*B, S, D_K)

        # lane-concat heads back to (B*S, D_MODEL); single W_O matmul
        ctx = jnp.concatenate(
            [oh[h * B:(h + 1) * B].reshape(B * S, D_K) for h in range(NUM_HEADS)],
            axis=-1)                                              # (B*S, 32)
        attn = jnp.dot(ctx, w_o, preferred_element_type=jnp.float32) + b_o

        # residual + layernorm (dropout = identity, eval mode)
        x = _layernorm(x + attn, g1, be1)

        # ---- position-wise feed-forward ----
        h1 = jnp.dot(x, w1, preferred_element_type=jnp.float32) + b1
        h1 = jnp.maximum(h1, 0.0)
        ffn = jnp.dot(h1, w2, preferred_element_type=jnp.float32) + b2

        x = _layernorm(x + ffn, g2, be2)

    o_ref[...] = x.reshape(B, S, D_MODEL).astype(o_ref.dtype)


def pack_params(all_params):
    """Pre-transpose / lane-pack PyTorch-convention weights into 3 VMEM slabs."""
    scale = 1.0 / float(D_K) ** 0.5
    w_attn, w_ff, vec = [], [], []
    for p in all_params:
        # [Wq^T * scale | Wk^T | Wv^T | Wo^T] -> (32, 128), exactly lane-dense
        w_qkv = jnp.concatenate([p["wq"].T * scale, p["wk"].T, p["wv"].T], axis=1)
        w_attn.append(jnp.concatenate([w_qkv, p["wo"].T], axis=1))

        # [W1^T in rows 0:32 | W2^T in cols 64:96] -> (64, 96)
        wf = jnp.zeros((D_FF, D_FF + D_MODEL), jnp.float32)
        wf = wf.at[0:D_MODEL, 0:D_FF].set(p["w1"].T)
        wf = wf.at[:, D_FF:D_FF + D_MODEL].set(p["w2"].T)
        w_ff.append(wf)

        # all small vectors into one (8, 128) slab
        v = jnp.zeros((8, 128), jnp.float32)
        b_qkv = jnp.concatenate([p["bq"] * scale, p["bk"], p["bv"]])
        v = v.at[_ROW_BQKV, 0:3 * D_MODEL].set(b_qkv)
        v = v.at[_ROW_B1, 0:D_FF].set(p["b1"])
        v = v.at[_ROW_BO, 0:D_MODEL].set(p["bo"])
        v = v.at[_ROW_B2, 0:D_MODEL].set(p["b2"])
        v = v.at[_ROW_G1, 0:D_MODEL].set(p["g1"])
        v = v.at[_ROW_BE1, 0:D_MODEL].set(p["be1"])
        v = v.at[_ROW_G2, 0:D_MODEL].set(p["g2"])
        v = v.at[_ROW_BE2, 0:D_MODEL].set(p["be2"])
        vec.append(v)
    return (jnp.stack(w_attn),   # (L, 32, 128)
            jnp.stack(w_ff),     # (L, 64, 96)
            jnp.stack(vec))      # (L, 8, 128)


@jax.jit
def transformer_forward(x, w_attn, w_ff, vec):
    vmem = pl.BlockSpec(memory_space=pltpu.MemorySpace.VMEM)
    return pl.pallas_call(
        transformer_kernel,
        out_shape=jax.ShapeDtypeStruct((B, S, D_MODEL), jnp.float32),
        in_specs=[vmem, vmem, vmem, vmem],   # whole arrays resident in VMEM
        out_specs=vmem,                      # no grid: single invocation
    )(x, w_attn, w_ff, vec)


# ---- pure-JAX reference (mirrors the PyTorch forward, eval mode) ----
def _ref_layer(x, p):
    q = x @ p["wq"].T + p["bq"]
    k = x @ p["wk"].T + p["bk"]
    v = x @ p["wv"].T + p["bv"]
    bsz, s, _ = x.shape

    def split(t):
        return t.reshape(bsz, s, NUM_HEADS, D_K).transpose(0, 2, 1, 3)

    qh, kh, vh = split(q), split(k), split(v)
    scores = jnp.einsum("bhqd,bhkd->bhqk", qh, kh) / jnp.sqrt(jnp.float32(D_K))
    attn = jax.nn.softmax(scores, axis=-1)
    out = jnp.einsum("bhqk,bhkd->bhqd", attn, vh)
    out = out.transpose(0, 2, 1, 3).reshape(bsz, s, D_MODEL)
    out = out @ p["wo"].T + p["bo"]

    def ln(y, g, b):
        mu = jnp.mean(y, axis=-1, keepdims=True)
        var = jnp.mean((y - mu) ** 2, axis=-1, keepdims=True)
        return (y - mu) / jnp.sqrt(var + LN_EPS) * g + b

    x1 = ln(x + out, p["g1"], p["be1"])
    h = jax.nn.relu(x1 @ p["w1"].T + p["b1"])
    ffn = h @ p["w2"].T + p["b2"]
    return ln(x1 + ffn, p["g2"], p["be2"])


def _ref_forward(x, all_params):
    for p in all_params:
        x = _ref_layer(x, p)
    return x


def init_params(key):
    all_params = []
    for _ in range(NUM_LAYERS):
        keys = jax.random.split(key, 13)
        key = keys[-1]

        def lin(k, out_f, in_f):
            return jax.random.normal(k, (out_f, in_f), jnp.float32) * 0.05

        def vec(k, n):
            return jax.random.normal(k, (n,), jnp.float32) * 0.01

        p = {
            "wq": lin(keys[0], D_MODEL, D_MODEL), "bq": vec(keys[1], D_MODEL),
            "wk": lin(keys[2], D_MODEL, D_MODEL), "bk": vec(keys[3], D_MODEL),
            "wv": lin(keys[4], D_MODEL, D_MODEL), "bv": vec(keys[5], D_MODEL),
            "wo": lin(keys[6], D_MODEL, D_MODEL), "bo": vec(keys[7], D_MODEL),
            "w1": lin(keys[8], D_FF, D_MODEL),    "b1": vec(keys[9], D_FF),
            "w2": lin(keys[10], D_MODEL, D_FF),   "b2": vec(keys[11], D_MODEL),
            "g1": jnp.ones((D_MODEL,), jnp.float32),
            "be1": jnp.zeros((D_MODEL,), jnp.float32),
            "g2": jnp.ones((D_MODEL,), jnp.float32),
            "be2": jnp.zeros((D_MODEL,), jnp.float32),
        }
        all_params.append(p)
    return all_params


if __name__ == "__main__":
    key = jax.random.PRNGKey(0)
    kx, kp = jax.random.split(key)
    x = jax.random.normal(kx, (B, S, D_MODEL), jnp.float32)
    params = init_params(kp)
    w_attn, w_ff, vec = pack_params(params)

    out = transformer_forward(x, w_attn, w_ff, vec)
    out = jax.block_until_ready(out)

    ref = _ref_forward(x, params)
    assert out.shape == (B, S, D_MODEL)
    err = float(jnp.max(jnp.abs(out - ref)))
    # tolerance accounts for the approximate EUP reciprocal in the softmax
    assert err < 2e-3, f"mismatch vs JAX reference: {err}"

    print("KERNEL_OK")
</pallas_src>

<mosaic_0001>
module attributes {stable_mosaic.version = 11 : i64} {
  func.func @transformer_kernel(%arg0: memref<2x8x32xf32, #tpu.memory_space<vmem>>, %arg1: memref<2x32x128xf32, #tpu.memory_space<vmem>>, %arg2: memref<2x64x96xf32, #tpu.memory_space<vmem>>, %arg3: memref<2x8x128xf32, #tpu.memory_space<vmem>>, %arg4: memref<2x8x32xf32, #tpu.memory_space<vmem>>) attributes {dimension_semantics = [], scalar_prefetch = 0 : i64, scratch_operands = 0 : i64, tpu.core_type = #tpu.core_type<tc>} {
    %c0 = arith.constant 0 : index
    %c0_0 = arith.constant 0 : index
    %c0_1 = arith.constant 0 : index
    %0 = vector.load %arg0[%c0, %c0_0, %c0_1] : memref<2x8x32xf32, #tpu.memory_space<vmem>>, vector<2x8x32xf32>
    %1 = vector.shape_cast %0 : vector<2x8x32xf32> to vector<16x32xf32>
    %c0_2 = arith.constant 0 : index
    %c0_3 = arith.constant 0 : index
    %c0_4 = arith.constant 0 : index
    %2 = vector.load %arg1[%c0_2, %c0_3, %c0_4] : memref<2x32x128xf32, #tpu.memory_space<vmem>>, vector<1x32x96xf32>
    %3 = vector.shape_cast %2 : vector<1x32x96xf32> to vector<32x96xf32>
    %c0_5 = arith.constant 0 : index
    %c0_6 = arith.constant 0 : index
    %c96 = arith.constant 96 : index
    %4 = vector.load %arg1[%c0_5, %c0_6, %c96] : memref<2x32x128xf32, #tpu.memory_space<vmem>>, vector<1x32x32xf32>
    %5 = vector.shape_cast %4 : vector<1x32x32xf32> to vector<32x32xf32>
    %c0_7 = arith.constant 0 : index
    %c0_8 = arith.constant 0 : index
    %c0_9 = arith.constant 0 : index
    %6 = vector.load %arg2[%c0_7, %c0_8, %c0_9] : memref<2x64x96xf32, #tpu.memory_space<vmem>>, vector<1x32x64xf32>
    %7 = vector.shape_cast %6 : vector<1x32x64xf32> to vector<32x64xf32>
    %c0_10 = arith.constant 0 : index
    %c0_11 = arith.constant 0 : index
    %c64 = arith.constant 64 : index
    %8 = vector.load %arg2[%c0_10, %c0_11, %c64] : memref<2x64x96xf32, #tpu.memory_space<vmem>>, vector<1x64x32xf32>
    %9 = vector.shape_cast %8 : vector<1x64x32xf32> to vector<64x32xf32>
    %c0_12 = arith.constant 0 : index
    %c0_13 = arith.constant 0 : index
    %c0_14 = arith.constant 0 : index
    %10 = vector.load %arg3[%c0_12, %c0_13, %c0_14] : memref<2x8x128xf32, #tpu.memory_space<vmem>>, vector<1x1x96xf32>
    %11 = vector.shape_cast %10 : vector<1x1x96xf32> to vector<1x96xf32>
    %c0_15 = arith.constant 0 : index
    %c1 = arith.constant 1 : index
    %c0_16 = arith.constant 0 : index
    %12 = vector.load %arg3[%c0_15, %c1, %c0_16] : memref<2x8x128xf32, #tpu.memory_space<vmem>>, vector<1x1x64xf32>
    %13 = vector.shape_cast %12 : vector<1x1x64xf32> to vector<1x64xf32>
    %c0_17 = arith.constant 0 : index
    %c2 = arith.constant 2 : index
    %c0_18 = arith.constant 0 : index
    %14 = vector.load %arg3[%c0_17, %c2, %c0_18] : memref<2x8x128xf32, #tpu.memory_space<vmem>>, vector<1x1x32xf32>
    %15 = vector.shape_cast %14 : vector<1x1x32xf32> to vector<1x32xf32>
    %c0_19 = arith.constant 0 : index
    %c3 = arith.constant 3 : index
    %c0_20 = arith.constant 0 : index
    %16 = vector.load %arg3[%c0_19, %c3, %c0_20] : memref<2x8x128xf32, #tpu.memory_space<vmem>>, vector<1x1x32xf32>
    %17 = vector.shape_cast %16 : vector<1x1x32xf32> to vector<1x32xf32>
    %c0_21 = arith.constant 0 : index
    %c4 = arith.constant 4 : index
    %c0_22 = arith.constant 0 : index
    %18 = vector.load %arg3[%c0_21, %c4, %c0_22] : memref<2x8x128xf32, #tpu.memory_space<vmem>>, vector<1x1x32xf32>
    %19 = vector.shape_cast %18 : vector<1x1x32xf32> to vector<1x32xf32>
    %c0_23 = arith.constant 0 : index
    %c5 = arith.constant 5 : index
    %c0_24 = arith.constant 0 : index
    %20 = vector.load %arg3[%c0_23, %c5, %c0_24] : memref<2x8x128xf32, #tpu.memory_space<vmem>>, vector<1x1x32xf32>
    %21 = vector.shape_cast %20 : vector<1x1x32xf32> to vector<1x32xf32>
    %c0_25 = arith.constant 0 : index
    %c6 = arith.constant 6 : index
    %c0_26 = arith.constant 0 : index
    %22 = vector.load %arg3[%c0_25, %c6, %c0_26] : memref<2x8x128xf32, #tpu.memory_space<vmem>>, vector<1x1x32xf32>
    %23 = vector.shape_cast %22 : vector<1x1x32xf32> to vector<1x32xf32>
    %c0_27 = arith.constant 0 : index
    %c7 = arith.constant 7 : index
    %c0_28 = arith.constant 0 : index
    %24 = vector.load %arg3[%c0_27, %c7, %c0_28] : memref<2x8x128xf32, #tpu.memory_space<vmem>>, vector<1x1x32xf32>
    %25 = vector.shape_cast %24 : vector<1x1x32xf32> to vector<1x32xf32>
    %cst = arith.constant dense<0.000000e+00> : vector<16x96xf32>
    %26 = tpu.matmul %1, %3, %cst {dimension_numbers = #tpu.dot_dimension_numbers<[1], [0], [0], [1], [0, 0, 1, 1], [], []>} : vector<16x32xf32>, vector<32x96xf32>, vector<16x96xf32> -> vector<16x96xf32>
    %27 = vector.broadcast %11 : vector<1x96xf32> to vector<16x96xf32>
    %28 = arith.addf %26, %27 : vector<16x96xf32>
    %29 = vector.extract_strided_slice %28 {offsets = [0, 0], sizes = [16, 8], strides = [1, 1]} : vector<16x96xf32> to vector<16x8xf32>
    %30 = vector.shape_cast %29 : vector<16x8xf32> to vector<2x8x8xf32>
    %31 = vector.extract_strided_slice %28 {offsets = [0, 8], sizes = [16, 8], strides = [1, 1]} : vector<16x96xf32> to vector<16x8xf32>
    %32 = vector.shape_cast %31 : vector<16x8xf32> to vector<2x8x8xf32>
    %33 = vector.extract_strided_slice %28 {offsets = [0, 16], sizes = [16, 8], strides = [1, 1]} : vector<16x96xf32> to vector<16x8xf32>
    %34 = vector.shape_cast %33 : vector<16x8xf32> to vector<2x8x8xf32>
    %35 = vector.extract_strided_slice %28 {offsets = [0, 24], sizes = [16, 8], strides = [1, 1]} : vector<16x96xf32> to vector<16x8xf32>
    %36 = vector.shape_cast %35 : vector<16x8xf32> to vector<2x8x8xf32>
    %37 = tpu.concatenate %30, %32, %34, %36 in 0 : vector<2x8x8xf32>, vector<2x8x8xf32>, vector<2x8x8xf32>, vector<2x8x8xf32> -> vector<8x8x8xf32>
    %38 = vector.extract_strided_slice %28 {offsets = [0, 32], sizes = [16, 8], strides = [1, 1]} : vector<16x96xf32> to vector<16x8xf32>
    %39 = vector.shape_cast %38 : vector<16x8xf32> to vector<2x8x8xf32>
    %40 = vector.extract_strided_slice %28 {offsets = [0, 40], sizes = [16, 8], strides = [1, 1]} : vector<16x96xf32> to vector<16x8xf32>
    %41 = vector.shape_cast %40 : vector<16x8xf32> to vector<2x8x8xf32>
    %42 = vector.extract_strided_slice %28 {offsets = [0, 48], sizes = [16, 8], strides = [1, 1]} : vector<16x96xf32> to vector<16x8xf32>
    %43 = vector.shape_cast %42 : vector<16x8xf32> to vector<2x8x8xf32>
    %44 = vector.extract_strided_slice %28 {offsets = [0, 56], sizes = [16, 8], strides = [1, 1]} : vector<16x96xf32> to vector<16x8xf32>
    %45 = vector.shape_cast %44 : vector<16x8xf32> to vector<2x8x8xf32>
    %46 = tpu.concatenate %39, %41, %43, %45 in 0 : vector<2x8x8xf32>, vector<2x8x8xf32>, vector<2x8x8xf32>, vector<2x8x8xf32> -> vector<8x8x8xf32>
    %47 = vector.extract_strided_slice %28 {offsets = [0, 64], sizes = [16, 8], strides = [1, 1]} : vector<16x96xf32> to vector<16x8xf32>
    %48 = vector.shape_cast %47 : vector<16x8xf32> to vector<2x8x8xf32>
    %49 = vector.extract_strided_slice %28 {offsets = [0, 72], sizes = [16, 8], strides = [1, 1]} : vector<16x96xf32> to vector<16x8xf32>
    %50 = vector.shape_cast %49 : vector<16x8xf32> to vector<2x8x8xf32>
    %51 = vector.extract_strided_slice %28 {offsets = [0, 80], sizes = [16, 8], strides = [1, 1]} : vector<16x96xf32> to vector<16x8xf32>
    %52 = vector.shape_cast %51 : vector<16x8xf32> to vector<2x8x8xf32>
    %53 = vector.extract_strided_slice %28 {offsets = [0, 88], sizes = [16, 8], strides = [1, 1]} : vector<16x96xf32> to vector<16x8xf32>
    %54 = vector.shape_cast %53 : vector<16x8xf32> to vector<2x8x8xf32>
    %55 = tpu.concatenate %48, %50, %52, %54 in 0 : vector<2x8x8xf32>, vector<2x8x8xf32>, vector<2x8x8xf32>, vector<2x8x8xf32> -> vector<8x8x8xf32>
    "tpu.trace_start"() <{level = 10 : i32, message = "bqd,bkd->bqk"}> : () -> ()
    %cst_29 = arith.constant dense<0.000000e+00> : vector<8x8x8xf32>
    %56 = tpu.matmul %37, %46, %cst_29 {dimension_numbers = #tpu.dot_dimension_numbers<[2], [2], [1], [1], [0, 0, 0, 1, 1, 1], [0], [0]>} : vector<8x8x8xf32>, vector<8x8x8xf32>, vector<8x8x8xf32> -> vector<8x8x8xf32>
    "tpu.trace_stop"() : () -> ()
    %cst_30 = arith.constant dense<0xFF800000> : vector<8x8xf32>
    %57 = vector.multi_reduction <maximumf>, %56, %cst_30 [2] : vector<8x8x8xf32> to vector<8x8xf32>
    %58 = vector.shape_cast %57 : vector<8x8xf32> to vector<8x8x1xf32>
    %59 = vector.broadcast %58 : vector<8x8x1xf32> to vector<8x8x8xf32>
    %60 = arith.subf %56, %59 : vector<8x8x8xf32>
    %61 = math.exp %60 : vector<8x8x8xf32>
    %cst_31 = arith.constant dense<0.000000e+00> : vector<8x8xf32>
    %62 = vector.multi_reduction <add>, %61, %cst_31 [2] : vector<8x8x8xf32> to vector<8x8xf32>
    %63 = vector.shape_cast %62 : vector<8x8xf32> to vector<8x8x1xf32>
    %64 = tpu.reciprocal %63 {approx = true} : vector<8x8x1xf32> -> vector<8x8x1xf32>
    %65 = vector.broadcast %64 : vector<8x8x1xf32> to vector<8x8x8xf32>
    %66 = arith.mulf %61, %65 : vector<8x8x8xf32>
    "tpu.trace_start"() <{level = 10 : i32, message = "bqk,bkd->bqd"}> : () -> ()
    %cst_32 = arith.constant dense<0.000000e+00> : vector<8x8x8xf32>
    %67 = tpu.matmul %66, %55, %cst_32 {dimension_numbers = #tpu.dot_dimension_numbers<[2], [1], [1], [2], [0, 0, 0, 1, 1, 2], [0], [0]>} : vector<8x8x8xf32>, vector<8x8x8xf32>, vector<8x8x8xf32> -> vector<8x8x8xf32>
    "tpu.trace_stop"() : () -> ()
    %68 = vector.extract_strided_slice %67 {offsets = [0, 0, 0], sizes = [2, 8, 8], strides = [1, 1, 1]} : vector<8x8x8xf32> to vector<2x8x8xf32>
    %69 = vector.shape_cast %68 : vector<2x8x8xf32> to vector<16x8xf32>
    %70 = vector.extract_strided_slice %67 {offsets = [2, 0, 0], sizes = [2, 8, 8], strides = [1, 1, 1]} : vector<8x8x8xf32> to vector<2x8x8xf32>
    %71 = vector.shape_cast %70 : vector<2x8x8xf32> to vector<16x8xf32>
    %72 = vector.extract_strided_slice %67 {offsets = [4, 0, 0], sizes = [2, 8, 8], strides = [1, 1, 1]} : vector<8x8x8xf32> to vector<2x8x8xf32>
    %73 = vector.shape_cast %72 : vector<2x8x8xf32> to vector<16x8xf32>
    %74 = vector.extract_strided_slice %67 {offsets = [6, 0, 0], sizes = [2, 8, 8], strides = [1, 1, 1]} : vector<8x8x8xf32> to vector<2x8x8xf32>
    %75 = vector.shape_cast %74 : vector<2x8x8xf32> to vector<16x8xf32>
    %76 = tpu.concatenate %69, %71, %73, %75 in 1 : vector<16x8xf32>, vector<16x8xf32>, vector<16x8xf32>, vector<16x8xf32> -> vector<16x32xf32>
    %cst_33 = arith.constant dense<0.000000e+00> : vector<16x32xf32>
    %77 = tpu.matmul %76, %5, %cst_33 {dimension_numbers = #tpu.dot_dimension_numbers<[1], [0], [0], [1], [0, 0, 1, 1], [], []>} : vector<16x32xf32>, vector<32x32xf32>, vector<16x32xf32> -> vector<16x32xf32>
    %78 = vector.broadcast %15 : vector<1x32xf32> to vector<16x32xf32>
    %79 = arith.addf %77, %78 : vector<16x32xf32>
    %80 = arith.addf %1, %79 : vector<16x32xf32>
    %cst_34 = arith.constant dense<0.000000e+00> : vector<16xf32>
    %81 = vector.multi_reduction <add>, %80, %cst_34 [1] : vector<16x32xf32> to vector<16xf32>
    %82 = vector.shape_cast %81 : vector<16xf32> to vector<16x1xf32>
    %cst_35 = arith.constant 3.200000e+01 : f32
    %83 = vector.broadcast %cst_35 : f32 to vector<16x1xf32>
    %84 = arith.divf %82, %83 : vector<16x1xf32>
    %85 = arith.mulf %80, %80 : vector<16x32xf32>
    %cst_36 = arith.constant dense<0.000000e+00> : vector<16xf32>
    %86 = vector.multi_reduction <add>, %85, %cst_36 [1] : vector<16x32xf32> to vector<16xf32>
    %87 = vector.shape_cast %86 : vector<16xf32> to vector<16x1xf32>
    %cst_37 = arith.constant 3.200000e+01 : f32
    %88 = vector.broadcast %cst_37 : f32 to vector<16x1xf32>
    %89 = arith.divf %87, %88 : vector<16x1xf32>
    %90 = arith.mulf %84, %84 : vector<16x1xf32>
    %91 = arith.subf %89, %90 : vector<16x1xf32>
    %92 = vector.broadcast %84 : vector<16x1xf32> to vector<16x32xf32>
    %93 = arith.subf %80, %92 : vector<16x32xf32>
    %cst_38 = arith.constant 9.99999974E-6 : f32
    %94 = vector.broadcast %cst_38 : f32 to vector<16x1xf32>
    %95 = arith.addf %91, %94 : vector<16x1xf32>
    %96 = math.rsqrt %95 : vector<16x1xf32>
    %97 = vector.broadcast %96 : vector<16x1xf32> to vector<16x32xf32>
    %98 = arith.mulf %93, %97 : vector<16x32xf32>
    %99 = vector.broadcast %19 : vector<1x32xf32> to vector<16x32xf32>
    %100 = arith.mulf %98, %99 : vector<16x32xf32>
    %101 = vector.broadcast %21 : vector<1x32xf32> to vector<16x32xf32>
    %102 = arith.addf %100, %101 : vector<16x32xf32>
    %cst_39 = arith.constant dense<0.000000e+00> : vector<16x64xf32>
    %103 = tpu.matmul %102, %7, %cst_39 {dimension_numbers = #tpu.dot_dimension_numbers<[1], [0], [0], [1], [0, 0, 1, 1], [], []>} : vector<16x32xf32>, vector<32x64xf32>, vector<16x64xf32> -> vector<16x64xf32>
    %104 = vector.broadcast %13 : vector<1x64xf32> to vector<16x64xf32>
    %105 = arith.addf %103, %104 : vector<16x64xf32>
    %cst_40 = arith.constant 0.000000e+00 : f32
    %106 = vector.broadcast %cst_40 : f32 to vector<16x64xf32>
    %107 = arith.maximumf %105, %106 : vector<16x64xf32>
    %cst_41 = arith.constant dense<0.000000e+00> : vector<16x32xf32>
    %108 = tpu.matmul %107, %9, %cst_41 {dimension_numbers = #tpu.dot_dimension_numbers<[1], [0], [0], [1], [0, 0, 1, 1], [], []>} : vector<16x64xf32>, vector<64x32xf32>, vector<16x32xf32> -> vector<16x32xf32>
    %109 = vector.broadcast %17 : vector<1x32xf32> to vector<16x32xf32>
    %110 = arith.addf %108, %109 : vector<16x32xf32>
    %111 = arith.addf %102, %110 : vector<16x32xf32>
    %cst_42 = arith.constant dense<0.000000e+00> : vector<16xf32>
    %112 = vector.multi_reduction <add>, %111, %cst_42 [1] : vector<16x32xf32> to vector<16xf32>
    %113 = vector.shape_cast %112 : vector<16xf32> to vector<16x1xf32>
    %cst_43 = arith.constant 3.200000e+01 : f32
    %114 = vector.broadcast %cst_43 : f32 to vector<16x1xf32>
    %115 = arith.divf %113, %114 : vector<16x1xf32>
    %116 = arith.mulf %111, %111 : vector<16x32xf32>
    %cst_44 = arith.constant dense<0.000000e+00> : vector<16xf32>
    %117 = vector.multi_reduction <add>, %116, %cst_44 [1] : vector<16x32xf32> to vector<16xf32>
    %118 = vector.shape_cast %117 : vector<16xf32> to vector<16x1xf32>
    %cst_45 = arith.constant 3.200000e+01 : f32
    %119 = vector.broadcast %cst_45 : f32 to vector<16x1xf32>
    %120 = arith.divf %118, %119 : vector<16x1xf32>
    %121 = arith.mulf %115, %115 : vector<16x1xf32>
    %122 = arith.subf %120, %121 : vector<16x1xf32>
    %123 = vector.broadcast %115 : vector<16x1xf32> to vector<16x32xf32>
    %124 = arith.subf %111, %123 : vector<16x32xf32>
    %cst_46 = arith.constant 9.99999974E-6 : f32
    %125 = vector.broadcast %cst_46 : f32 to vector<16x1xf32>
    %126 = arith.addf %122, %125 : vector<16x1xf32>
    %127 = math.rsqrt %126 : vector<16x1xf32>
    %128 = vector.broadcast %127 : vector<16x1xf32> to vector<16x32xf32>
    %129 = arith.mulf %124, %128 : vector<16x32xf32>
    %130 = vector.broadcast %23 : vector<1x32xf32> to vector<16x32xf32>
    %131 = arith.mulf %129, %130 : vector<16x32xf32>
    %132 = vector.broadcast %25 : vector<1x32xf32> to vector<16x32xf32>
    %133 = arith.addf %131, %132 : vector<16x32xf32>
    %c1_47 = arith.constant 1 : index
    %c0_48 = arith.constant 0 : index
    %c0_49 = arith.constant 0 : index
    %134 = vector.load %arg1[%c1_47, %c0_48, %c0_49] : memref<2x32x128xf32, #tpu.memory_space<vmem>>, vector<1x32x96xf32>
    %135 = vector.shape_cast %134 : vector<1x32x96xf32> to vector<32x96xf32>
    %c1_50 = arith.constant 1 : index
    %c0_51 = arith.constant 0 : index
    %c96_52 = arith.constant 96 : index
    %136 = vector.load %arg1[%c1_50, %c0_51, %c96_52] : memref<2x32x128xf32, #tpu.memory_space<vmem>>, vector<1x32x32xf32>
    %137 = vector.shape_cast %136 : vector<1x32x32xf32> to vector<32x32xf32>
    %c1_53 = arith.constant 1 : index
    %c0_54 = arith.constant 0 : index
    %c0_55 = arith.constant 0 : index
    %138 = vector.load %arg2[%c1_53, %c0_54, %c0_55] : memref<2x64x96xf32, #tpu.memory_space<vmem>>, vector<1x32x64xf32>
    %139 = vector.shape_cast %138 : vector<1x32x64xf32> to vector<32x64xf32>
    %c1_56 = arith.constant 1 : index
    %c0_57 = arith.constant 0 : index
    %c64_58 = arith.constant 64 : index
    %140 = vector.load %arg2[%c1_56, %c0_57, %c64_58] : memref<2x64x96xf32, #tpu.memory_space<vmem>>, vector<1x64x32xf32>
    %141 = vector.shape_cast %140 : vector<1x64x32xf32> to vector<64x32xf32>
    %c1_59 = arith.constant 1 : index
    %c0_60 = arith.constant 0 : index
    %c0_61 = arith.constant 0 : index
    %142 = vector.load %arg3[%c1_59, %c0_60, %c0_61] : memref<2x8x128xf32, #tpu.memory_space<vmem>>, vector<1x1x96xf32>
    %143 = vector.shape_cast %142 : vector<1x1x96xf32> to vector<1x96xf32>
    %c1_62 = arith.constant 1 : index
    %c1_63 = arith.constant 1 : index
    %c0_64 = arith.constant 0 : index
    %144 = vector.load %arg3[%c1_62, %c1_63, %c0_64] : memref<2x8x128xf32, #tpu.memory_space<vmem>>, vector<1x1x64xf32>
    %145 = vector.shape_cast %144 : vector<1x1x64xf32> to vector<1x64xf32>
    %c1_65 = arith.constant 1 : index
    %c2_66 = arith.constant 2 : index
    %c0_67 = arith.constant 0 : index
    %146 = vector.load %arg3[%c1_65, %c2_66, %c0_67] : memref<2x8x128xf32, #tpu.memory_space<vmem>>, vector<1x1x32xf32>
    %147 = vector.shape_cast %146 : vector<1x1x32xf32> to vector<1x32xf32>
    %c1_68 = arith.constant 1 : index
    %c3_69 = arith.constant 3 : index
    %c0_70 = arith.constant 0 : index
    %148 = vector.load %arg3[%c1_68, %c3_69, %c0_70] : memref<2x8x128xf32, #tpu.memory_space<vmem>>, vector<1x1x32xf32>
    %149 = vector.shape_cast %148 : vector<1x1x32xf32> to vector<1x32xf32>
    %c1_71 = arith.constant 1 : index
    %c4_72 = arith.constant 4 : index
    %c0_73 = arith.constant 0 : index
    %150 = vector.load %arg3[%c1_71, %c4_72, %c0_73] : memref<2x8x128xf32, #tpu.memory_space<vmem>>, vector<1x1x32xf32>
    %151 = vector.shape_cast %150 : vector<1x1x32xf32> to vector<1x32xf32>
    %c1_74 = arith.constant 1 : index
    %c5_75 = arith.constant 5 : index
    %c0_76 = arith.constant 0 : index
    %152 = vector.load %arg3[%c1_74, %c5_75, %c0_76] : memref<2x8x128xf32, #tpu.memory_space<vmem>>, vector<1x1x32xf32>
    %153 = vector.shape_cast %152 : vector<1x1x32xf32> to vector<1x32xf32>
    %c1_77 = arith.constant 1 : index
    %c6_78 = arith.constant 6 : index
    %c0_79 = arith.constant 0 : index
    %154 = vector.load %arg3[%c1_77, %c6_78, %c0_79] : memref<2x8x128xf32, #tpu.memory_space<vmem>>, vector<1x1x32xf32>
    %155 = vector.shape_cast %154 : vector<1x1x32xf32> to vector<1x32xf32>
    %c1_80 = arith.constant 1 : index
    %c7_81 = arith.constant 7 : index
    %c0_82 = arith.constant 0 : index
    %156 = vector.load %arg3[%c1_80, %c7_81, %c0_82] : memref<2x8x128xf32, #tpu.memory_space<vmem>>, vector<1x1x32xf32>
    %157 = vector.shape_cast %156 : vector<1x1x32xf32> to vector<1x32xf32>
    %cst_83 = arith.constant dense<0.000000e+00> : vector<16x96xf32>
    %158 = tpu.matmul %133, %135, %cst_83 {dimension_numbers = #tpu.dot_dimension_numbers<[1], [0], [0], [1], [0, 0, 1, 1], [], []>} : vector<16x32xf32>, vector<32x96xf32>, vector<16x96xf32> -> vector<16x96xf32>
    %159 = vector.broadcast %143 : vector<1x96xf32> to vector<16x96xf32>
    %160 = arith.addf %158, %159 : vector<16x96xf32>
    %161 = vector.extract_strided_slice %160 {offsets = [0, 0], sizes = [16, 8], strides = [1, 1]} : vector<16x96xf32> to vector<16x8xf32>
    %162 = vector.shape_cast %161 : vector<16x8xf32> to vector<2x8x8xf32>
    %163 = vector.extract_strided_slice %160 {offsets = [0, 8], sizes = [16, 8], strides = [1, 1]} : vector<16x96xf32> to vector<16x8xf32>
    %164 = vector.shape_cast %163 : vector<16x8xf32> to vector<2x8x8xf32>
    %165 = vector.extract_strided_slice %160 {offsets = [0, 16], sizes = [16, 8], strides = [1, 1]} : vector<16x96xf32> to vector<16x8xf32>
    %166 = vector.shape_cast %165 : vector<16x8xf32> to vector<2x8x8xf32>
    %167 = vector.extract_strided_slice %160 {offsets = [0, 24], sizes = [16, 8], strides = [1, 1]} : vector<16x96xf32> to vector<16x8xf32>
    %168 = vector.shape_cast %167 : vector<16x8xf32> to vector<2x8x8xf32>
    %169 = tpu.concatenate %162, %164, %166, %168 in 0 : vector<2x8x8xf32>, vector<2x8x8xf32>, vector<2x8x8xf32>, vector<2x8x8xf32> -> vector<8x8x8xf32>
    %170 = vector.extract_strided_slice %160 {offsets = [0, 32], sizes = [16, 8], strides = [1, 1]} : vector<16x96xf32> to vector<16x8xf32>
    %171 = vector.shape_cast %170 : vector<16x8xf32> to vector<2x8x8xf32>
    %172 = vector.extract_strided_slice %160 {offsets = [0, 40], sizes = [16, 8], strides = [1, 1]} : vector<16x96xf32> to vector<16x8xf32>
    %173 = vector.shape_cast %172 : vector<16x8xf32> to vector<2x8x8xf32>
    %174 = vector.extract_strided_slice %160 {offsets = [0, 48], sizes = [16, 8], strides = [1, 1]} : vector<16x96xf32> to vector<16x8xf32>
    %175 = vector.shape_cast %174 : vector<16x8xf32> to vector<2x8x8xf32>
    %176 = vector.extract_strided_slice %160 {offsets = [0, 56], sizes = [16, 8], strides = [1, 1]} : vector<16x96xf32> to vector<16x8xf32>
    %177 = vector.shape_cast %176 : vector<16x8xf32> to vector<2x8x8xf32>
    %178 = tpu.concatenate %171, %173, %175, %177 in 0 : vector<2x8x8xf32>, vector<2x8x8xf32>, vector<2x8x8xf32>, vector<2x8x8xf32> -> vector<8x8x8xf32>
    %179 = vector.extract_strided_slice %160 {offsets = [0, 64], sizes = [16, 8], strides = [1, 1]} : vector<16x96xf32> to vector<16x8xf32>
    %180 = vector.shape_cast %179 : vector<16x8xf32> to vector<2x8x8xf32>
    %181 = vector.extract_strided_slice %160 {offsets = [0, 72], sizes = [16, 8], strides = [1, 1]} : vector<16x96xf32> to vector<16x8xf32>
    %182 = vector.shape_cast %181 : vector<16x8xf32> to vector<2x8x8xf32>
    %183 = vector.extract_strided_slice %160 {offsets = [0, 80], sizes = [16, 8], strides = [1, 1]} : vector<16x96xf32> to vector<16x8xf32>
    %184 = vector.shape_cast %183 : vector<16x8xf32> to vector<2x8x8xf32>
    %185 = vector.extract_strided_slice %160 {offsets = [0, 88], sizes = [16, 8], strides = [1, 1]} : vector<16x96xf32> to vector<16x8xf32>
    %186 = vector.shape_cast %185 : vector<16x8xf32> to vector<2x8x8xf32>
    %187 = tpu.concatenate %180, %182, %184, %186 in 0 : vector<2x8x8xf32>, vector<2x8x8xf32>, vector<2x8x8xf32>, vector<2x8x8xf32> -> vector<8x8x8xf32>
    "tpu.trace_start"() <{level = 10 : i32, message = "bqd,bkd->bqk"}> : () -> ()
    %cst_84 = arith.constant dense<0.000000e+00> : vector<8x8x8xf32>
    %188 = tpu.matmul %169, %178, %cst_84 {dimension_numbers = #tpu.dot_dimension_numbers<[2], [2], [1], [1], [0, 0, 0, 1, 1, 1], [0], [0]>} : vector<8x8x8xf32>, vector<8x8x8xf32>, vector<8x8x8xf32> -> vector<8x8x8xf32>
    "tpu.trace_stop"() : () -> ()
    %cst_85 = arith.constant dense<0xFF800000> : vector<8x8xf32>
    %189 = vector.multi_reduction <maximumf>, %188, %cst_85 [2] : vector<8x8x8xf32> to vector<8x8xf32>
    %190 = vector.shape_cast %189 : vector<8x8xf32> to vector<8x8x1xf32>
    %191 = vector.broadcast %190 : vector<8x8x1xf32> to vector<8x8x8xf32>
    %192 = arith.subf %188, %191 : vector<8x8x8xf32>
    %193 = math.exp %192 : vector<8x8x8xf32>
    %cst_86 = arith.constant dense<0.000000e+00> : vector<8x8xf32>
    %194 = vector.multi_reduction <add>, %193, %cst_86 [2] : vector<8x8x8xf32> to vector<8x8xf32>
    %195 = vector.shape_cast %194 : vector<8x8xf32> to vector<8x8x1xf32>
    %196 = tpu.reciprocal %195 {approx = true} : vector<8x8x1xf32> -> vector<8x8x1xf32>
    %197 = vector.broadcast %196 : vector<8x8x1xf32> to vector<8x8x8xf32>
    %198 = arith.mulf %193, %197 : vector<8x8x8xf32>
    "tpu.trace_start"() <{level = 10 : i32, message = "bqk,bkd->bqd"}> : () -> ()
    %cst_87 = arith.constant dense<0.000000e+00> : vector<8x8x8xf32>
    %199 = tpu.matmul %198, %187, %cst_87 {dimension_numbers = #tpu.dot_dimension_numbers<[2], [1], [1], [2], [0, 0, 0, 1, 1, 2], [0], [0]>} : vector<8x8x8xf32>, vector<8x8x8xf32>, vector<8x8x8xf32> -> vector<8x8x8xf32>
    "tpu.trace_stop"() : () -> ()
    %200 = vector.extract_strided_slice %199 {offsets = [0, 0, 0], sizes = [2, 8, 8], strides = [1, 1, 1]} : vector<8x8x8xf32> to vector<2x8x8xf32>
    %201 = vector.shape_cast %200 : vector<2x8x8xf32> to vector<16x8xf32>
    %202 = vector.extract_strided_slice %199 {offsets = [2, 0, 0], sizes = [2, 8, 8], strides = [1, 1, 1]} : vector<8x8x8xf32> to vector<2x8x8xf32>
    %203 = vector.shape_cast %202 : vector<2x8x8xf32> to vector<16x8xf32>
    %204 = vector.extract_strided_slice %199 {offsets = [4, 0, 0], sizes = [2, 8, 8], strides = [1, 1, 1]} : vector<8x8x8xf32> to vector<2x8x8xf32>
    %205 = vector.shape_cast %204 : vector<2x8x8xf32> to vector<16x8xf32>
    %206 = vector.extract_strided_slice %199 {offsets = [6, 0, 0], sizes = [2, 8, 8], strides = [1, 1, 1]} : vector<8x8x8xf32> to vector<2x8x8xf32>
    %207 = vector.shape_cast %206 : vector<2x8x8xf32> to vector<16x8xf32>
    %208 = tpu.concatenate %201, %203, %205, %207 in 1 : vector<16x8xf32>, vector<16x8xf32>, vector<16x8xf32>, vector<16x8xf32> -> vector<16x32xf32>
    %cst_88 = arith.constant dense<0.000000e+00> : vector<16x32xf32>
    %209 = tpu.matmul %208, %137, %cst_88 {dimension_numbers = #tpu.dot_dimension_numbers<[1], [0], [0], [1], [0, 0, 1, 1], [], []>} : vector<16x32xf32>, vector<32x32xf32>, vector<16x32xf32> -> vector<16x32xf32>
    %210 = vector.broadcast %147 : vector<1x32xf32> to vector<16x32xf32>
    %211 = arith.addf %209, %210 : vector<16x32xf32>
    %212 = arith.addf %133, %211 : vector<16x32xf32>
    %cst_89 = arith.constant dense<0.000000e+00> : vector<16xf32>
    %213 = vector.multi_reduction <add>, %212, %cst_89 [1] : vector<16x32xf32> to vector<16xf32>
    %214 = vector.shape_cast %213 : vector<16xf32> to vector<16x1xf32>
    %cst_90 = arith.constant 3.200000e+01 : f32
    %215 = vector.broadcast %cst_90 : f32 to vector<16x1xf32>
    %216 = arith.divf %214, %215 : vector<16x1xf32>
    %217 = arith.mulf %212, %212 : vector<16x32xf32>
    %cst_91 = arith.constant dense<0.000000e+00> : vector<16xf32>
    %218 = vector.multi_reduction <add>, %217, %cst_91 [1] : vector<16x32xf32> to vector<16xf32>
    %219 = vector.shape_cast %218 : vector<16xf32> to vector<16x1xf32>
    %cst_92 = arith.constant 3.200000e+01 : f32
    %220 = vector.broadcast %cst_92 : f32 to vector<16x1xf32>
    %221 = arith.divf %219, %220 : vector<16x1xf32>
    %222 = arith.mulf %216, %216 : vector<16x1xf32>
    %223 = arith.subf %221, %222 : vector<16x1xf32>
    %224 = vector.broadcast %216 : vector<16x1xf32> to vector<16x32xf32>
    %225 = arith.subf %212, %224 : vector<16x32xf32>
    %cst_93 = arith.constant 9.99999974E-6 : f32
    %226 = vector.broadcast %cst_93 : f32 to vector<16x1xf32>
    %227 = arith.addf %223, %226 : vector<16x1xf32>
    %228 = math.rsqrt %227 : vector<16x1xf32>
    %229 = vector.broadcast %228 : vector<16x1xf32> to vector<16x32xf32>
    %230 = arith.mulf %225, %229 : vector<16x32xf32>
    %231 = vector.broadcast %151 : vector<1x32xf32> to vector<16x32xf32>
    %232 = arith.mulf %230, %231 : vector<16x32xf32>
    %233 = vector.broadcast %153 : vector<1x32xf32> to vector<16x32xf32>
    %234 = arith.addf %232, %233 : vector<16x32xf32>
    %cst_94 = arith.constant dense<0.000000e+00> : vector<16x64xf32>
    %235 = tpu.matmul %234, %139, %cst_94 {dimension_numbers = #tpu.dot_dimension_numbers<[1], [0], [0], [1], [0, 0, 1, 1], [], []>} : vector<16x32xf32>, vector<32x64xf32>, vector<16x64xf32> -> vector<16x64xf32>
    %236 = vector.broadcast %145 : vector<1x64xf32> to vector<16x64xf32>
    %237 = arith.addf %235, %236 : vector<16x64xf32>
    %cst_95 = arith.constant 0.000000e+00 : f32
    %238 = vector.broadcast %cst_95 : f32 to vector<16x64xf32>
    %239 = arith.maximumf %237, %238 : vector<16x64xf32>
    %cst_96 = arith.constant dense<0.000000e+00> : vector<16x32xf32>
    %240 = tpu.matmul %239, %141, %cst_96 {dimension_numbers = #tpu.dot_dimension_numbers<[1], [0], [0], [1], [0, 0, 1, 1], [], []>} : vector<16x64xf32>, vector<64x32xf32>, vector<16x32xf32> -> vector<16x32xf32>
    %241 = vector.broadcast %149 : vector<1x32xf32> to vector<16x32xf32>
    %242 = arith.addf %240, %241 : vector<16x32xf32>
    %243 = arith.addf %234, %242 : vector<16x32xf32>
    %cst_97 = arith.constant dense<0.000000e+00> : vector<16xf32>
    %244 = vector.multi_reduction <add>, %243, %cst_97 [1] : vector<16x32xf32> to vector<16xf32>
    %245 = vector.shape_cast %244 : vector<16xf32> to vector<16x1xf32>
    %cst_98 = arith.constant 3.200000e+01 : f32
    %246 = vector.broadcast %cst_98 : f32 to vector<16x1xf32>
    %247 = arith.divf %245, %246 : vector<16x1xf32>
    %248 = arith.mulf %243, %243 : vector<16x32xf32>
    %cst_99 = arith.constant dense<0.000000e+00> : vector<16xf32>
    %249 = vector.multi_reduction <add>, %248, %cst_99 [1] : vector<16x32xf32> to vector<16xf32>
    %250 = vector.shape_cast %249 : vector<16xf32> to vector<16x1xf32>
    %cst_100 = arith.constant 3.200000e+01 : f32
    %251 = vector.broadcast %cst_100 : f32 to vector<16x1xf32>
    %252 = arith.divf %250, %251 : vector<16x1xf32>
    %253 = arith.mulf %247, %247 : vector<16x1xf32>
    %254 = arith.subf %252, %253 : vector<16x1xf32>
    %255 = vector.broadcast %247 : vector<16x1xf32> to vector<16x32xf32>
    %256 = arith.subf %243, %255 : vector<16x32xf32>
    %cst_101 = arith.constant 9.99999974E-6 : f32
    %257 = vector.broadcast %cst_101 : f32 to vector<16x1xf32>
    %258 = arith.addf %254, %257 : vector<16x1xf32>
    %259 = math.rsqrt %258 : vector<16x1xf32>
    %260 = vector.broadcast %259 : vector<16x1xf32> to vector<16x32xf32>
    %261 = arith.mulf %256, %260 : vector<16x32xf32>
    %262 = vector.broadcast %155 : vector<1x32xf32> to vector<16x32xf32>
    %263 = arith.mulf %261, %262 : vector<16x32xf32>
    %264 = vector.broadcast %157 : vector<1x32xf32> to vector<16x32xf32>
    %265 = arith.addf %263, %264 : vector<16x32xf32>
    %266 = vector.shape_cast %265 : vector<16x32xf32> to vector<2x8x32xf32>
    %c0_102 = arith.constant 0 : index
    %c0_103 = arith.constant 0 : index
    %c0_104 = arith.constant 0 : index
    %267 = vector.load %arg4[%c0_102, %c0_103, %c0_104] : memref<2x8x32xf32, #tpu.memory_space<vmem>>, vector<2x8x32xf32>
    tpu.vector_store %arg4[%c0_102, %c0_103, %c0_104], %266 {strides = array<i32>} : memref<2x8x32xf32, #tpu.memory_space<vmem>>, vector<2x8x32xf32>,
    return
  }
}

</mosaic_0001>

<llo_original>
// kernel: transformer_forward.1
$region0: #{transformer_forward.1}
  #allocation0 [shape = 'u32[]', space=smem, size = 0x4, offset = 0x4, fixed_abs, tag = 'smem constant byte address 0x4 - core index']
  #allocation1 [shape = 'u32[144,128]{1,0:T(1,128)}', space=vmem, size = 0x12000, scoped, tag = 'internal scratch']
  %s0 = inlined_call_operand.hbm [shape: f32[2,8,32], index: 0, kind: input, shape index: {}]
  %s1 = inlined_call_operand.hbm [shape: f32[2,32,128], index: 1, kind: input, shape index: {}]
  %s2 = inlined_call_operand.hbm [shape: f32[2,64,96], index: 2, kind: input, shape index: {}]
  %s3 = inlined_call_operand.hbm [shape: f32[2,8,128], index: 3, kind: input, shape index: {}]
  %s4 = inlined_call_operand.hbm [shape: f32[2,8,32], index: 4, kind: output, shape index: {}]
  %s5 = sld [smem:[#allocation0]]
  $region42: #{transformer_forward.1} parent=0
    _
  %s7 = ssub.s32 1, %s5
  %s8 = scalar_select 0, %s7, %s5
  $region1: #{transformer_forward.1} parent=0
    #allocation2 [shape = 'u8[8192]{0}', space=vmem, size = 0x2000, scoped, tag = 'input window, operand 0, single buffered']
    #allocation3 [shape = 's32[1]{0}', space=sflag, size = 0x4, scoped, tag = 'scoped memory for transformer_forward.1']
    #allocation4 [shape = 's32[1]{0}', space=sflag, size = 0x4, scoped, tag = 'scoped memory for transformer_forward.1']
    #allocation5 [shape = 'u8[32768]{0}', space=vmem, size = 0x8000, scoped, tag = 'input window, operand 1, single buffered']
    #allocation6 [shape = 's32[1]{0}', space=sflag, size = 0x4, scoped, tag = 'scoped memory for transformer_forward.1']
    #allocation7 [shape = 'u8[65536]{0}', space=vmem, size = 0x10000, scoped, tag = 'input window, operand 2, single buffered']
    #allocation8 [shape = 'u8[8192]{0}', space=vmem, size = 0x2000, scoped, tag = 'input window, operand 3, single buffered']
    #allocation9 [shape = 's32[1]{0}', space=sflag, size = 0x4, scoped, tag = 'scoped memory for transformer_forward.1']
    #allocation10 [shape = 'u8[8192]{0}', space=vmem, size = 0x2000, scoped, tag = 'output window, operand 0, single buffered']
    %9 = vsyncpa [#allocation3], 0
    %10 = vsyncpa [#allocation6], 0
    %11 = vsyncpa [#allocation9], 0
    %12 = vsyncpa [#allocation4], 0
    // Predicated region
    $region2: #{transformer_forward.1} parent=1 // pred_check
      _
    $region3: #{transformer_forward.1} parent=1 // pred_check_branch
      %14 = sbr.rel (0) target = $region5
    $region4: #{transformer_forward.1} parent=1 // pred_region
      %s16 = ssub.s32 256, 256
      %17 = vsyncadd [#allocation3], %s16
      %s18 = sshll.u32 [#allocation2], 4
      %s19 = int_to_ptr.vmem [resolvable:$true] %s18
      %24 = dma.hbm_to_vmem [thread:$0]  %s0, 256, %s19, [#allocation3], 128, 128, 8
    $region5: #{transformer_forward.1} parent=1 // pred_fallthru
      _
    // Predicated region
    $region6: #{transformer_forward.1} parent=1 // pred_check
      _
    $region7: #{transformer_forward.1} parent=1 // pred_check_branch
      %26 = sbr.rel (0) target = $region9
    $region8: #{transformer_forward.1} parent=1 // pred_region
      %s28 = ssub.s32 1024, 1024
      %29 = vsyncadd [#allocation6], %s28
      %s30 = sshll.u32 [#allocation5], 4
      %s31 = int_to_ptr.vmem [resolvable:$true] %s30
      %36 = dma.hbm_to_vmem [thread:$0]  %s1, 1024, %s31, [#allocation6], 128, 128, 8
    $region9: #{transformer_forward.1} parent=1 // pred_fallthru
      _
    // Predicated region
    $region10: #{transformer_forward.1} parent=1 // pred_check
      _
    $region11: #{transformer_forward.1} parent=1 // pred_check_branch
      %38 = sbr.rel (0) target = $region13
    $region12: #{transformer_forward.1} parent=1 // pred_region
      %s40 = ssub.s32 2048, 2048
      %41 = vsyncadd [#allocation6], %s40
      %s42 = sshll.u32 [#allocation7], 4
      %s43 = int_to_ptr.vmem [resolvable:$true] %s42
      %48 = dma.hbm_to_vmem [thread:$0]  %s2, 2048, %s43, [#allocation6], 128, 128, 8
    $region13: #{transformer_forward.1} parent=1 // pred_fallthru
      _
    // Predicated region
    $region14: #{transformer_forward.1} parent=1 // pred_check
      _
    $region15: #{transformer_forward.1} parent=1 // pred_check_branch
      %50 = sbr.rel (0) target = $region17
    $region16: #{transformer_forward.1} parent=1 // pred_region
      %s52 = ssub.s32 256, 256
      %53 = vsyncadd [#allocation9], %s52
      %s54 = sshll.u32 [#allocation8], 4
      %s55 = int_to_ptr.vmem [resolvable:$true] %s54
      %60 = dma.hbm_to_vmem [thread:$0]  %s3, 256, %s55, [#allocation9], 128, 128, 8
    $region17: #{transformer_forward.1} parent=1 // pred_fallthru
      _
    // Predicated region
    $region18: #{transformer_forward.1} parent=1 // pred_check
      _
    $region19: #{transformer_forward.1} parent=1 // pred_check_branch
      %62 = sbr.rel (0) target = $region21
    $region20: #{transformer_forward.1} parent=1 // pred_region
      %63 = dma.done [#allocation3], 256
    $region21: #{transformer_forward.1} parent=1 // pred_fallthru
      _
    // Predicated region
    $region22: #{transformer_forward.1} parent=1 // pred_check
      _
    $region23: #{transformer_forward.1} parent=1 // pred_check_branch
      %65 = sbr.rel (0) target = $region25
    $region24: #{transformer_forward.1} parent=1 // pred_region
      %66 = dma.done [#allocation6], 1024
    $region25: #{transformer_forward.1} parent=1 // pred_fallthru
      _
    // Predicated region
    $region26: #{transformer_forward.1} parent=1 // pred_check
      _
    $region27: #{transformer_forward.1} parent=1 // pred_check_branch
      %68 = sbr.rel (0) target = $region29
    $region28: #{transformer_forward.1} parent=1 // pred_region
      %69 = dma.done [#allocation6], 2048
    $region29: #{transformer_forward.1} parent=1 // pred_fallthru
      _
    // Predicated region
    $region30: #{transformer_forward.1} parent=1 // pred_check
      _
    $region31: #{transformer_forward.1} parent=1 // pred_check_branch
      %71 = sbr.rel (0) target = $region33
    $region32: #{transformer_forward.1} parent=1 // pred_region
      %72 = dma.done [#allocation9], 256
    $region33: #{transformer_forward.1} parent=1 // pred_fallthru
      _
    %v73 = vld [vmem:[#allocation2] sm:$0xff]
    %v74 = vld [vmem:[#allocation2 + $0x8] sm:$0xff]
    %v75 = vld [vmem:[#allocation5] sm:$0xff]
    %v76 = vld [vmem:[#allocation5 + $0x8] sm:$0xff]
    %v77 = vld [vmem:[#allocation5 + $0x10] sm:$0xff]
    %v78 = vld [vmem:[#allocation5 + $0x18] sm:$0xff]
    %v79 = vld [vmem:[#allocation7] sm:$0xff]
    %v80 = vld [vmem:[#allocation7 + $0x8] sm:$0xff]
    %v81 = vld [vmem:[#allocation7 + $0x10] sm:$0xff]
    %v82 = vld [vmem:[#allocation7 + $0x18] sm:$0xff]
    %v83 = vld [vmem:[#allocation7 + $0x20] sm:$0xff]
    %v84 = vld [vmem:[#allocation7 + $0x28] sm:$0xff]
    %v85 = vld [vmem:[#allocation7 + $0x30] sm:$0xff]
    %v86 = vld [vmem:[#allocation7 + $0x38] sm:$0xff]
    %v87 = vld [vmem:[#allocation8] sm:$0x1]
    %v88 = vld [vmem:[#allocation8 + $0x1] sm:$0x1]
    %v89 = vld [vmem:[#allocation8 + $0x2] sm:$0x1]
    %v90 = vld [vmem:[#allocation8 + $0x3] sm:$0x1]
    %v91 = vld [vmem:[#allocation8 + $0x4] sm:$0x1]
    %v92 = vld [vmem:[#allocation8 + $0x5] sm:$0x1]
    %v93 = vld [vmem:[#allocation8 + $0x6] sm:$0x1]
    %v94 = vld [vmem:[#allocation8 + $0x7] sm:$0x1]
    %v95 = vlaneseq
    %v96 = vshrl.u32 %v95, 7
    %v97 = vsub.s32 0, %v96
    %v98 = vrot.slane %v87, %v97
    %vm99 = vcmask 261120
    %v101 = vsel %vm99, %v73, 0
    %v104 = vsel %vm99, %v74, 0
    %106 = vmatprep.subr.mxu0 0.0
    %107 = vmatpush1.msra.mxu0 0.0
    %108 = vmatprep.subr.mxu0 0.0
    %109 = vmatpush1.msra.mxu0 0.0
    %110 = vmatprep.subr.mxu0 0.0
    %111 = vmatpush1.msra.mxu0 0.0
    %112 = vmatprep.subr.mxu0 0.0
    %113 = vmatpush1.msra.mxu0 0.0
    %114 = vmatprep.subr.mxu0 0.0
    %115 = vmatpush1.msra.mxu0 0.0
    %116 = vmatprep.subr.mxu0 0.0
    %117 = vmatpush1.msra.mxu0 0.0
    %118 = vmatprep.subr.mxu0 0.0
    %119 = vmatpush1.msra.mxu0 0.0
    %120 = vmatprep.subr.mxu0 0.0
    %121 = vmatpush1.msra.mxu0 0.0
    %122 = vmatprep.subr.mxu0 0.0
    %123 = vmatpush1.msra.mxu0 0.0
    %124 = vmatprep.subr.mxu0 0.0
    %125 = vmatpush1.msra.mxu0 0.0
    %126 = vmatprep.subr.mxu0 0.0
    %127 = vmatpush1.msra.mxu0 0.0
    %128 = vmatprep.subr.mxu0 0.0
    %129 = vmatpush1.msra.mxu0 0.0
    %130 = vmatprep.subr.mxu0 0.0
    %131 = vmatpush1.msra.mxu0 %v78
    %132 = vmatprep.subr.mxu0 0.0
    %133 = vmatpush1.msra.mxu0 %v77
    %134 = vmatprep.subr.mxu0 0.0
    %135 = vmatpush1.msra.mxu0 %v76
    %136 = vmatprep.subr.mxu0 0.0
    %137 = vmatpush1.msra.mxu0 %v75
    %138 = vmatprep.subr.mxu0 0.0
    %139 = vmatpush2.msra.mxu0 0.0
    %140 = vmatprep.subr.mxu0 0.0
    %141 = vmatpush2.msra.mxu0 0.0
    %142 = vmatprep.subr.mxu0 0.0
    %143 = vmatpush2.msra.mxu0 0.0
    %144 = vmatprep.subr.mxu0 0.0
    %145 = vmatpush2.msra.mxu0 0.0
    %146 = vmatprep.subr.mxu0 0.0
    %147 = vmatpush2.msra.mxu0 0.0
    %148 = vmatprep.subr.mxu0 0.0
    %149 = vmatpush2.msra.mxu0 0.0
    %150 = vmatprep.subr.mxu0 0.0
    %151 = vmatpush2.msra.mxu0 0.0
    %152 = vmatprep.subr.mxu0 0.0
    %153 = vmatpush2.msra.mxu0 0.0
    %154 = vmatprep.subr.mxu0 0.0
    %155 = vmatpush2.msra.mxu0 0.0
    %156 = vmatprep.subr.mxu0 0.0
    %157 = vmatpush2.msra.mxu0 0.0
    %158 = vmatprep.subr.mxu0 0.0
    %159 = vmatpush2.msra.mxu0 0.0
    %160 = vmatprep.subr.mxu0 0.0
    %161 = vmatpush2.msra.mxu0 0.0
    %162 = vmatprep.subr.mxu0 0.0
    %163 = vmatpush2.msra.mxu0 0.0
    %164 = vmatprep.subr.mxu0 0.0
    %165 = vmatpush2.msra.mxu0 0.0
    %166 = vmatprep.subr.mxu0 0.0
    %167 = vmatpush2.msra.mxu0 0.0
    %168 = vmatprep.subr.mxu0 0.0
    %169 = vmatpush2.msra.mxu0 0.0
    %170 = vmatprep.mubr.f32.mxu0 0.0
    %171 = vmatmul.mubr.f32.gmra.mxu0 %v101
    %v172 = vpop.f32.mrf.mxu0
    %v173 = vadd.f32 %v98, %v172
    %v174 = vpop.f32.mrf.mxu0
    %175 = vmatprep.mubr.f32.mxu0 0.0
    %176 = vmatmul.mubr.f32.gmra.mxu0 %v104
    %v177 = vpop.f32.mrf.mxu0
    %v178 = vadd.f32 %v98, %v177
    %v179 = vpop.f32.mrf.mxu0
    %180 = vdwg.mxu0
    %183 = vrot.lane.b32.xlu0 %v173, 120
    %v184 = vpop.permute.xlu0 %183
    %185 = vrot.lane.b32.xlu0 %v178, 120
    %v186 = vpop.permute.xlu0 %185
    %187 = vrot.lane.b32.xlu0 %v173, 112
    %v188 = vpop.permute.xlu0 %187
    %189 = vrot.lane.b32.xlu0 %v178, 112
    %v190 = vpop.permute.xlu0 %189
    %191 = vrot.lane.b32.xlu0 %v173, 104
    %v192 = vpop.permute.xlu0 %191
    %193 = vrot.lane.b32.xlu0 %v178, 104
    %v194 = vpop.permute.xlu0 %193
    %195 = vrot.lane.b32.xlu0 %v173, 96
    %v196 = vpop.permute.xlu0 %195
    %vm197 = vcmask 64512
    %v198 = vsel %vm197, %v173, 0
    %v200 = vsel %vm197, %v196, 0
    %202 = vmatprep.subr.mxu0 0.0
    %203 = vmatpush1.xpose.msra.mxu0 0.0
    %204 = vmatprep.subr.mxu0 0.0
    %205 = vmatpush1.xpose.msra.mxu0 0.0
    %206 = vmatprep.subr.mxu0 0.0
    %207 = vmatpush1.xpose.msra.mxu0 0.0
    %208 = vmatprep.subr.mxu0 0.0
    %209 = vmatpush1.xpose.msra.mxu0 0.0
    %210 = vmatprep.subr.mxu0 0.0
    %211 = vmatpush1.xpose.msra.mxu0 0.0
    %212 = vmatprep.subr.mxu0 0.0
    %213 = vmatpush1.xpose.msra.mxu0 0.0
    %214 = vmatprep.subr.mxu0 0.0
    %215 = vmatpush1.xpose.msra.mxu0 0.0
    %216 = vmatprep.subr.mxu0 0.0
    %217 = vmatpush1.xpose.msra.mxu0 0.0
    %218 = vmatprep.subr.mxu0 0.0
    %219 = vmatpush1.xpose.msra.mxu0 0.0
    %220 = vmatprep.subr.mxu0 0.0
    %221 = vmatpush1.xpose.msra.mxu0 0.0
    %222 = vmatprep.subr.mxu0 0.0
    %223 = vmatpush1.xpose.msra.mxu0 0.0
    %224 = vmatprep.subr.mxu0 0.0
    %225 = vmatpush1.xpose.msra.mxu0 0.0
    %226 = vmatprep.subr.mxu0 0.0
    %227 = vmatpush1.xpose.msra.mxu0 0.0
    %228 = vmatprep.subr.mxu0 0.0
    %229 = vmatpush1.xpose.msra.mxu0 0.0
    %230 = vmatprep.subr.mxu0 0.0
    %231 = vmatpush1.xpose.msra.mxu0 0.0
    %232 = vmatprep.subr.mxu0 0.0
    %233 = vmatpush1.xpose.msra.mxu0 %v200
    %234 = vmatprep.subr.mxu0 0.0
    %235 = vmatpush2.xpose.msra.mxu0 0.0
    %236 = vmatprep.subr.mxu0 0.0
    %237 = vmatpush2.xpose.msra.mxu0 0.0
    %238 = vmatprep.subr.mxu0 0.0
    %239 = vmatpush2.xpose.msra.mxu0 0.0
    %240 = vmatprep.subr.mxu0 0.0
    %241 = vmatpush2.xpose.msra.mxu0 0.0
    %242 = vmatprep.subr.mxu0 0.0
    %243 = vmatpush2.xpose.msra.mxu0 0.0
    %244 = vmatprep.subr.mxu0 0.0
    %245 = vmatpush2.xpose.msra.mxu0 0.0
    %246 = vmatprep.subr.mxu0 0.0
    %247 = vmatpush2.xpose.msra.mxu0 0.0
    %248 = vmatprep.subr.mxu0 0.0
    %249 = vmatpush2.xpose.msra.mxu0 0.0
    %250 = vmatprep.subr.mxu0 0.0
    %251 = vmatpush2.xpose.msra.mxu0 0.0
    %252 = vmatprep.subr.mxu0 0.0
    %253 = vmatpush2.xpose.msra.mxu0 0.0
    %254 = vmatprep.subr.mxu0 0.0
    %255 = vmatpush2.xpose.msra.mxu0 0.0
    %256 = vmatprep.subr.mxu0 0.0
    %257 = vmatpush2.xpose.msra.mxu0 0.0
    %258 = vmatprep.subr.mxu0 0.0
    %259 = vmatpush2.xpose.msra.mxu0 0.0
    %260 = vmatprep.subr.mxu0 0.0
    %261 = vmatpush2.xpose.msra.mxu0 0.0
    %262 = vmatprep.subr.mxu0 0.0
    %263 = vmatpush2.xpose.msra.mxu0 0.0
    %264 = vmatprep.subr.mxu0 0.0
    %265 = vmatpush2.xpose.msra.mxu0 0.0
    %266 = vmatprep.mubr.f32.mxu0 0.0
    %267 = vmatmul.mubr.f32.gmra.mxu0 %v198
    %v268 = vpop.f32.mrf.mxu0
    %v269 = vadd.f32 0.0, %v268
    %v270 = vpop.f32.mrf.mxu0
    %271 = vdwg.mxu0
    %272 = vrot.lane.b32.xlu0 %v178, 96
    %v273 = vpop.permute.xlu0 %272
    %v274 = vsel %vm197, %v178, 0
    %v276 = vsel %vm197, %v273, 0
    %278 = vmatprep.subr.mxu0 0.0
    %279 = vmatpush1.xpose.msra.mxu0 0.0
    %280 = vmatprep.subr.mxu0 0.0
    %281 = vmatpush1.xpose.msra.mxu0 0.0
    %282 = vmatprep.subr.mxu0 0.0
    %283 = vmatpush1.xpose.msra.mxu0 0.0
    %284 = vmatprep.subr.mxu0 0.0
    %285 = vmatpush1.xpose.msra.mxu0 0.0
    %286 = vmatprep.subr.mxu0 0.0
    %287 = vmatpush1.xpose.msra.mxu0 0.0
    %288 = vmatprep.subr.mxu0 0.0
    %289 = vmatpush1.xpose.msra.mxu0 0.0
    %290 = vmatprep.subr.mxu0 0.0
    %291 = vmatpush1.xpose.msra.mxu0 0.0
    %292 = vmatprep.subr.mxu0 0.0
    %293 = vmatpush1.xpose.msra.mxu0 0.0
    %294 = vmatprep.subr.mxu0 0.0
    %295 = vmatpush1.xpose.msra.mxu0 0.0
    %296 = vmatprep.subr.mxu0 0.0
    %297 = vmatpush1.xpose.msra.mxu0 0.0
    %298 = vmatprep.subr.mxu0 0.0
    %299 = vmatpush1.xpose.msra.mxu0 0.0
    %300 = vmatprep.subr.mxu0 0.0
    %301 = vmatpush1.xpose.msra.mxu0 0.0
    %302 = vmatprep.subr.mxu0 0.0
    %303 = vmatpush1.xpose.msra.mxu0 0.0
    %304 = vmatprep.subr.mxu0 0.0
    %305 = vmatpush1.xpose.msra.mxu0 0.0
    %306 = vmatprep.subr.mxu0 0.0
    %307 = vmatpush1.xpose.msra.mxu0 0.0
    %308 = vmatprep.subr.mxu0 0.0
    %309 = vmatpush1.xpose.msra.mxu0 %v276
    %310 = vmatprep.subr.mxu0 0.0
    %311 = vmatpush2.xpose.msra.mxu0 0.0
    %312 = vmatprep.subr.mxu0 0.0
    %313 = vmatpush2.xpose.msra.mxu0 0.0
    %314 = vmatprep.subr.mxu0 0.0
    %315 = vmatpush2.xpose.msra.mxu0 0.0
    %316 = vmatprep.subr.mxu0 0.0
    %317 = vmatpush2.xpose.msra.mxu0 0.0
    %318 = vmatprep.subr.mxu0 0.0
    %319 = vmatpush2.xpose.msra.mxu0 0.0
    %320 = vmatprep.subr.mxu0 0.0
    %321 = vmatpush2.xpose.msra.mxu0 0.0
    %322 = vmatprep.subr.mxu0 0.0
    %323 = vmatpush2.xpose.msra.mxu0 0.0
    %324 = vmatprep.subr.mxu0 0.0
    %325 = vmatpush2.xpose.msra.mxu0 0.0
    %326 = vmatprep.subr.mxu0 0.0
    %327 = vmatpush2.xpose.msra.mxu0 0.0
    %328 = vmatprep.subr.mxu0 0.0
    %329 = vmatpush2.xpose.msra.mxu0 0.0
    %330 = vmatprep.subr.mxu0 0.0
    %331 = vmatpush2.xpose.msra.mxu0 0.0
    %332 = vmatprep.subr.mxu0 0.0
    %333 = vmatpush2.xpose.msra.mxu0 0.0
    %334 = vmatprep.subr.mxu0 0.0
    %335 = vmatpush2.xpose.msra.mxu0 0.0
    %336 = vmatprep.subr.mxu0 0.0
    %337 = vmatpush2.xpose.msra.mxu0 0.0
    %338 = vmatprep.subr.mxu0 0.0
    %339 = vmatpush2.xpose.msra.mxu0 0.0
    %340 = vmatprep.subr.mxu0 0.0
    %341 = vmatpush2.xpose.msra.mxu0 0.0
    %342 = vmatprep.mubr.f32.mxu0 0.0
    %343 = vmatmul.mubr.f32.gmra.mxu0 %v274
    %v344 = vpop.f32.mrf.mxu0
    %v345 = vadd.f32 0.0, %v344
    %v346 = vpop.f32.mrf.mxu0
    %347 = vdwg.mxu0
    %348 = vrot.lane.b32.xlu0 %v184, 96
    %v349 = vpop.permute.xlu0 %348
    %v350 = vsel %vm197, %v184, 0
    %v352 = vsel %vm197, %v349, 0
    %354 = vmatprep.subr.mxu0 0.0
    %355 = vmatpush1.xpose.msra.mxu0 0.0
    %356 = vmatprep.subr.mxu0 0.0
    %357 = vmatpush1.xpose.msra.mxu0 0.0
    %358 = vmatprep.subr.mxu0 0.0
    %359 = vmatpush1.xpose.msra.mxu0 0.0
    %360 = vmatprep.subr.mxu0 0.0
    %361 = vmatpush1.xpose.msra.mxu0 0.0
    %362 = vmatprep.subr.mxu0 0.0
    %363 = vmatpush1.xpose.msra.mxu0 0.0
    %364 = vmatprep.subr.mxu0 0.0
    %365 = vmatpush1.xpose.msra.mxu0 0.0
    %366 = vmatprep.subr.mxu0 0.0
    %367 = vmatpush1.xpose.msra.mxu0 0.0
    %368 = vmatprep.subr.mxu0 0.0
    %369 = vmatpush1.xpose.msra.mxu0 0.0
    %370 = vmatprep.subr.mxu0 0.0
    %371 = vmatpush1.xpose.msra.mxu0 0.0
    %372 = vmatprep.subr.mxu0 0.0
    %373 = vmatpush1.xpose.msra.mxu0 0.0
    %374 = vmatprep.subr.mxu0 0.0
    %375 = vmatpush1.xpose.msra.mxu0 0.0
    %376 = vmatprep.subr.mxu0 0.0
    %377 = vmatpush1.xpose.msra.mxu0 0.0
    %378 = vmatprep.subr.mxu0 0.0
    %379 = vmatpush1.xpose.msra.mxu0 0.0
    %380 = vmatprep.subr.mxu0 0.0
    %381 = vmatpush1.xpose.msra.mxu0 0.0
    %382 = vmatprep.subr.mxu0 0.0
    %383 = vmatpush1.xpose.msra.mxu0 0.0
    %384 = vmatprep.subr.mxu0 0.0
    %385 = vmatpush1.xpose.msra.mxu0 %v352
    %386 = vmatprep.subr.mxu0 0.0
    %387 = vmatpush2.xpose.msra.mxu0 0.0
    %388 = vmatprep.subr.mxu0 0.0
    %389 = vmatpush2.xpose.msra.mxu0 0.0
    %390 = vmatprep.subr.mxu0 0.0
    %391 = vmatpush2.xpose.msra.mxu0 0.0
    %392 = vmatprep.subr.mxu0 0.0
    %393 = vmatpush2.xpose.msra.mxu0 0.0
    %394 = vmatprep.subr.mxu0 0.0
    %395 = vmatpush2.xpose.msra.mxu0 0.0
    %396 = vmatprep.subr.mxu0 0.0
    %397 = vmatpush2.xpose.msra.mxu0 0.0
    %398 = vmatprep.subr.mxu0 0.0
    %399 = vmatpush2.xpose.msra.mxu0 0.0
    %400 = vmatprep.subr.mxu0 0.0
    %401 = vmatpush2.xpose.msra.mxu0 0.0
    %402 = vmatprep.subr.mxu0 0.0
    %403 = vmatpush2.xpose.msra.mxu0 0.0
    %404 = vmatprep.subr.mxu0 0.0
    %405 = vmatpush2.xpose.msra.mxu0 0.0
    %406 = vmatprep.subr.mxu0 0.0
    %407 = vmatpush2.xpose.msra.mxu0 0.0
    %408 = vmatprep.subr.mxu0 0.0
    %409 = vmatpush2.xpose.msra.mxu0 0.0
    %410 = vmatprep.subr.mxu0 0.0
    %411 = vmatpush2.xpose.msra.mxu0 0.0
    %412 = vmatprep.subr.mxu0 0.0
    %413 = vmatpush2.xpose.msra.mxu0 0.0
    %414 = vmatprep.subr.mxu0 0.0
    %415 = vmatpush2.xpose.msra.mxu0 0.0
    %416 = vmatprep.subr.mxu0 0.0
    %417 = vmatpush2.xpose.msra.mxu0 0.0
    %418 = vmatprep.mubr.f32.mxu0 0.0
    %419 = vmatmul.mubr.f32.gmra.mxu0 %v350
    %v420 = vpop.f32.mrf.mxu0
    %v421 = vadd.f32 0.0, %v420
    %v422 = vpop.f32.mrf.mxu0
    %423 = vdwg.mxu0
    %424 = vrot.lane.b32.xlu0 %v186, 96
    %v425 = vpop.permute.xlu0 %424
    %v426 = vsel %vm197, %v186, 0
    %v428 = vsel %vm197, %v425, 0
    %430 = vmatprep.subr.mxu0 0.0
    %431 = vmatpush1.xpose.msra.mxu0 0.0
    %432 = vmatprep.subr.mxu0 0.0
    %433 = vmatpush1.xpose.msra.mxu0 0.0
    %434 = vmatprep.subr.mxu0 0.0
    %435 = vmatpush1.xpose.msra.mxu0 0.0
    %436 = vmatprep.subr.mxu0 0.0
    %437 = vmatpush1.xpose.msra.mxu0 0.0
    %438 = vmatprep.subr.mxu0 0.0
    %439 = vmatpush1.xpose.msra.mxu0 0.0
    %440 = vmatprep.subr.mxu0 0.0
    %441 = vmatpush1.xpose.msra.mxu0 0.0
    %442 = vmatprep.subr.mxu0 0.0
    %443 = vmatpush1.xpose.msra.mxu0 0.0
    %444 = vmatprep.subr.mxu0 0.0
    %445 = vmatpush1.xpose.msra.mxu0 0.0
    %446 = vmatprep.subr.mxu0 0.0
    %447 = vmatpush1.xpose.msra.mxu0 0.0
    %448 = vmatprep.subr.mxu0 0.0
    %449 = vmatpush1.xpose.msra.mxu0 0.0
    %450 = vmatprep.subr.mxu0 0.0
    %451 = vmatpush1.xpose.msra.mxu0 0.0
    %452 = vmatprep.subr.mxu0 0.0
    %453 = vmatpush1.xpose.msra.mxu0 0.0
    %454 = vmatprep.subr.mxu0 0.0
    %455 = vmatpush1.xpose.msra.mxu0 0.0
    %456 = vmatprep.subr.mxu0 0.0
    %457 = vmatpush1.xpose.msra.mxu0 0.0
    %458 = vmatprep.subr.mxu0 0.0
    %459 = vmatpush1.xpose.msra.mxu0 0.0
    %460 = vmatprep.subr.mxu0 0.0
    %461 = vmatpush1.xpose.msra.mxu0 %v428
    %462 = vmatprep.subr.mxu0 0.0
    %463 = vmatpush2.xpose.msra.mxu0 0.0
    %464 = vmatprep.subr.mxu0 0.0
    %465 = vmatpush2.xpose.msra.mxu0 0.0
    %466 = vmatprep.subr.mxu0 0.0
    %467 = vmatpush2.xpose.msra.mxu0 0.0
    %468 = vmatprep.subr.mxu0 0.0
    %469 = vmatpush2.xpose.msra.mxu0 0.0
    %470 = vmatprep.subr.mxu0 0.0
    %471 = vmatpush2.xpose.msra.mxu0 0.0
    %472 = vmatprep.subr.mxu0 0.0
    %473 = vmatpush2.xpose.msra.mxu0 0.0
    %474 = vmatprep.subr.mxu0 0.0
    %475 = vmatpush2.xpose.msra.mxu0 0.0
    %476 = vmatprep.subr.mxu0 0.0
    %477 = vmatpush2.xpose.msra.mxu0 0.0
    %478 = vmatprep.subr.mxu0 0.0
    %479 = vmatpush2.xpose.msra.mxu0 0.0
    %480 = vmatprep.subr.mxu0 0.0
    %481 = vmatpush2.xpose.msra.mxu0 0.0
    %482 = vmatprep.subr.mxu0 0.0
    %483 = vmatpush2.xpose.msra.mxu0 0.0
    %484 = vmatprep.subr.mxu0 0.0
    %485 = vmatpush2.xpose.msra.mxu0 0.0
    %486 = vmatprep.subr.mxu0 0.0
    %487 = vmatpush2.xpose.msra.mxu0 0.0
    %488 = vmatprep.subr.mxu0 0.0
    %489 = vmatpush2.xpose.msra.mxu0 0.0
    %490 = vmatprep.subr.mxu0 0.0
    %491 = vmatpush2.xpose.msra.mxu0 0.0
    %492 = vmatprep.subr.mxu0 0.0
    %493 = vmatpush2.xpose.msra.mxu0 0.0
    %494 = vmatprep.mubr.f32.mxu0 0.0
    %495 = vmatmul.mubr.f32.gmra.mxu0 %v426
    %v496 = vpop.f32.mrf.mxu0
    %v497 = vadd.f32 0.0, %v496
    %v498 = vpop.f32.mrf.mxu0
    %499 = vdwg.mxu0
    %500 = vrot.lane.b32.xlu0 %v188, 96
    %v501 = vpop.permute.xlu0 %500
    %v502 = vsel %vm197, %v188, 0
    %v504 = vsel %vm197, %v501, 0
    %506 = vmatprep.subr.mxu0 0.0
    %507 = vmatpush1.xpose.msra.mxu0 0.0
    %508 = vmatprep.subr.mxu0 0.0
    %509 = vmatpush1.xpose.msra.mxu0 0.0
    %510 = vmatprep.subr.mxu0 0.0
    %511 = vmatpush1.xpose.msra.mxu0 0.0
    %512 = vmatprep.subr.mxu0 0.0
    %513 = vmatpush1.xpose.msra.mxu0 0.0
    %514 = vmatprep.subr.mxu0 0.0
    %515 = vmatpush1.xpose.msra.mxu0 0.0
    %516 = vmatprep.subr.mxu0 0.0
    %517 = vmatpush1.xpose.msra.mxu0 0.0
    %518 = vmatprep.subr.mxu0 0.0
    %519 = vmatpush1.xpose.msra.mxu0 0.0
    %520 = vmatprep.subr.mxu0 0.0
    %521 = vmatpush1.xpose.msra.mxu0 0.0
    %522 = vmatprep.subr.mxu0 0.0
    %523 = vmatpush1.xpose.msra.mxu0 0.0
    %524 = vmatprep.subr.mxu0 0.0
    %525 = vmatpush1.xpose.msra.mxu0 0.0
    %526 = vmatprep.subr.mxu0 0.0
    %527 = vmatpush1.xpose.msra.mxu0 0.0
    %528 = vmatprep.subr.mxu0 0.0
    %529 = vmatpush1.xpose.msra.mxu0 0.0
    %530 = vmatprep.subr.mxu0 0.0
    %531 = vmatpush1.xpose.msra.mxu0 0.0
    %532 = vmatprep.subr.mxu0 0.0
    %533 = vmatpush1.xpose.msra.mxu0 0.0
    %534 = vmatprep.subr.mxu0 0.0
    %535 = vmatpush1.xpose.msra.mxu0 0.0
    %536 = vmatprep.subr.mxu0 0.0
    %537 = vmatpush1.xpose.msra.mxu0 %v504
    %538 = vmatprep.subr.mxu0 0.0
    %539 = vmatpush2.xpose.msra.mxu0 0.0
    %540 = vmatprep.subr.mxu0 0.0
    %541 = vmatpush2.xpose.msra.mxu0 0.0
    %542 = vmatprep.subr.mxu0 0.0
    %543 = vmatpush2.xpose.msra.mxu0 0.0
    %544 = vmatprep.subr.mxu0 0.0
    %545 = vmatpush2.xpose.msra.mxu0 0.0
    %546 = vmatprep.subr.mxu0 0.0
    %547 = vmatpush2.xpose.msra.mxu0 0.0
    %548 = vmatprep.subr.mxu0 0.0
    %549 = vmatpush2.xpose.msra.mxu0 0.0
    %550 = vmatprep.subr.mxu0 0.0
    %551 = vmatpush2.xpose.msra.mxu0 0.0
    %552 = vmatprep.subr.mxu0 0.0
    %553 = vmatpush2.xpose.msra.mxu0 0.0
    %554 = vmatprep.subr.mxu0 0.0
    %555 = vmatpush2.xpose.msra.mxu0 0.0
    %556 = vmatprep.subr.mxu0 0.0
    %557 = vmatpush2.xpose.msra.mxu0 0.0
    %558 = vmatprep.subr.mxu0 0.0
    %559 = vmatpush2.xpose.msra.mxu0 0.0
    %560 = vmatprep.subr.mxu0 0.0
    %561 = vmatpush2.xpose.msra.mxu0 0.0
    %562 = vmatprep.subr.mxu0 0.0
    %563 = vmatpush2.xpose.msra.mxu0 0.0
    %564 = vmatprep.subr.mxu0 0.0
    %565 = vmatpush2.xpose.msra.mxu0 0.0
    %566 = vmatprep.subr.mxu0 0.0
    %567 = vmatpush2.xpose.msra.mxu0 0.0
    %568 = vmatprep.subr.mxu0 0.0
    %569 = vmatpush2.xpose.msra.mxu0 0.0
    %570 = vmatprep.mubr.f32.mxu0 0.0
    %571 = vmatmul.mubr.f32.gmra.mxu0 %v502
    %v572 = vpop.f32.mrf.mxu0
    %v573 = vadd.f32 0.0, %v572
    %v574 = vpop.f32.mrf.mxu0
    %575 = vdwg.mxu0
    %576 = vrot.lane.b32.xlu0 %v190, 96
    %v577 = vpop.permute.xlu0 %576
    %v578 = vsel %vm197, %v190, 0
    %v580 = vsel %vm197, %v577, 0
    %582 = vmatprep.subr.mxu0 0.0
    %583 = vmatpush1.xpose.msra.mxu0 0.0
    %584 = vmatprep.subr.mxu0 0.0
    %585 = vmatpush1.xpose.msra.mxu0 0.0
    %586 = vmatprep.subr.mxu0 0.0
    %587 = vmatpush1.xpose.msra.mxu0 0.0
    %588 = vmatprep.subr.mxu0 0.0
    %589 = vmatpush1.xpose.msra.mxu0 0.0
    %590 = vmatprep.subr.mxu0 0.0
    %591 = vmatpush1.xpose.msra.mxu0 0.0
    %592 = vmatprep.subr.mxu0 0.0
    %593 = vmatpush1.xpose.msra.mxu0 0.0
    %594 = vmatprep.subr.mxu0 0.0
    %595 = vmatpush1.xpose.msra.mxu0 0.0
    %596 = vmatprep.subr.mxu0 0.0
    %597 = vmatpush1.xpose.msra.mxu0 0.0
    %598 = vmatprep.subr.mxu0 0.0
    %599 = vmatpush1.xpose.msra.mxu0 0.0
    %600 = vmatprep.subr.mxu0 0.0
    %601 = vmatpush1.xpose.msra.mxu0 0.0
    %602 = vmatprep.subr.mxu0 0.0
    %603 = vmatpush1.xpose.msra.mxu0 0.0
    %604 = vmatprep.subr.mxu0 0.0
    %605 = vmatpush1.xpose.msra.mxu0 0.0
    %606 = vmatprep.subr.mxu0 0.0
    %607 = vmatpush1.xpose.msra.mxu0 0.0
    %608 = vmatprep.subr.mxu0 0.0
    %609 = vmatpush1.xpose.msra.mxu0 0.0
    %610 = vmatprep.subr.mxu0 0.0
    %611 = vmatpush1.xpose.msra.mxu0 0.0
    %612 = vmatprep.subr.mxu0 0.0
    %613 = vmatpush1.xpose.msra.mxu0 %v580
    %614 = vmatprep.subr.mxu0 0.0
    %615 = vmatpush2.xpose.msra.mxu0 0.0
    %616 = vmatprep.subr.mxu0 0.0
    %617 = vmatpush2.xpose.msra.mxu0 0.0
    %618 = vmatprep.subr.mxu0 0.0
    %619 = vmatpush2.xpose.msra.mxu0 0.0
    %620 = vmatprep.subr.mxu0 0.0
    %621 = vmatpush2.xpose.msra.mxu0 0.0
    %622 = vmatprep.subr.mxu0 0.0
    %623 = vmatpush2.xpose.msra.mxu0 0.0
    %624 = vmatprep.subr.mxu0 0.0
    %625 = vmatpush2.xpose.msra.mxu0 0.0
    %626 = vmatprep.subr.mxu0 0.0
    %627 = vmatpush2.xpose.msra.mxu0 0.0
    %628 = vmatprep.subr.mxu0 0.0
    %629 = vmatpush2.xpose.msra.mxu0 0.0
    %630 = vmatprep.subr.mxu0 0.0
    %631 = vmatpush2.xpose.msra.mxu0 0.0
    %632 = vmatprep.subr.mxu0 0.0
    %633 = vmatpush2.xpose.msra.mxu0 0.0
    %634 = vmatprep.subr.mxu0 0.0
    %635 = vmatpush2.xpose.msra.mxu0 0.0
    %636 = vmatprep.subr.mxu0 0.0
    %637 = vmatpush2.xpose.msra.mxu0 0.0
    %638 = vmatprep.subr.mxu0 0.0
    %639 = vmatpush2.xpose.msra.mxu0 0.0
    %640 = vmatprep.subr.mxu0 0.0
    %641 = vmatpush2.xpose.msra.mxu0 0.0
    %642 = vmatprep.subr.mxu0 0.0
    %643 = vmatpush2.xpose.msra.mxu0 0.0
    %644 = vmatprep.subr.mxu0 0.0
    %645 = vmatpush2.xpose.msra.mxu0 0.0
    %646 = vmatprep.mubr.f32.mxu0 0.0
    %647 = vmatmul.mubr.f32.gmra.mxu0 %v578
    %v648 = vpop.f32.mrf.mxu0
    %v649 = vadd.f32 0.0, %v648
    %v650 = vpop.f32.mrf.mxu0
    %651 = vdwg.mxu0
    %652 = vrot.lane.b32.xlu0 %v192, 96
    %v653 = vpop.permute.xlu0 %652
    %v654 = vsel %vm197, %v192, 0
    %v656 = vsel %vm197, %v653, 0
    %658 = vmatprep.subr.mxu0 0.0
    %659 = vmatpush1.xpose.msra.mxu0 0.0
    %660 = vmatprep.subr.mxu0 0.0
    %661 = vmatpush1.xpose.msra.mxu0 0.0
    %662 = vmatprep.subr.mxu0 0.0
    %663 = vmatpush1.xpose.msra.mxu0 0.0
    %664 = vmatprep.subr.mxu0 0.0
    %665 = vmatpush1.xpose.msra.mxu0 0.0
    %666 = vmatprep.subr.mxu0 0.0
    %667 = vmatpush1.xpose.msra.mxu0 0.0
    %668 = vmatprep.subr.mxu0 0.0
    %669 = vmatpush1.xpose.msra.mxu0 0.0
    %670 = vmatprep.subr.mxu0 0.0
    %671 = vmatpush1.xpose.msra.mxu0 0.0
    %672 = vmatprep.subr.mxu0 0.0
    %673 = vmatpush1.xpose.msra.mxu0 0.0
    %674 = vmatprep.subr.mxu0 0.0
    %675 = vmatpush1.xpose.msra.mxu0 0.0
    %676 = vmatprep.subr.mxu0 0.0
    %677 = vmatpush1.xpose.msra.mxu0 0.0
    %678 = vmatprep.subr.mxu0 0.0
    %679 = vmatpush1.xpose.msra.mxu0 0.0
    %680 = vmatprep.subr.mxu0 0.0
    %681 = vmatpush1.xpose.msra.mxu0 0.0
    %682 = vmatprep.subr.mxu0 0.0
    %683 = vmatpush1.xpose.msra.mxu0 0.0
    %684 = vmatprep.subr.mxu0 0.0
    %685 = vmatpush1.xpose.msra.mxu0 0.0
    %686 = vmatprep.subr.mxu0 0.0
    %687 = vmatpush1.xpose.msra.mxu0 0.0
    %688 = vmatprep.subr.mxu0 0.0
    %689 = vmatpush1.xpose.msra.mxu0 %v656
    %690 = vmatprep.subr.mxu0 0.0
    %691 = vmatpush2.xpose.msra.mxu0 0.0
    %692 = vmatprep.subr.mxu0 0.0
    %693 = vmatpush2.xpose.msra.mxu0 0.0
    %694 = vmatprep.subr.mxu0 0.0
    %695 = vmatpush2.xpose.msra.mxu0 0.0
    %696 = vmatprep.subr.mxu0 0.0
    %697 = vmatpush2.xpose.msra.mxu0 0.0
    %698 = vmatprep.subr.mxu0 0.0
    %699 = vmatpush2.xpose.msra.mxu0 0.0
    %700 = vmatprep.subr.mxu0 0.0
    %701 = vmatpush2.xpose.msra.mxu0 0.0
    %702 = vmatprep.subr.mxu0 0.0
    %703 = vmatpush2.xpose.msra.mxu0 0.0
    %704 = vmatprep.subr.mxu0 0.0
    %705 = vmatpush2.xpose.msra.mxu0 0.0
    %706 = vmatprep.subr.mxu0 0.0
    %707 = vmatpush2.xpose.msra.mxu0 0.0
    %708 = vmatprep.subr.mxu0 0.0
    %709 = vmatpush2.xpose.msra.mxu0 0.0
    %710 = vmatprep.subr.mxu0 0.0
    %711 = vmatpush2.xpose.msra.mxu0 0.0
    %712 = vmatprep.subr.mxu0 0.0
    %713 = vmatpush2.xpose.msra.mxu0 0.0
    %714 = vmatprep.subr.mxu0 0.0
    %715 = vmatpush2.xpose.msra.mxu0 0.0
    %716 = vmatprep.subr.mxu0 0.0
    %717 = vmatpush2.xpose.msra.mxu0 0.0
    %718 = vmatprep.subr.mxu0 0.0
    %719 = vmatpush2.xpose.msra.mxu0 0.0
    %720 = vmatprep.subr.mxu0 0.0
    %721 = vmatpush2.xpose.msra.mxu0 0.0
    %722 = vmatprep.mubr.f32.mxu0 0.0
    %723 = vmatmul.mubr.f32.gmra.mxu0 %v654
    %v724 = vpop.f32.mrf.mxu0
    %v725 = vadd.f32 0.0, %v724
    %v726 = vpop.f32.mrf.mxu0
    %727 = vdwg.mxu0
    %728 = vrot.lane.b32.xlu0 %v194, 96
    %v729 = vpop.permute.xlu0 %728
    %v730 = vsel %vm197, %v194, 0
    %v732 = vsel %vm197, %v729, 0
    %734 = vmatprep.subr.mxu0 0.0
    %735 = vmatpush1.xpose.msra.mxu0 0.0
    %736 = vmatprep.subr.mxu0 0.0
    %737 = vmatpush1.xpose.msra.mxu0 0.0
    %738 = vmatprep.subr.mxu0 0.0
    %739 = vmatpush1.xpose.msra.mxu0 0.0
    %740 = vmatprep.subr.mxu0 0.0
    %741 = vmatpush1.xpose.msra.mxu0 0.0
    %742 = vmatprep.subr.mxu0 0.0
    %743 = vmatpush1.xpose.msra.mxu0 0.0
    %744 = vmatprep.subr.mxu0 0.0
    %745 = vmatpush1.xpose.msra.mxu0 0.0
    %746 = vmatprep.subr.mxu0 0.0
    %747 = vmatpush1.xpose.msra.mxu0 0.0
    %748 = vmatprep.subr.mxu0 0.0
    %749 = vmatpush1.xpose.msra.mxu0 0.0
    %750 = vmatprep.subr.mxu0 0.0
    %751 = vmatpush1.xpose.msra.mxu0 0.0
    %752 = vmatprep.subr.mxu0 0.0
    %753 = vmatpush1.xpose.msra.mxu0 0.0
    %754 = vmatprep.subr.mxu0 0.0
    %755 = vmatpush1.xpose.msra.mxu0 0.0
    %756 = vmatprep.subr.mxu0 0.0
    %757 = vmatpush1.xpose.msra.mxu0 0.0
    %758 = vmatprep.subr.mxu0 0.0
    %759 = vmatpush1.xpose.msra.mxu0 0.0
    %760 = vmatprep.subr.mxu0 0.0
    %761 = vmatpush1.xpose.msra.mxu0 0.0
    %762 = vmatprep.subr.mxu0 0.0
    %763 = vmatpush1.xpose.msra.mxu0 0.0
    %764 = vmatprep.subr.mxu0 0.0
    %765 = vmatpush1.xpose.msra.mxu0 %v732
    %766 = vmatprep.subr.mxu0 0.0
    %767 = vmatpush2.xpose.msra.mxu0 0.0
    %768 = vmatprep.subr.mxu0 0.0
    %769 = vmatpush2.xpose.msra.mxu0 0.0
    %770 = vmatprep.subr.mxu0 0.0
    %771 = vmatpush2.xpose.msra.mxu0 0.0
    %772 = vmatprep.subr.mxu0 0.0
    %773 = vmatpush2.xpose.msra.mxu0 0.0
    %774 = vmatprep.subr.mxu0 0.0
    %775 = vmatpush2.xpose.msra.mxu0 0.0
    %776 = vmatprep.subr.mxu0 0.0
    %777 = vmatpush2.xpose.msra.mxu0 0.0
    %778 = vmatprep.subr.mxu0 0.0
    %779 = vmatpush2.xpose.msra.mxu0 0.0
    %780 = vmatprep.subr.mxu0 0.0
    %781 = vmatpush2.xpose.msra.mxu0 0.0
    %782 = vmatprep.subr.mxu0 0.0
    %783 = vmatpush2.xpose.msra.mxu0 0.0
    %784 = vmatprep.subr.mxu0 0.0
    %785 = vmatpush2.xpose.msra.mxu0 0.0
    %786 = vmatprep.subr.mxu0 0.0
    %787 = vmatpush2.xpose.msra.mxu0 0.0
    %788 = vmatprep.subr.mxu0 0.0
    %789 = vmatpush2.xpose.msra.mxu0 0.0
    %790 = vmatprep.subr.mxu0 0.0
    %791 = vmatpush2.xpose.msra.mxu0 0.0
    %792 = vmatprep.subr.mxu0 0.0
    %793 = vmatpush2.xpose.msra.mxu0 0.0
    %794 = vmatprep.subr.mxu0 0.0
    %795 = vmatpush2.xpose.msra.mxu0 0.0
    %796 = vmatprep.subr.mxu0 0.0
    %797 = vmatpush2.xpose.msra.mxu0 0.0
    %798 = vmatprep.mubr.f32.mxu0 0.0
    %799 = vmatmul.mubr.f32.gmra.mxu0 %v730
    %v800 = vpop.f32.mrf.mxu0
    %v801 = vadd.f32 0.0, %v800
    %v802 = vpop.f32.mrf.mxu0
    %803 = vdwg.mxu0
    %v804 = vsel %vm197, %v269, -inf
    %805 = vmax.xlane.f32.xlu0 %v804
    %v806 = vpop.xlane.xlu0 %805
    %v807 = vsel %vm197, %v345, -inf
    %808 = vmax.xlane.f32.xlu0 %v807
    %v809 = vpop.xlane.xlu0 %808
    %v810 = vsel %vm197, %v421, -inf
    %811 = vmax.xlane.f32.xlu0 %v810
    %v812 = vpop.xlane.xlu0 %811
    %v813 = vsel %vm197, %v497, -inf
    %814 = vmax.xlane.f32.xlu0 %v813
    %v815 = vpop.xlane.xlu0 %814
    %v816 = vsel %vm197, %v573, -inf
    %817 = vmax.xlane.f32.xlu0 %v816
    %v818 = vpop.xlane.xlu0 %817
    %v819 = vsel %vm197, %v649, -inf
    %820 = vmax.xlane.f32.xlu0 %v819
    %v821 = vpop.xlane.xlu0 %820
    %v822 = vsel %vm197, %v725, -inf
    %823 = vmax.xlane.f32.xlu0 %v822
    %v824 = vpop.xlane.xlu0 %823
    %v825 = vsel %vm197, %v801, -inf
    %826 = vmax.xlane.f32.xlu0 %v825
    %v827 = vpop.xlane.xlu0 %826
    %v828 = vsub.f32 %v269, %v806
    %v829 = vsub.f32 %v345, %v809
    %v830 = vsub.f32 %v421, %v812
    %v831 = vsub.f32 %v497, %v815
    %v832 = vsub.f32 %v573, %v818
    %v833 = vsub.f32 %v649, %v821
    %v834 = vsub.f32 %v725, %v824
    %v835 = vsub.f32 %v801, %v827
    %v836 = vmul.f32 %v828, 1.442695
    %v837 = vpow.pop %v836
    %v838 = vmul.f32 %v829, 1.442695
    %v839 = vpow.pop %v838
    %v840 = vmul.f32 %v830, 1.442695
    %v841 = vpow.pop %v840
    %v842 = vmul.f32 %v831, 1.442695
    %v843 = vpow.pop %v842
    %v844 = vmul.f32 %v832, 1.442695
    %v845 = vpow.pop %v844
    %v846 = vmul.f32 %v833, 1.442695
    %v847 = vpow.pop %v846
    %v848 = vmul.f32 %v834, 1.442695
    %v849 = vpow.pop %v848
    %v850 = vmul.f32 %v835, 1.442695
    %v851 = vpow.pop %v850
    %v852 = vsel %vm197, %v837, 0.0
    %853 = vadd.xlane.f32.xlu0 %v852
    %v854 = vpop.xlane.xlu0 %853
    %v855 = vsel %vm197, %v839, 0.0
    %856 = vadd.xlane.f32.xlu0 %v855
    %v857 = vpop.xlane.xlu0 %856
    %v858 = vsel %vm197, %v841, 0.0
    %859 = vadd.xlane.f32.xlu0 %v858
    %v860 = vpop.xlane.xlu0 %859
    %v861 = vsel %vm197, %v843, 0.0
    %862 = vadd.xlane.f32.xlu0 %v861
    %v863 = vpop.xlane.xlu0 %862
    %v864 = vsel %vm197, %v845, 0.0
    %865 = vadd.xlane.f32.xlu0 %v864
    %v866 = vpop.xlane.xlu0 %865
    %v867 = vsel %vm197, %v847, 0.0
    %868 = vadd.xlane.f32.xlu0 %v867
    %v869 = vpop.xlane.xlu0 %868
    %v870 = vsel %vm197, %v849, 0.0
    %871 = vadd.xlane.f32.xlu0 %v870
    %v872 = vpop.xlane.xlu0 %871
    %v873 = vsel %vm197, %v851, 0.0
    %874 = vadd.xlane.f32.xlu0 %v873
    %v875 = vpop.xlane.xlu0 %874
    %v876 = vrcp.pop %v854
    %v877 = vrcp.pop %v857
    %v878 = vrcp.pop %v860
    %v879 = vrcp.pop %v863
    %v880 = vrcp.pop %v866
    %v881 = vrcp.pop %v869
    %v882 = vrcp.pop %v872
    %v883 = vrcp.pop %v875
    %v884 = vmul.f32 %v837, %v876
    %v885 = vmul.f32 %v839, %v877
    %v886 = vmul.f32 %v841, %v878
    %v887 = vmul.f32 %v843, %v879
    %v888 = vmul.f32 %v845, %v880
    %v889 = vmul.f32 %v847, %v881
    %v890 = vmul.f32 %v849, %v882
    %v891 = vmul.f32 %v851, %v883
    %892 = vrot.lane.b32.xlu0 %v173, 64
    %v893 = vpop.permute.xlu0 %892
    %v896 = vsel %vm197, %v884, 0
    %898 = vmatprep.subr.mxu0 0.0
    %899 = vmatpush1.msra.mxu0 0.0
    %900 = vmatprep.subr.mxu0 0.0
    %901 = vmatpush1.msra.mxu0 0.0
    %902 = vmatprep.subr.mxu0 0.0
    %903 = vmatpush1.msra.mxu0 0.0
    %904 = vmatprep.subr.mxu0 0.0
    %905 = vmatpush1.msra.mxu0 0.0
    %906 = vmatprep.subr.mxu0 0.0
    %907 = vmatpush1.msra.mxu0 0.0
    %908 = vmatprep.subr.mxu0 0.0
    %909 = vmatpush1.msra.mxu0 0.0
    %910 = vmatprep.subr.mxu0 0.0
    %911 = vmatpush1.msra.mxu0 0.0
    %912 = vmatprep.subr.mxu0 0.0
    %913 = vmatpush1.msra.mxu0 0.0
    %914 = vmatprep.subr.mxu0 0.0
    %915 = vmatpush1.msra.mxu0 0.0
    %916 = vmatprep.subr.mxu0 0.0
    %917 = vmatpush1.msra.mxu0 0.0
    %918 = vmatprep.subr.mxu0 0.0
    %919 = vmatpush1.msra.mxu0 0.0
    %920 = vmatprep.subr.mxu0 0.0
    %921 = vmatpush1.msra.mxu0 0.0
    %922 = vmatprep.subr.mxu0 0.0
    %923 = vmatpush1.msra.mxu0 0.0
    %924 = vmatprep.subr.mxu0 0.0
    %925 = vmatpush1.msra.mxu0 0.0
    %926 = vmatprep.subr.mxu0 0.0
    %927 = vmatpush1.msra.mxu0 0.0
    %928 = vmatprep.subr.mxu0 0.0
    %929 = vmatpush1.msra.mxu0 %v893
    %930 = vmatprep.subr.mxu0 0.0
    %931 = vmatpush2.msra.mxu0 0.0
    %932 = vmatprep.subr.mxu0 0.0
    %933 = vmatpush2.msra.mxu0 0.0
    %934 = vmatprep.subr.mxu0 0.0
    %935 = vmatpush2.msra.mxu0 0.0
    %936 = vmatprep.subr.mxu0 0.0
    %937 = vmatpush2.msra.mxu0 0.0
    %938 = vmatprep.subr.mxu0 0.0
    %939 = vmatpush2.msra.mxu0 0.0
    %940 = vmatprep.subr.mxu0 0.0
    %941 = vmatpush2.msra.mxu0 0.0
    %942 = vmatprep.subr.mxu0 0.0
    %943 = vmatpush2.msra.mxu0 0.0
    %944 = vmatprep.subr.mxu0 0.0
    %945 = vmatpush2.msra.mxu0 0.0
    %946 = vmatprep.subr.mxu0 0.0
    %947 = vmatpush2.msra.mxu0 0.0
    %948 = vmatprep.subr.mxu0 0.0
    %949 = vmatpush2.msra.mxu0 0.0
    %950 = vmatprep.subr.mxu0 0.0
    %951 = vmatpush2.msra.mxu0 0.0
    %952 = vmatprep.subr.mxu0 0.0
    %953 = vmatpush2.msra.mxu0 0.0
    %954 = vmatprep.subr.mxu0 0.0
    %955 = vmatpush2.msra.mxu0 0.0
    %956 = vmatprep.subr.mxu0 0.0
    %957 = vmatpush2.msra.mxu0 0.0
    %958 = vmatprep.subr.mxu0 0.0
    %959 = vmatpush2.msra.mxu0 0.0
    %960 = vmatprep.subr.mxu0 0.0
    %961 = vmatpush2.msra.mxu0 0.0
    %962 = vmatprep.mubr.f32.mxu0 0.0
    %963 = vmatmul.mubr.f32.gmra.mxu0 %v896
    %v964 = vpop.f32.mrf.mxu0
    %v965 = vadd.f32 0.0, %v964
    %v966 = vpop.f32.mrf.mxu0
    %967 = vdwg.mxu0
    %968 = vrot.lane.b32.xlu0 %v178, 64
    %v969 = vpop.permute.xlu0 %968
    %v972 = vsel %vm197, %v885, 0
    %974 = vmatprep.subr.mxu0 0.0
    %975 = vmatpush1.msra.mxu0 0.0
    %976 = vmatprep.subr.mxu0 0.0
    %977 = vmatpush1.msra.mxu0 0.0
    %978 = vmatprep.subr.mxu0 0.0
    %979 = vmatpush1.msra.mxu0 0.0
    %980 = vmatprep.subr.mxu0 0.0
    %981 = vmatpush1.msra.mxu0 0.0
    %982 = vmatprep.subr.mxu0 0.0
    %983 = vmatpush1.msra.mxu0 0.0
    %984 = vmatprep.subr.mxu0 0.0
    %985 = vmatpush1.msra.mxu0 0.0
    %986 = vmatprep.subr.mxu0 0.0
    %987 = vmatpush1.msra.mxu0 0.0
    %988 = vmatprep.subr.mxu0 0.0
    %989 = vmatpush1.msra.mxu0 0.0
    %990 = vmatprep.subr.mxu0 0.0
    %991 = vmatpush1.msra.mxu0 0.0
    %992 = vmatprep.subr.mxu0 0.0
    %993 = vmatpush1.msra.mxu0 0.0
    %994 = vmatprep.subr.mxu0 0.0
    %995 = vmatpush1.msra.mxu0 0.0
    %996 = vmatprep.subr.mxu0 0.0
    %997 = vmatpush1.msra.mxu0 0.0
    %998 = vmatprep.subr.mxu0 0.0
    %999 = vmatpush1.msra.mxu0 0.0
    %1000 = vmatprep.subr.mxu0 0.0
    %1001 = vmatpush1.msra.mxu0 0.0
    %1002 = vmatprep.subr.mxu0 0.0
    %1003 = vmatpush1.msra.mxu0 0.0
    %1004 = vmatprep.subr.mxu0 0.0
    %1005 = vmatpush1.msra.mxu0 %v969
    %1006 = vmatprep.subr.mxu0 0.0
    %1007 = vmatpush2.msra.mxu0 0.0
    %1008 = vmatprep.subr.mxu0 0.0
    %1009 = vmatpush2.msra.mxu0 0.0
    %1010 = vmatprep.subr.mxu0 0.0
    %1011 = vmatpush2.msra.mxu0 0.0
    %1012 = vmatprep.subr.mxu0 0.0
    %1013 = vmatpush2.msra.mxu0 0.0
    %1014 = vmatprep.subr.mxu0 0.0
    %1015 = vmatpush2.msra.mxu0 0.0
    %1016 = vmatprep.subr.mxu0 0.0
    %1017 = vmatpush2.msra.mxu0 0.0
    %1018 = vmatprep.subr.mxu0 0.0
    %1019 = vmatpush2.msra.mxu0 0.0
    %1020 = vmatprep.subr.mxu0 0.0
    %1021 = vmatpush2.msra.mxu0 0.0
    %1022 = vmatprep.subr.mxu0 0.0
    %1023 = vmatpush2.msra.mxu0 0.0
    %1024 = vmatprep.subr.mxu0 0.0
    %1025 = vmatpush2.msra.mxu0 0.0
    %1026 = vmatprep.subr.mxu0 0.0
    %1027 = vmatpush2.msra.mxu0 0.0
    %1028 = vmatprep.subr.mxu0 0.0
    %1029 = vmatpush2.msra.mxu0 0.0
    %1030 = vmatprep.subr.mxu0 0.0
    %1031 = vmatpush2.msra.mxu0 0.0
    %1032 = vmatprep.subr.mxu0 0.0
    %1033 = vmatpush2.msra.mxu0 0.0
    %1034 = vmatprep.subr.mxu0 0.0
    %1035 = vmatpush2.msra.mxu0 0.0
    %1036 = vmatprep.subr.mxu0 0.0
    %1037 = vmatpush2.msra.mxu0 0.0
    %1038 = vmatprep.mubr.f32.mxu0 0.0
    %1039 = vmatmul.mubr.f32.gmra.mxu0 %v972
    %v1040 = vpop.f32.mrf.mxu0
    %v1041 = vadd.f32 0.0, %v1040
    %v1042 = vpop.f32.mrf.mxu0
    %1043 = vdwg.mxu0
    %1044 = vrot.lane.b32.xlu0 %v184, 64
    %v1045 = vpop.permute.xlu0 %1044
    %v1048 = vsel %vm197, %v886, 0
    %1050 = vmatprep.subr.mxu0 0.0
    %1051 = vmatpush1.msra.mxu0 0.0
    %1052 = vmatprep.subr.mxu0 0.0
    %1053 = vmatpush1.msra.mxu0 0.0
    %1054 = vmatprep.subr.mxu0 0.0
    %1055 = vmatpush1.msra.mxu0 0.0
    %1056 = vmatprep.subr.mxu0 0.0
    %1057 = vmatpush1.msra.mxu0 0.0
    %1058 = vmatprep.subr.mxu0 0.0
    %1059 = vmatpush1.msra.mxu0 0.0
    %1060 = vmatprep.subr.mxu0 0.0
    %1061 = vmatpush1.msra.mxu0 0.0
    %1062 = vmatprep.subr.mxu0 0.0
    %1063 = vmatpush1.msra.mxu0 0.0
    %1064 = vmatprep.subr.mxu0 0.0
    %1065 = vmatpush1.msra.mxu0 0.0
    %1066 = vmatprep.subr.mxu0 0.0
    %1067 = vmatpush1.msra.mxu0 0.0
    %1068 = vmatprep.subr.mxu0 0.0
    %1069 = vmatpush1.msra.mxu0 0.0
    %1070 = vmatprep.subr.mxu0 0.0
    %1071 = vmatpush1.msra.mxu0 0.0
    %1072 = vmatprep.subr.mxu0 0.0
    %1073 = vmatpush1.msra.mxu0 0.0
    %1074 = vmatprep.subr.mxu0 0.0
    %1075 = vmatpush1.msra.mxu0 0.0
    %1076 = vmatprep.subr.mxu0 0.0
    %1077 = vmatpush1.msra.mxu0 0.0
    %1078 = vmatprep.subr.mxu0 0.0
    %1079 = vmatpush1.msra.mxu0 0.0
    %1080 = vmatprep.subr.mxu0 0.0
    %1081 = vmatpush1.msra.mxu0 %v1045
    %1082 = vmatprep.subr.mxu0 0.0
    %1083 = vmatpush2.msra.mxu0 0.0
    %1084 = vmatprep.subr.mxu0 0.0
    %1085 = vmatpush2.msra.mxu0 0.0
    %1086 = vmatprep.subr.mxu0 0.0
    %1087 = vmatpush2.msra.mxu0 0.0
    %1088 = vmatprep.subr.mxu0 0.0
    %1089 = vmatpush2.msra.mxu0 0.0
    %1090 = vmatprep.subr.mxu0 0.0
    %1091 = vmatpush2.msra.mxu0 0.0
    %1092 = vmatprep.subr.mxu0 0.0
    %1093 = vmatpush2.msra.mxu0 0.0
    %1094 = vmatprep.subr.mxu0 0.0
    %1095 = vmatpush2.msra.mxu0 0.0
    %1096 = vmatprep.subr.mxu0 0.0
    %1097 = vmatpush2.msra.mxu0 0.0
    %1098 = vmatprep.subr.mxu0 0.0
    %1099 = vmatpush2.msra.mxu0 0.0
    %1100 = vmatprep.subr.mxu0 0.0
    %1101 = vmatpush2.msra.mxu0 0.0
    %1102 = vmatprep.subr.mxu0 0.0
    %1103 = vmatpush2.msra.mxu0 0.0
    %1104 = vmatprep.subr.mxu0 0.0
    %1105 = vmatpush2.msra.mxu0 0.0
    %1106 = vmatprep.subr.mxu0 0.0
    %1107 = vmatpush2.msra.mxu0 0.0
    %1108 = vmatprep.subr.mxu0 0.0
    %1109 = vmatpush2.msra.mxu0 0.0
    %1110 = vmatprep.subr.mxu0 0.0
    %1111 = vmatpush2.msra.mxu0 0.0
    %1112 = vmatprep.subr.mxu0 0.0
    %1113 = vmatpush2.msra.mxu0 0.0
    %1114 = vmatprep.mubr.f32.mxu0 0.0
    %1115 = vmatmul.mubr.f32.gmra.mxu0 %v1048
    %v1116 = vpop.f32.mrf.mxu0
    %v1117 = vadd.f32 0.0, %v1116
    %v1118 = vpop.f32.mrf.mxu0
    %1119 = vdwg.mxu0
    %1120 = vrot.lane.b32.xlu0 %v186, 64
    %v1121 = vpop.permute.xlu0 %1120
    %v1124 = vsel %vm197, %v887, 0
    %1126 = vmatprep.subr.mxu0 0.0
    %1127 = vmatpush1.msra.mxu0 0.0
    %1128 = vmatprep.subr.mxu0 0.0
    %1129 = vmatpush1.msra.mxu0 0.0
    %1130 = vmatprep.subr.mxu0 0.0
    %1131 = vmatpush1.msra.mxu0 0.0
    %1132 = vmatprep.subr.mxu0 0.0
    %1133 = vmatpush1.msra.mxu0 0.0
    %1134 = vmatprep.subr.mxu0 0.0
    %1135 = vmatpush1.msra.mxu0 0.0
    %1136 = vmatprep.subr.mxu0 0.0
    %1137 = vmatpush1.msra.mxu0 0.0
    %1138 = vmatprep.subr.mxu0 0.0
    %1139 = vmatpush1.msra.mxu0 0.0
    %1140 = vmatprep.subr.mxu0 0.0
    %1141 = vmatpush1.msra.mxu0 0.0
    %1142 = vmatprep.subr.mxu0 0.0
    %1143 = vmatpush1.msra.mxu0 0.0
    %1144 = vmatprep.subr.mxu0 0.0
    %1145 = vmatpush1.msra.mxu0 0.0
    %1146 = vmatprep.subr.mxu0 0.0
    %1147 = vmatpush1.msra.mxu0 0.0
    %1148 = vmatprep.subr.mxu0 0.0
    %1149 = vmatpush1.msra.mxu0 0.0
    %1150 = vmatprep.subr.mxu0 0.0
    %1151 = vmatpush1.msra.mxu0 0.0
    %1152 = vmatprep.subr.mxu0 0.0
    %1153 = vmatpush1.msra.mxu0 0.0
    %1154 = vmatprep.subr.mxu0 0.0
    %1155 = vmatpush1.msra.mxu0 0.0
    %1156 = vmatprep.subr.mxu0 0.0
    %1157 = vmatpush1.msra.mxu0 %v1121
    %1158 = vmatprep.subr.mxu0 0.0
    %1159 = vmatpush2.msra.mxu0 0.0
    %1160 = vmatprep.subr.mxu0 0.0
    %1161 = vmatpush2.msra.mxu0 0.0
    %1162 = vmatprep.subr.mxu0 0.0
    %1163 = vmatpush2.msra.mxu0 0.0
    %1164 = vmatprep.subr.mxu0 0.0
    %1165 = vmatpush2.msra.mxu0 0.0
    %1166 = vmatprep.subr.mxu0 0.0
    %1167 = vmatpush2.msra.mxu0 0.0
    %1168 = vmatprep.subr.mxu0 0.0
    %1169 = vmatpush2.msra.mxu0 0.0
    %1170 = vmatprep.subr.mxu0 0.0
    %1171 = vmatpush2.msra.mxu0 0.0
    %1172 = vmatprep.subr.mxu0 0.0
    %1173 = vmatpush2.msra.mxu0 0.0
    %1174 = vmatprep.subr.mxu0 0.0
    %1175 = vmatpush2.msra.mxu0 0.0
    %1176 = vmatprep.subr.mxu0 0.0
    %1177 = vmatpush2.msra.mxu0 0.0
    %1178 = vmatprep.subr.mxu0 0.0
    %1179 = vmatpush2.msra.mxu0 0.0
    %1180 = vmatprep.subr.mxu0 0.0
    %1181 = vmatpush2.msra.mxu0 0.0
    %1182 = vmatprep.subr.mxu0 0.0
    %1183 = vmatpush2.msra.mxu0 0.0
    %1184 = vmatprep.subr.mxu0 0.0
    %1185 = vmatpush2.msra.mxu0 0.0
    %1186 = vmatprep.subr.mxu0 0.0
    %1187 = vmatpush2.msra.mxu0 0.0
    %1188 = vmatprep.subr.mxu0 0.0
    %1189 = vmatpush2.msra.mxu0 0.0
    %1190 = vmatprep.mubr.f32.mxu0 0.0
    %1191 = vmatmul.mubr.f32.gmra.mxu0 %v1124
    %v1192 = vpop.f32.mrf.mxu0
    %v1193 = vadd.f32 0.0, %v1192
    %v1194 = vpop.f32.mrf.mxu0
    %1195 = vdwg.mxu0
    %1196 = vrot.lane.b32.xlu0 %v188, 64
    %v1197 = vpop.permute.xlu0 %1196
    %v1200 = vsel %vm197, %v888, 0
    %1202 = vmatprep.subr.mxu0 0.0
    %1203 = vmatpush1.msra.mxu0 0.0
    %1204 = vmatprep.subr.mxu0 0.0
    %1205 = vmatpush1.msra.mxu0 0.0
    %1206 = vmatprep.subr.mxu0 0.0
    %1207 = vmatpush1.msra.mxu0 0.0
    %1208 = vmatprep.subr.mxu0 0.0
    %1209 = vmatpush1.msra.mxu0 0.0
    %1210 = vmatprep.subr.mxu0 0.0
    %1211 = vmatpush1.msra.mxu0 0.0
    %1212 = vmatprep.subr.mxu0 0.0
    %1213 = vmatpush1.msra.mxu0 0.0
    %1214 = vmatprep.subr.mxu0 0.0
    %1215 = vmatpush1.msra.mxu0 0.0
    %1216 = vmatprep.subr.mxu0 0.0
    %1217 = vmatpush1.msra.mxu0 0.0
    %1218 = vmatprep.subr.mxu0 0.0
    %1219 = vmatpush1.msra.mxu0 0.0
    %1220 = vmatprep.subr.mxu0 0.0
    %1221 = vmatpush1.msra.mxu0 0.0
    %1222 = vmatprep.subr.mxu0 0.0
    %1223 = vmatpush1.msra.mxu0 0.0
    %1224 = vmatprep.subr.mxu0 0.0
    %1225 = vmatpush1.msra.mxu0 0.0
    %1226 = vmatprep.subr.mxu0 0.0
    %1227 = vmatpush1.msra.mxu0 0.0
    %1228 = vmatprep.subr.mxu0 0.0
    %1229 = vmatpush1.msra.mxu0 0.0
    %1230 = vmatprep.subr.mxu0 0.0
    %1231 = vmatpush1.msra.mxu0 0.0
    %1232 = vmatprep.subr.mxu0 0.0
    %1233 = vmatpush1.msra.mxu0 %v1197
    %1234 = vmatprep.subr.mxu0 0.0
    %1235 = vmatpush2.msra.mxu0 0.0
    %1236 = vmatprep.subr.mxu0 0.0
    %1237 = vmatpush2.msra.mxu0 0.0
    %1238 = vmatprep.subr.mxu0 0.0
    %1239 = vmatpush2.msra.mxu0 0.0
    %1240 = vmatprep.subr.mxu0 0.0
    %1241 = vmatpush2.msra.mxu0 0.0
    %1242 = vmatprep.subr.mxu0 0.0
    %1243 = vmatpush2.msra.mxu0 0.0
    %1244 = vmatprep.subr.mxu0 0.0
    %1245 = vmatpush2.msra.mxu0 0.0
    %1246 = vmatprep.subr.mxu0 0.0
    %1247 = vmatpush2.msra.mxu0 0.0
    %1248 = vmatprep.subr.mxu0 0.0
    %1249 = vmatpush2.msra.mxu0 0.0
    %1250 = vmatprep.subr.mxu0 0.0
    %1251 = vmatpush2.msra.mxu0 0.0
    %1252 = vmatprep.subr.mxu0 0.0
    %1253 = vmatpush2.msra.mxu0 0.0
    %1254 = vmatprep.subr.mxu0 0.0
    %1255 = vmatpush2.msra.mxu0 0.0
    %1256 = vmatprep.subr.mxu0 0.0
    %1257 = vmatpush2.msra.mxu0 0.0
    %1258 = vmatprep.subr.mxu0 0.0
    %1259 = vmatpush2.msra.mxu0 0.0
    %1260 = vmatprep.subr.mxu0 0.0
    %1261 = vmatpush2.msra.mxu0 0.0
    %1262 = vmatprep.subr.mxu0 0.0
    %1263 = vmatpush2.msra.mxu0 0.0
    %1264 = vmatprep.subr.mxu0 0.0
    %1265 = vmatpush2.msra.mxu0 0.0
    %1266 = vmatprep.mubr.f32.mxu0 0.0
    %1267 = vmatmul.mubr.f32.gmra.mxu0 %v1200
    %v1268 = vpop.f32.mrf.mxu0
    %v1269 = vadd.f32 0.0, %v1268
    %v1270 = vpop.f32.mrf.mxu0
    %1271 = vdwg.mxu0
    %1272 = vrot.lane.b32.xlu0 %v190, 64
    %v1273 = vpop.permute.xlu0 %1272
    %v1276 = vsel %vm197, %v889, 0
    %1278 = vmatprep.subr.mxu0 0.0
    %1279 = vmatpush1.msra.mxu0 0.0
    %1280 = vmatprep.subr.mxu0 0.0
    %1281 = vmatpush1.msra.mxu0 0.0
    %1282 = vmatprep.subr.mxu0 0.0
    %1283 = vmatpush1.msra.mxu0 0.0
    %1284 = vmatprep.subr.mxu0 0.0
    %1285 = vmatpush1.msra.mxu0 0.0
    %1286 = vmatprep.subr.mxu0 0.0
    %1287 = vmatpush1.msra.mxu0 0.0
    %1288 = vmatprep.subr.mxu0 0.0
    %1289 = vmatpush1.msra.mxu0 0.0
    %1290 = vmatprep.subr.mxu0 0.0
    %1291 = vmatpush1.msra.mxu0 0.0
    %1292 = vmatprep.subr.mxu0 0.0
    %1293 = vmatpush1.msra.mxu0 0.0
    %1294 = vmatprep.subr.mxu0 0.0
    %1295 = vmatpush1.msra.mxu0 0.0
    %1296 = vmatprep.subr.mxu0 0.0
    %1297 = vmatpush1.msra.mxu0 0.0
    %1298 = vmatprep.subr.mxu0 0.0
    %1299 = vmatpush1.msra.mxu0 0.0
    %1300 = vmatprep.subr.mxu0 0.0
    %1301 = vmatpush1.msra.mxu0 0.0
    %1302 = vmatprep.subr.mxu0 0.0
    %1303 = vmatpush1.msra.mxu0 0.0
    %1304 = vmatprep.subr.mxu0 0.0
    %1305 = vmatpush1.msra.mxu0 0.0
    %1306 = vmatprep.subr.mxu0 0.0
    %1307 = vmatpush1.msra.mxu0 0.0
    %1308 = vmatprep.subr.mxu0 0.0
    %1309 = vmatpush1.msra.mxu0 %v1273
    %1310 = vmatprep.subr.mxu0 0.0
    %1311 = vmatpush2.msra.mxu0 0.0
    %1312 = vmatprep.subr.mxu0 0.0
    %1313 = vmatpush2.msra.mxu0 0.0
    %1314 = vmatprep.subr.mxu0 0.0
    %1315 = vmatpush2.msra.mxu0 0.0
    %1316 = vmatprep.subr.mxu0 0.0
    %1317 = vmatpush2.msra.mxu0 0.0
    %1318 = vmatprep.subr.mxu0 0.0
    %1319 = vmatpush2.msra.mxu0 0.0
    %1320 = vmatprep.subr.mxu0 0.0
    %1321 = vmatpush2.msra.mxu0 0.0
    %1322 = vmatprep.subr.mxu0 0.0
    %1323 = vmatpush2.msra.mxu0 0.0
    %1324 = vmatprep.subr.mxu0 0.0
    %1325 = vmatpush2.msra.mxu0 0.0
    %1326 = vmatprep.subr.mxu0 0.0
    %1327 = vmatpush2.msra.mxu0 0.0
    %1328 = vmatprep.subr.mxu0 0.0
    %1329 = vmatpush2.msra.mxu0 0.0
    %1330 = vmatprep.subr.mxu0 0.0
    %1331 = vmatpush2.msra.mxu0 0.0
    %1332 = vmatprep.subr.mxu0 0.0
    %1333 = vmatpush2.msra.mxu0 0.0
    %1334 = vmatprep.subr.mxu0 0.0
    %1335 = vmatpush2.msra.mxu0 0.0
    %1336 = vmatprep.subr.mxu0 0.0
    %1337 = vmatpush2.msra.mxu0 0.0
    %1338 = vmatprep.subr.mxu0 0.0
    %1339 = vmatpush2.msra.mxu0 0.0
    %1340 = vmatprep.subr.mxu0 0.0
    %1341 = vmatpush2.msra.mxu0 0.0
    %1342 = vmatprep.mubr.f32.mxu0 0.0
    %1343 = vmatmul.mubr.f32.gmra.mxu0 %v1276
    %v1344 = vpop.f32.mrf.mxu0
    %v1345 = vadd.f32 0.0, %v1344
    %v1346 = vpop.f32.mrf.mxu0
    %1347 = vdwg.mxu0
    %1348 = vrot.lane.b32.xlu0 %v192, 64
    %v1349 = vpop.permute.xlu0 %1348
    %v1352 = vsel %vm197, %v890, 0
    %1354 = vmatprep.subr.mxu0 0.0
    %1355 = vmatpush1.msra.mxu0 0.0
    %1356 = vmatprep.subr.mxu0 0.0
    %1357 = vmatpush1.msra.mxu0 0.0
    %1358 = vmatprep.subr.mxu0 0.0
    %1359 = vmatpush1.msra.mxu0 0.0
    %1360 = vmatprep.subr.mxu0 0.0
    %1361 = vmatpush1.msra.mxu0 0.0
    %1362 = vmatprep.subr.mxu0 0.0
    %1363 = vmatpush1.msra.mxu0 0.0
    %1364 = vmatprep.subr.mxu0 0.0
    %1365 = vmatpush1.msra.mxu0 0.0
    %1366 = vmatprep.subr.mxu0 0.0
    %1367 = vmatpush1.msra.mxu0 0.0
    %1368 = vmatprep.subr.mxu0 0.0
    %1369 = vmatpush1.msra.mxu0 0.0
    %1370 = vmatprep.subr.mxu0 0.0
    %1371 = vmatpush1.msra.mxu0 0.0
    %1372 = vmatprep.subr.mxu0 0.0
    %1373 = vmatpush1.msra.mxu0 0.0
    %1374 = vmatprep.subr.mxu0 0.0
    %1375 = vmatpush1.msra.mxu0 0.0
    %1376 = vmatprep.subr.mxu0 0.0
    %1377 = vmatpush1.msra.mxu0 0.0
    %1378 = vmatprep.subr.mxu0 0.0
    %1379 = vmatpush1.msra.mxu0 0.0
    %1380 = vmatprep.subr.mxu0 0.0
    %1381 = vmatpush1.msra.mxu0 0.0
    %1382 = vmatprep.subr.mxu0 0.0
    %1383 = vmatpush1.msra.mxu0 0.0
    %1384 = vmatprep.subr.mxu0 0.0
    %1385 = vmatpush1.msra.mxu0 %v1349
    %1386 = vmatprep.subr.mxu0 0.0
    %1387 = vmatpush2.msra.mxu0 0.0
    %1388 = vmatprep.subr.mxu0 0.0
    %1389 = vmatpush2.msra.mxu0 0.0
    %1390 = vmatprep.subr.mxu0 0.0
    %1391 = vmatpush2.msra.mxu0 0.0
    %1392 = vmatprep.subr.mxu0 0.0
    %1393 = vmatpush2.msra.mxu0 0.0
    %1394 = vmatprep.subr.mxu0 0.0
    %1395 = vmatpush2.msra.mxu0 0.0
    %1396 = vmatprep.subr.mxu0 0.0
    %1397 = vmatpush2.msra.mxu0 0.0
    %1398 = vmatprep.subr.mxu0 0.0
    %1399 = vmatpush2.msra.mxu0 0.0
    %1400 = vmatprep.subr.mxu0 0.0
    %1401 = vmatpush2.msra.mxu0 0.0
    %1402 = vmatprep.subr.mxu0 0.0
    %1403 = vmatpush2.msra.mxu0 0.0
    %1404 = vmatprep.subr.mxu0 0.0
    %1405 = vmatpush2.msra.mxu0 0.0
    %1406 = vmatprep.subr.mxu0 0.0
    %1407 = vmatpush2.msra.mxu0 0.0
    %1408 = vmatprep.subr.mxu0 0.0
    %1409 = vmatpush2.msra.mxu0 0.0
    %1410 = vmatprep.subr.mxu0 0.0
    %1411 = vmatpush2.msra.mxu0 0.0
    %1412 = vmatprep.subr.mxu0 0.0
    %1413 = vmatpush2.msra.mxu0 0.0
    %1414 = vmatprep.subr.mxu0 0.0
    %1415 = vmatpush2.msra.mxu0 0.0
    %1416 = vmatprep.subr.mxu0 0.0
    %1417 = vmatpush2.msra.mxu0 0.0
    %1418 = vmatprep.mubr.f32.mxu0 0.0
    %1419 = vmatmul.mubr.f32.gmra.mxu0 %v1352
    %v1420 = vpop.f32.mrf.mxu0
    %v1421 = vadd.f32 0.0, %v1420
    %v1422 = vpop.f32.mrf.mxu0
    %1423 = vdwg.mxu0
    %1424 = vrot.lane.b32.xlu0 %v194, 64
    %v1425 = vpop.permute.xlu0 %1424
    %v1428 = vsel %vm197, %v891, 0
    %1430 = vmatprep.subr.mxu0 0.0
    %1431 = vmatpush1.msra.mxu0 0.0
    %1432 = vmatprep.subr.mxu0 0.0
    %1433 = vmatpush1.msra.mxu0 0.0
    %1434 = vmatprep.subr.mxu0 0.0
    %1435 = vmatpush1.msra.mxu0 0.0
    %1436 = vmatprep.subr.mxu0 0.0
    %1437 = vmatpush1.msra.mxu0 0.0
    %1438 = vmatprep.subr.mxu0 0.0
    %1439 = vmatpush1.msra.mxu0 0.0
    %1440 = vmatprep.subr.mxu0 0.0
    %1441 = vmatpush1.msra.mxu0 0.0
    %1442 = vmatprep.subr.mxu0 0.0
    %1443 = vmatpush1.msra.mxu0 0.0
    %1444 = vmatprep.subr.mxu0 0.0
    %1445 = vmatpush1.msra.mxu0 0.0
    %1446 = vmatprep.subr.mxu0 0.0
    %1447 = vmatpush1.msra.mxu0 0.0
    %1448 = vmatprep.subr.mxu0 0.0
    %1449 = vmatpush1.msra.mxu0 0.0
    %1450 = vmatprep.subr.mxu0 0.0
    %1451 = vmatpush1.msra.mxu0 0.0
    %1452 = vmatprep.subr.mxu0 0.0
    %1453 = vmatpush1.msra.mxu0 0.0
    %1454 = vmatprep.subr.mxu0 0.0
    %1455 = vmatpush1.msra.mxu0 0.0
    %1456 = vmatprep.subr.mxu0 0.0
    %1457 = vmatpush1.msra.mxu0 0.0
    %1458 = vmatprep.subr.mxu0 0.0
    %1459 = vmatpush1.msra.mxu0 0.0
    %1460 = vmatprep.subr.mxu0 0.0
    %1461 = vmatpush1.msra.mxu0 %v1425
    %1462 = vmatprep.subr.mxu0 0.0
    %1463 = vmatpush2.msra.mxu0 0.0
    %1464 = vmatprep.subr.mxu0 0.0
    %1465 = vmatpush2.msra.mxu0 0.0
    %1466 = vmatprep.subr.mxu0 0.0
    %1467 = vmatpush2.msra.mxu0 0.0
    %1468 = vmatprep.subr.mxu0 0.0
    %1469 = vmatpush2.msra.mxu0 0.0
    %1470 = vmatprep.subr.mxu0 0.0
    %1471 = vmatpush2.msra.mxu0 0.0
    %1472 = vmatprep.subr.mxu0 0.0
    %1473 = vmatpush2.msra.mxu0 0.0
    %1474 = vmatprep.subr.mxu0 0.0
    %1475 = vmatpush2.msra.mxu0 0.0
    %1476 = vmatprep.subr.mxu0 0.0
    %1477 = vmatpush2.msra.mxu0 0.0
    %1478 = vmatprep.subr.mxu0 0.0
    %1479 = vmatpush2.msra.mxu0 0.0
    %1480 = vmatprep.subr.mxu0 0.0
    %1481 = vmatpush2.msra.mxu0 0.0
    %1482 = vmatprep.subr.mxu0 0.0
    %1483 = vmatpush2.msra.mxu0 0.0
    %1484 = vmatprep.subr.mxu0 0.0
    %1485 = vmatpush2.msra.mxu0 0.0
    %1486 = vmatprep.subr.mxu0 0.0
    %1487 = vmatpush2.msra.mxu0 0.0
    %1488 = vmatprep.subr.mxu0 0.0
    %1489 = vmatpush2.msra.mxu0 0.0
    %1490 = vmatprep.subr.mxu0 0.0
    %1491 = vmatpush2.msra.mxu0 0.0
    %1492 = vmatprep.subr.mxu0 0.0
    %1493 = vmatpush2.msra.mxu0 0.0
    %1494 = vmatprep.mubr.f32.mxu0 0.0
    %1495 = vmatmul.mubr.f32.gmra.mxu0 %v1428
    %v1496 = vpop.f32.mrf.mxu0
    %v1497 = vadd.f32 0.0, %v1496
    %v1498 = vpop.f32.mrf.mxu0
    %1499 = vdwg.mxu0
    %1502 = vrot.lane.b32.xlu0 %v1117, 8
    %v1503 = vpop.permute.xlu0 %1502
    %1504 = vrot.lane.b32.xlu0 %v1193, 8
    %v1505 = vpop.permute.xlu0 %1504
    %1510 = vrot.lane.b32.xlu0 %v1269, 16
    %v1511 = vpop.permute.xlu0 %1510
    %1512 = vrot.lane.b32.xlu0 %v1345, 16
    %v1513 = vpop.permute.xlu0 %1512
    %1518 = vrot.lane.b32.xlu0 %v1421, 24
    %v1519 = vpop.permute.xlu0 %1518
    %1520 = vrot.lane.b32.xlu0 %v1497, 24
    %v1521 = vpop.permute.xlu0 %1520
    %v1524 = vsel %vm197, %v965, %v1503
    %v1525 = vsel %vm197, %v1041, %v1505
    %vm1526 = vcmask 130048
    %v1527 = vsel %vm1526, %v1524, %v1511
    %v1528 = vsel %vm1526, %v1525, %v1513
    %vm1529 = vcmask 195584
    %v1530 = vsel %vm1529, %v1527, %v1519
    %v1531 = vsel %vm1529, %v1528, %v1521
    %v1532 = vlaneseq
    %v1533 = vshrl.u32 %v1532, 7
    %v1534 = vsub.s32 0, %v1533
    %v1535 = vrot.slane %v89, %v1534
    %1540 = vrot.lane.b32.xlu0 %v75, 32
    %v1541 = vpop.permute.xlu0 %1540
    %1542 = vrot.lane.b32.xlu0 %v76, 32
    %v1543 = vpop.permute.xlu0 %1542
    %1544 = vrot.lane.b32.xlu0 %v77, 32
    %v1545 = vpop.permute.xlu0 %1544
    %1546 = vrot.lane.b32.xlu0 %v78, 32
    %v1547 = vpop.permute.xlu0 %1546
    %v1553 = vsel %vm99, %v1530, 0
    %v1556 = vsel %vm99, %v1531, 0
    %1558 = vmatprep.subr.mxu0 0.0
    %1559 = vmatpush1.msra.mxu0 0.0
    %1560 = vmatprep.subr.mxu0 0.0
    %1561 = vmatpush1.msra.mxu0 0.0
    %1562 = vmatprep.subr.mxu0 0.0
    %1563 = vmatpush1.msra.mxu0 0.0
    %1564 = vmatprep.subr.mxu0 0.0
    %1565 = vmatpush1.msra.mxu0 0.0
    %1566 = vmatprep.subr.mxu0 0.0
    %1567 = vmatpush1.msra.mxu0 0.0
    %1568 = vmatprep.subr.mxu0 0.0
    %1569 = vmatpush1.msra.mxu0 0.0
    %1570 = vmatprep.subr.mxu0 0.0
    %1571 = vmatpush1.msra.mxu0 0.0
    %1572 = vmatprep.subr.mxu0 0.0
    %1573 = vmatpush1.msra.mxu0 0.0
    %1574 = vmatprep.subr.mxu0 0.0
    %1575 = vmatpush1.msra.mxu0 0.0
    %1576 = vmatprep.subr.mxu0 0.0
    %1577 = vmatpush1.msra.mxu0 0.0
    %1578 = vmatprep.subr.mxu0 0.0
    %1579 = vmatpush1.msra.mxu0 0.0
    %1580 = vmatprep.subr.mxu0 0.0
    %1581 = vmatpush1.msra.mxu0 0.0
    %1582 = vmatprep.subr.mxu0 0.0
    %1583 = vmatpush1.msra.mxu0 %v1547
    %1584 = vmatprep.subr.mxu0 0.0
    %1585 = vmatpush1.msra.mxu0 %v1545
    %1586 = vmatprep.subr.mxu0 0.0
    %1587 = vmatpush1.msra.mxu0 %v1543
    %1588 = vmatprep.subr.mxu0 0.0
    %1589 = vmatpush1.msra.mxu0 %v1541
    %1590 = vmatprep.subr.mxu0 0.0
    %1591 = vmatpush2.msra.mxu0 0.0
    %1592 = vmatprep.subr.mxu0 0.0
    %1593 = vmatpush2.msra.mxu0 0.0
    %1594 = vmatprep.subr.mxu0 0.0
    %1595 = vmatpush2.msra.mxu0 0.0
    %1596 = vmatprep.subr.mxu0 0.0
    %1597 = vmatpush2.msra.mxu0 0.0
    %1598 = vmatprep.subr.mxu0 0.0
    %1599 = vmatpush2.msra.mxu0 0.0
    %1600 = vmatprep.subr.mxu0 0.0
    %1601 = vmatpush2.msra.mxu0 0.0
    %1602 = vmatprep.subr.mxu0 0.0
    %1603 = vmatpush2.msra.mxu0 0.0
    %1604 = vmatprep.subr.mxu0 0.0
    %1605 = vmatpush2.msra.mxu0 0.0
    %1606 = vmatprep.subr.mxu0 0.0
    %1607 = vmatpush2.msra.mxu0 0.0
    %1608 = vmatprep.subr.mxu0 0.0
    %1609 = vmatpush2.msra.mxu0 0.0
    %1610 = vmatprep.subr.mxu0 0.0
    %1611 = vmatpush2.msra.mxu0 0.0
    %1612 = vmatprep.subr.mxu0 0.0
    %1613 = vmatpush2.msra.mxu0 0.0
    %1614 = vmatprep.subr.mxu0 0.0
    %1615 = vmatpush2.msra.mxu0 0.0
    %1616 = vmatprep.subr.mxu0 0.0
    %1617 = vmatpush2.msra.mxu0 0.0
    %1618 = vmatprep.subr.mxu0 0.0
    %1619 = vmatpush2.msra.mxu0 0.0
    %1620 = vmatprep.subr.mxu0 0.0
    %1621 = vmatpush2.msra.mxu0 0.0
    %1622 = vmatprep.mubr.f32.mxu0 0.0
    %1623 = vmatmul.mubr.f32.gmra.mxu0 %v1553
    %v1624 = vpop.f32.mrf.mxu0
    %v1625 = vadd.f32 %v1535, %v1624
    %v1626 = vpop.f32.mrf.mxu0
    %1627 = vmatprep.mubr.f32.mxu0 0.0
    %1628 = vmatmul.mubr.f32.gmra.mxu0 %v1556
    %v1629 = vpop.f32.mrf.mxu0
    %v1630 = vadd.f32 %v1535, %v1629
    %v1631 = vpop.f32.mrf.mxu0
    %1632 = vdwg.mxu0
    %v1633 = vadd.f32 %v73, %v1625
    %v1634 = vadd.f32 %v74, %v1630
    %v1635 = vsel %vm99, %v1633, 0.0
    %1636 = vadd.xlane.f32.xlu0 %v1635
    %v1637 = vpop.xlane.xlu0 %1636
    %v1638 = vsel %vm99, %v1634, 0.0
    %1639 = vadd.xlane.f32.xlu0 %v1638
    %v1640 = vpop.xlane.xlu0 %1639
    %v1641 = vrcp.pop 32.0
    %v1642 = vmul.f32 %v1637, %v1641
    %v1643 = vmul.f32 %v1640, %v1641
    %v1644 = vmul.f32 %v1633, %v1633
    %v1645 = vmul.f32 %v1634, %v1634
    %v1646 = vsel %vm99, %v1644, 0.0
    %1647 = vadd.xlane.f32.xlu0 %v1646
    %v1648 = vpop.xlane.xlu0 %1647
    %v1649 = vsel %vm99, %v1645, 0.0
    %1650 = vadd.xlane.f32.xlu0 %v1649
    %v1651 = vpop.xlane.xlu0 %1650
    %v1652 = vmul.f32 %v1648, %v1641
    %v1653 = vmul.f32 %v1651, %v1641
    %v1654 = vmul.f32 %v1642, %v1642
    %v1655 = vmul.f32 %v1643, %v1643
    %v1656 = vsub.f32 %v1652, %v1654
    %v1657 = vsub.f32 %v1653, %v1655
    %v1658 = vsub.f32 %v1633, %v1642
    %v1659 = vsub.f32 %v1634, %v1643
    %v1660 = vadd.f32 %v1656, 1e-05
    %v1661 = vadd.f32 %v1657, 1e-05
    %v1662 = vrsqrt.pop %v1660
    %v1663 = vrsqrt.pop %v1661
    %v1664 = vmul.f32 %v1658, %v1662
    %v1665 = vmul.f32 %v1659, %v1663
    %v1666 = vlaneseq
    %v1667 = vshrl.u32 %v1666, 7
    %v1668 = vsub.s32 0, %v1667
    %v1669 = vrot.slane %v91, %v1668
    %v1670 = vmul.f32 %v1664, %v1669
    %v1671 = vmul.f32 %v1665, %v1669
    %v1672 = vlaneseq
    %v1673 = vshrl.u32 %v1672, 7
    %v1674 = vsub.s32 0, %v1673
    %v1675 = vrot.slane %v92, %v1674
    %v1676 = vadd.f32 %v1670, %v1675
    %v1677 = vadd.f32 %v1671, %v1675
    %v1678 = vlaneseq
    %v1679 = vshrl.u32 %v1678, 7
    %v1680 = vsub.s32 0, %v1679
    %v1681 = vrot.slane %v88, %v1680
    %v1683 = vsel %vm99, %v1676, 0
    %v1686 = vsel %vm99, %v1677, 0
    %1688 = vmatprep.subr.mxu0 0.0
    %1689 = vmatpush1.msra.mxu0 0.0
    %1690 = vmatprep.subr.mxu0 0.0
    %1691 = vmatpush1.msra.mxu0 0.0
    %1692 = vmatprep.subr.mxu0 0.0
    %1693 = vmatpush1.msra.mxu0 0.0
    %1694 = vmatprep.subr.mxu0 0.0
    %1695 = vmatpush1.msra.mxu0 0.0
    %1696 = vmatprep.subr.mxu0 0.0
    %1697 = vmatpush1.msra.mxu0 0.0
    %1698 = vmatprep.subr.mxu0 0.0
    %1699 = vmatpush1.msra.mxu0 0.0
    %1700 = vmatprep.subr.mxu0 0.0
    %1701 = vmatpush1.msra.mxu0 0.0
    %1702 = vmatprep.subr.mxu0 0.0
    %1703 = vmatpush1.msra.mxu0 0.0
    %1704 = vmatprep.subr.mxu0 0.0
    %1705 = vmatpush1.msra.mxu0 0.0
    %1706 = vmatprep.subr.mxu0 0.0
    %1707 = vmatpush1.msra.mxu0 0.0
    %1708 = vmatprep.subr.mxu0 0.0
    %1709 = vmatpush1.msra.mxu0 0.0
    %1710 = vmatprep.subr.mxu0 0.0
    %1711 = vmatpush1.msra.mxu0 0.0
    %1712 = vmatprep.subr.mxu0 0.0
    %1713 = vmatpush1.msra.mxu0 %v82
    %1714 = vmatprep.subr.mxu0 0.0
    %1715 = vmatpush1.msra.mxu0 %v81
    %1716 = vmatprep.subr.mxu0 0.0
    %1717 = vmatpush1.msra.mxu0 %v80
    %1718 = vmatprep.subr.mxu0 0.0
    %1719 = vmatpush1.msra.mxu0 %v79
    %1720 = vmatprep.subr.mxu0 0.0
    %1721 = vmatpush2.msra.mxu0 0.0
    %1722 = vmatprep.subr.mxu0 0.0
    %1723 = vmatpush2.msra.mxu0 0.0
    %1724 = vmatprep.subr.mxu0 0.0
    %1725 = vmatpush2.msra.mxu0 0.0
    %1726 = vmatprep.subr.mxu0 0.0
    %1727 = vmatpush2.msra.mxu0 0.0
    %1728 = vmatprep.subr.mxu0 0.0
    %1729 = vmatpush2.msra.mxu0 0.0
    %1730 = vmatprep.subr.mxu0 0.0
    %1731 = vmatpush2.msra.mxu0 0.0
    %1732 = vmatprep.subr.mxu0 0.0
    %1733 = vmatpush2.msra.mxu0 0.0
    %1734 = vmatprep.subr.mxu0 0.0
    %1735 = vmatpush2.msra.mxu0 0.0
    %1736 = vmatprep.subr.mxu0 0.0
    %1737 = vmatpush2.msra.mxu0 0.0
    %1738 = vmatprep.subr.mxu0 0.0
    %1739 = vmatpush2.msra.mxu0 0.0
    %1740 = vmatprep.subr.mxu0 0.0
    %1741 = vmatpush2.msra.mxu0 0.0
    %1742 = vmatprep.subr.mxu0 0.0
    %1743 = vmatpush2.msra.mxu0 0.0
    %1744 = vmatprep.subr.mxu0 0.0
    %1745 = vmatpush2.msra.mxu0 0.0
    %1746 = vmatprep.subr.mxu0 0.0
    %1747 = vmatpush2.msra.mxu0 0.0
    %1748 = vmatprep.subr.mxu0 0.0
    %1749 = vmatpush2.msra.mxu0 0.0
    %1750 = vmatprep.subr.mxu0 0.0
    %1751 = vmatpush2.msra.mxu0 0.0
    %1752 = vmatprep.mubr.f32.mxu0 0.0
    %1753 = vmatmul.mubr.f32.gmra.mxu0 %v1683
    %v1754 = vpop.f32.mrf.mxu0
    %v1755 = vadd.f32 %v1681, %v1754
    %v1756 = vpop.f32.mrf.mxu0
    %1757 = vmatprep.mubr.f32.mxu0 0.0
    %1758 = vmatmul.mubr.f32.gmra.mxu0 %v1686
    %v1759 = vpop.f32.mrf.mxu0
    %v1760 = vadd.f32 %v1681, %v1759
    %v1761 = vpop.f32.mrf.mxu0
    %1762 = vdwg.mxu0
    %v1763 = vmax.f32 %v1755, 0.0
    %v1764 = vmax.f32 %v1760, 0.0
    %v1765 = vlaneseq
    %v1766 = vshrl.u32 %v1765, 7
    %v1767 = vsub.s32 0, %v1766
    %v1768 = vrot.slane %v90, %v1767
    %1777 = vrot.lane.b32.xlu0 %v79, 64
    %v1778 = vpop.permute.xlu0 %1777
    %1779 = vrot.lane.b32.xlu0 %v80, 64
    %v1780 = vpop.permute.xlu0 %1779
    %1781 = vrot.lane.b32.xlu0 %v81, 64
    %v1782 = vpop.permute.xlu0 %1781
    %1783 = vrot.lane.b32.xlu0 %v82, 64
    %v1784 = vpop.permute.xlu0 %1783
    %1785 = vrot.lane.b32.xlu0 %v83, 64
    %v1786 = vpop.permute.xlu0 %1785
    %1787 = vrot.lane.b32.xlu0 %v84, 64
    %v1788 = vpop.permute.xlu0 %1787
    %1789 = vrot.lane.b32.xlu0 %v85, 64
    %v1790 = vpop.permute.xlu0 %1789
    %1791 = vrot.lane.b32.xlu0 %v86, 64
    %v1792 = vpop.permute.xlu0 %1791
    %vm1801 = vcmask 523264
    %v1803 = vsel %vm1801, %v1763, 0
    %v1806 = vsel %vm1801, %v1764, 0
    %1808 = vmatprep.subr.mxu0 0.0
    %1809 = vmatpush1.msra.mxu0 0.0
    %1810 = vmatprep.subr.mxu0 0.0
    %1811 = vmatpush1.msra.mxu0 0.0
    %1812 = vmatprep.subr.mxu0 0.0
    %1813 = vmatpush1.msra.mxu0 0.0
    %1814 = vmatprep.subr.mxu0 0.0
    %1815 = vmatpush1.msra.mxu0 0.0
    %1816 = vmatprep.subr.mxu0 0.0
    %1817 = vmatpush1.msra.mxu0 0.0
    %1818 = vmatprep.subr.mxu0 0.0
    %1819 = vmatpush1.msra.mxu0 0.0
    %1820 = vmatprep.subr.mxu0 0.0
    %1821 = vmatpush1.msra.mxu0 0.0
    %1822 = vmatprep.subr.mxu0 0.0
    %1823 = vmatpush1.msra.mxu0 0.0
    %1824 = vmatprep.subr.mxu0 0.0
    %1825 = vmatpush1.msra.mxu0 %v1792
    %1826 = vmatprep.subr.mxu0 0.0
    %1827 = vmatpush1.msra.mxu0 %v1790
    %1828 = vmatprep.subr.mxu0 0.0
    %1829 = vmatpush1.msra.mxu0 %v1788
    %1830 = vmatprep.subr.mxu0 0.0
    %1831 = vmatpush1.msra.mxu0 %v1786
    %1832 = vmatprep.subr.mxu0 0.0
    %1833 = vmatpush1.msra.mxu0 %v1784
    %1834 = vmatprep.subr.mxu0 0.0
    %1835 = vmatpush1.msra.mxu0 %v1782
    %1836 = vmatprep.subr.mxu0 0.0
    %1837 = vmatpush1.msra.mxu0 %v1780
    %1838 = vmatprep.subr.mxu0 0.0
    %1839 = vmatpush1.msra.mxu0 %v1778
    %1840 = vmatprep.subr.mxu0 0.0
    %1841 = vmatpush2.msra.mxu0 0.0
    %1842 = vmatprep.subr.mxu0 0.0
    %1843 = vmatpush2.msra.mxu0 0.0
    %1844 = vmatprep.subr.mxu0 0.0
    %1845 = vmatpush2.msra.mxu0 0.0
    %1846 = vmatprep.subr.mxu0 0.0
    %1847 = vmatpush2.msra.mxu0 0.0
    %1848 = vmatprep.subr.mxu0 0.0
    %1849 = vmatpush2.msra.mxu0 0.0
    %1850 = vmatprep.subr.mxu0 0.0
    %1851 = vmatpush2.msra.mxu0 0.0
    %1852 = vmatprep.subr.mxu0 0.0
    %1853 = vmatpush2.msra.mxu0 0.0
    %1854 = vmatprep.subr.mxu0 0.0
    %1855 = vmatpush2.msra.mxu0 0.0
    %1856 = vmatprep.subr.mxu0 0.0
    %1857 = vmatpush2.msra.mxu0 0.0
    %1858 = vmatprep.subr.mxu0 0.0
    %1859 = vmatpush2.msra.mxu0 0.0
    %1860 = vmatprep.subr.mxu0 0.0
    %1861 = vmatpush2.msra.mxu0 0.0
    %1862 = vmatprep.subr.mxu0 0.0
    %1863 = vmatpush2.msra.mxu0 0.0
    %1864 = vmatprep.subr.mxu0 0.0
    %1865 = vmatpush2.msra.mxu0 0.0
    %1866 = vmatprep.subr.mxu0 0.0
    %1867 = vmatpush2.msra.mxu0 0.0
    %1868 = vmatprep.subr.mxu0 0.0
    %1869 = vmatpush2.msra.mxu0 0.0
    %1870 = vmatprep.subr.mxu0 0.0
    %1871 = vmatpush2.msra.mxu0 0.0
    %1872 = vmatprep.mubr.f32.mxu0 0.0
    %1873 = vmatmul.mubr.f32.gmra.mxu0 %v1803
    %v1874 = vpop.f32.mrf.mxu0
    %v1875 = vadd.f32 %v1768, %v1874
    %v1876 = vpop.f32.mrf.mxu0
    %1877 = vmatprep.mubr.f32.mxu0 0.0
    %1878 = vmatmul.mubr.f32.gmra.mxu0 %v1806
    %v1879 = vpop.f32.mrf.mxu0
    %v1880 = vadd.f32 %v1768, %v1879
    %v1881 = vpop.f32.mrf.mxu0
    %1882 = vdwg.mxu0
    %v1883 = vadd.f32 %v1676, %v1875
    %v1884 = vadd.f32 %v1677, %v1880
    %v1885 = vsel %vm99, %v1883, 0.0
    %1886 = vadd.xlane.f32.xlu0 %v1885
    %v1887 = vpop.xlane.xlu0 %1886
    %v1888 = vsel %vm99, %v1884, 0.0
    %1889 = vadd.xlane.f32.xlu0 %v1888
    %v1890 = vpop.xlane.xlu0 %1889
    %v1891 = vmul.f32 %v1887, %v1641
    %v1892 = vmul.f32 %v1890, %v1641
    %v1893 = vmul.f32 %v1883, %v1883
    %v1894 = vmul.f32 %v1884, %v1884
    %v1895 = vsel %vm99, %v1893, 0.0
    %1896 = vadd.xlane.f32.xlu0 %v1895
    %v1897 = vpop.xlane.xlu0 %1896
    %v1898 = vsel %vm99, %v1894, 0.0
    %1899 = vadd.xlane.f32.xlu0 %v1898
    %v1900 = vpop.xlane.xlu0 %1899
    %v1901 = vmul.f32 %v1897, %v1641
    %v1902 = vmul.f32 %v1900, %v1641
    %v1903 = vmul.f32 %v1891, %v1891
    %v1904 = vmul.f32 %v1892, %v1892
    %v1905 = vsub.f32 %v1901, %v1903
    %v1906 = vsub.f32 %v1902, %v1904
    %v1907 = vsub.f32 %v1883, %v1891
    %v1908 = vsub.f32 %v1884, %v1892
    %v1909 = vadd.f32 %v1905, 1e-05
    %v1910 = vadd.f32 %v1906, 1e-05
    %v1911 = vrsqrt.pop %v1909
    %v1912 = vrsqrt.pop %v1910
    %v1913 = vmul.f32 %v1907, %v1911
    %v1914 = vmul.f32 %v1908, %v1912
    %v1915 = vlaneseq
    %v1916 = vshrl.u32 %v1915, 7
    %v1917 = vsub.s32 0, %v1916
    %v1918 = vrot.slane %v93, %v1917
    %v1919 = vmul.f32 %v1913, %v1918
    %v1920 = vmul.f32 %v1914, %v1918
    %v1921 = vlaneseq
    %v1922 = vshrl.u32 %v1921, 7
    %v1923 = vsub.s32 0, %v1922
    %v1924 = vrot.slane %v94, %v1923
    %v1925 = vadd.f32 %v1919, %v1924
    %v1926 = vadd.f32 %v1920, %v1924
    %s1927 = scalar_lea.vmem [#allocation5], 32
    %v1928 = vld [vmem:[%s1927] sm:$0xff]
    %v1929 = vld [vmem:[%s1927 + $0x8] sm:$0xff]
    %v1930 = vld [vmem:[%s1927 + $0x10] sm:$0xff]
    %v1931 = vld [vmem:[%s1927 + $0x18] sm:$0xff]
    %s1932 = scalar_lea.vmem [#allocation7], 64
    %v1933 = vld [vmem:[%s1932] sm:$0xff]
    %v1934 = vld [vmem:[%s1932 + $0x8] sm:$0xff]
    %v1935 = vld [vmem:[%s1932 + $0x10] sm:$0xff]
    %v1936 = vld [vmem:[%s1932 + $0x18] sm:$0xff]
    %v1937 = vld [vmem:[%s1932 + $0x20] sm:$0xff]
    %v1938 = vld [vmem:[%s1932 + $0x28] sm:$0xff]
    %v1939 = vld [vmem:[%s1932 + $0x30] sm:$0xff]
    %v1940 = vld [vmem:[%s1932 + $0x38] sm:$0xff]
    %s1941 = scalar_lea.vmem [#allocation8], 8
    %v1942 = vld [vmem:[%s1941] sm:$0x1]
    %v1943 = vld [vmem:[%s1941 + $0x1] sm:$0x1]
    %v1944 = vld [vmem:[%s1941 + $0x2] sm:$0x1]
    %v1945 = vld [vmem:[%s1941 + $0x3] sm:$0x1]
    %v1946 = vld [vmem:[%s1941 + $0x4] sm:$0x1]
    %v1947 = vld [vmem:[%s1941 + $0x5] sm:$0x1]
    %v1948 = vld [vmem:[%s1941 + $0x6] sm:$0x1]
    %v1949 = vld [vmem:[%s1941 + $0x7] sm:$0x1]
    %v1950 = vlaneseq
    %v1951 = vshrl.u32 %v1950, 7
    %v1952 = vsub.s32 0, %v1951
    %v1953 = vrot.slane %v1942, %v1952
    %v1955 = vsel %vm99, %v1925, 0
    %v1958 = vsel %vm99, %v1926, 0
    %1960 = vmatprep.subr.mxu0 0.0
    %1961 = vmatpush1.msra.mxu0 0.0
    %1962 = vmatprep.subr.mxu0 0.0
    %1963 = vmatpush1.msra.mxu0 0.0
    %1964 = vmatprep.subr.mxu0 0.0
    %1965 = vmatpush1.msra.mxu0 0.0
    %1966 = vmatprep.subr.mxu0 0.0
    %1967 = vmatpush1.msra.mxu0 0.0
    %1968 = vmatprep.subr.mxu0 0.0
    %1969 = vmatpush1.msra.mxu0 0.0
    %1970 = vmatprep.subr.mxu0 0.0
    %1971 = vmatpush1.msra.mxu0 0.0
    %1972 = vmatprep.subr.mxu0 0.0
    %1973 = vmatpush1.msra.mxu0 0.0
    %1974 = vmatprep.subr.mxu0 0.0
    %1975 = vmatpush1.msra.mxu0 0.0
    %1976 = vmatprep.subr.mxu0 0.0
    %1977 = vmatpush1.msra.mxu0 0.0
    %1978 = vmatprep.subr.mxu0 0.0
    %1979 = vmatpush1.msra.mxu0 0.0
    %1980 = vmatprep.subr.mxu0 0.0
    %1981 = vmatpush1.msra.mxu0 0.0
    %1982 = vmatprep.subr.mxu0 0.0
    %1983 = vmatpush1.msra.mxu0 0.0
    %1984 = vmatprep.subr.mxu0 0.0
    %1985 = vmatpush1.msra.mxu0 %v1931
    %1986 = vmatprep.subr.mxu0 0.0
    %1987 = vmatpush1.msra.mxu0 %v1930
    %1988 = vmatprep.subr.mxu0 0.0
    %1989 = vmatpush1.msra.mxu0 %v1929
    %1990 = vmatprep.subr.mxu0 0.0
    %1991 = vmatpush1.msra.mxu0 %v1928
    %1992 = vmatprep.subr.mxu0 0.0
    %1993 = vmatpush2.msra.mxu0 0.0
    %1994 = vmatprep.subr.mxu0 0.0
    %1995 = vmatpush2.msra.mxu0 0.0
    %1996 = vmatprep.subr.mxu0 0.0
    %1997 = vmatpush2.msra.mxu0 0.0
    %1998 = vmatprep.subr.mxu0 0.0
    %1999 = vmatpush2.msra.mxu0 0.0
    %2000 = vmatprep.subr.mxu0 0.0
    %2001 = vmatpush2.msra.mxu0 0.0
    %2002 = vmatprep.subr.mxu0 0.0
    %2003 = vmatpush2.msra.mxu0 0.0
    %2004 = vmatprep.subr.mxu0 0.0
    %2005 = vmatpush2.msra.mxu0 0.0
    %2006 = vmatprep.subr.mxu0 0.0
    %2007 = vmatpush2.msra.mxu0 0.0
    %2008 = vmatprep.subr.mxu0 0.0
    %2009 = vmatpush2.msra.mxu0 0.0
    %2010 = vmatprep.subr.mxu0 0.0
    %2011 = vmatpush2.msra.mxu0 0.0
    %2012 = vmatprep.subr.mxu0 0.0
    %2013 = vmatpush2.msra.mxu0 0.0
    %2014 = vmatprep.subr.mxu0 0.0
    %2015 = vmatpush2.msra.mxu0 0.0
    %2016 = vmatprep.subr.mxu0 0.0
    %2017 = vmatpush2.msra.mxu0 0.0
    %2018 = vmatprep.subr.mxu0 0.0
    %2019 = vmatpush2.msra.mxu0 0.0
    %2020 = vmatprep.subr.mxu0 0.0
    %2021 = vmatpush2.msra.mxu0 0.0
    %2022 = vmatprep.subr.mxu0 0.0
    %2023 = vmatpush2.msra.mxu0 0.0
    %2024 = vmatprep.mubr.f32.mxu0 0.0
    %2025 = vmatmul.mubr.f32.gmra.mxu0 %v1955
    %v2026 = vpop.f32.mrf.mxu0
    %v2027 = vadd.f32 %v1953, %v2026
    %v2028 = vpop.f32.mrf.mxu0
    %2029 = vmatprep.mubr.f32.mxu0 0.0
    %2030 = vmatmul.mubr.f32.gmra.mxu0 %v1958
    %v2031 = vpop.f32.mrf.mxu0
    %v2032 = vadd.f32 %v1953, %v2031
    %v2033 = vpop.f32.mrf.mxu0
    %2034 = vdwg.mxu0
    %2037 = vrot.lane.b32.xlu0 %v2027, 120
    %v2038 = vpop.permute.xlu0 %2037
    %2039 = vrot.lane.b32.xlu0 %v2032, 120
    %v2040 = vpop.permute.xlu0 %2039
    %2041 = vrot.lane.b32.xlu0 %v2027, 112
    %v2042 = vpop.permute.xlu0 %2041
    %2043 = vrot.lane.b32.xlu0 %v2032, 112
    %v2044 = vpop.permute.xlu0 %2043
    %2045 = vrot.lane.b32.xlu0 %v2027, 104
    %v2046 = vpop.permute.xlu0 %2045
    %2047 = vrot.lane.b32.xlu0 %v2032, 104
    %v2048 = vpop.permute.xlu0 %2047
    %2049 = vrot.lane.b32.xlu0 %v2027, 96
    %v2050 = vpop.permute.xlu0 %2049
    %v2051 = vsel %vm197, %v2027, 0
    %v2053 = vsel %vm197, %v2050, 0
    %2055 = vmatprep.subr.mxu0 0.0
    %2056 = vmatpush1.xpose.msra.mxu0 0.0
    %2057 = vmatprep.subr.mxu0 0.0
    %2058 = vmatpush1.xpose.msra.mxu0 0.0
    %2059 = vmatprep.subr.mxu0 0.0
    %2060 = vmatpush1.xpose.msra.mxu0 0.0
    %2061 = vmatprep.subr.mxu0 0.0
    %2062 = vmatpush1.xpose.msra.mxu0 0.0
    %2063 = vmatprep.subr.mxu0 0.0
    %2064 = vmatpush1.xpose.msra.mxu0 0.0
    %2065 = vmatprep.subr.mxu0 0.0
    %2066 = vmatpush1.xpose.msra.mxu0 0.0
    %2067 = vmatprep.subr.mxu0 0.0
    %2068 = vmatpush1.xpose.msra.mxu0 0.0
    %2069 = vmatprep.subr.mxu0 0.0
    %2070 = vmatpush1.xpose.msra.mxu0 0.0
    %2071 = vmatprep.subr.mxu0 0.0
    %2072 = vmatpush1.xpose.msra.mxu0 0.0
    %2073 = vmatprep.subr.mxu0 0.0
    %2074 = vmatpush1.xpose.msra.mxu0 0.0
    %2075 = vmatprep.subr.mxu0 0.0
    %2076 = vmatpush1.xpose.msra.mxu0 0.0
    %2077 = vmatprep.subr.mxu0 0.0
    %2078 = vmatpush1.xpose.msra.mxu0 0.0
    %2079 = vmatprep.subr.mxu0 0.0
    %2080 = vmatpush1.xpose.msra.mxu0 0.0
    %2081 = vmatprep.subr.mxu0 0.0
    %2082 = vmatpush1.xpose.msra.mxu0 0.0
    %2083 = vmatprep.subr.mxu0 0.0
    %2084 = vmatpush1.xpose.msra.mxu0 0.0
    %2085 = vmatprep.subr.mxu0 0.0
    %2086 = vmatpush1.xpose.msra.mxu0 %v2053
    %2087 = vmatprep.subr.mxu0 0.0
    %2088 = vmatpush2.xpose.msra.mxu0 0.0
    %2089 = vmatprep.subr.mxu0 0.0
    %2090 = vmatpush2.xpose.msra.mxu0 0.0
    %2091 = vmatprep.subr.mxu0 0.0
    %2092 = vmatpush2.xpose.msra.mxu0 0.0
    %2093 = vmatprep.subr.mxu0 0.0
    %2094 = vmatpush2.xpose.msra.mxu0 0.0
    %2095 = vmatprep.subr.mxu0 0.0
    %2096 = vmatpush2.xpose.msra.mxu0 0.0
    %2097 = vmatprep.subr.mxu0 0.0
    %2098 = vmatpush2.xpose.msra.mxu0 0.0
    %2099 = vmatprep.subr.mxu0 0.0
    %2100 = vmatpush2.xpose.msra.mxu0 0.0
    %2101 = vmatprep.subr.mxu0 0.0
    %2102 = vmatpush2.xpose.msra.mxu0 0.0
    %2103 = vmatprep.subr.mxu0 0.0
    %2104 = vmatpush2.xpose.msra.mxu0 0.0
    %2105 = vmatprep.subr.mxu0 0.0
    %2106 = vmatpush2.xpose.msra.mxu0 0.0
    %2107 = vmatprep.subr.mxu0 0.0
    %2108 = vmatpush2.xpose.msra.mxu0 0.0
    %2109 = vmatprep.subr.mxu0 0.0
    %2110 = vmatpush2.xpose.msra.mxu0 0.0
    %2111 = vmatprep.subr.mxu0 0.0
    %2112 = vmatpush2.xpose.msra.mxu0 0.0
    %2113 = vmatprep.subr.mxu0 0.0
    %2114 = vmatpush2.xpose.msra.mxu0 0.0
    %2115 = vmatprep.subr.mxu0 0.0
    %2116 = vmatpush2.xpose.msra.mxu0 0.0
    %2117 = vmatprep.subr.mxu0 0.0
    %2118 = vmatpush2.xpose.msra.mxu0 0.0
    %2119 = vmatprep.mubr.f32.mxu0 0.0
    %2120 = vmatmul.mubr.f32.gmra.mxu0 %v2051
    %v2121 = vpop.f32.mrf.mxu0
    %v2122 = vadd.f32 0.0, %v2121
    %v2123 = vpop.f32.mrf.mxu0
    %2124 = vdwg.mxu0
    %2125 = vrot.lane.b32.xlu0 %v2032, 96
    %v2126 = vpop.permute.xlu0 %2125
    %v2127 = vsel %vm197, %v2032, 0
    %v2129 = vsel %vm197, %v2126, 0
    %2131 = vmatprep.subr.mxu0 0.0
    %2132 = vmatpush1.xpose.msra.mxu0 0.0
    %2133 = vmatprep.subr.mxu0 0.0
    %2134 = vmatpush1.xpose.msra.mxu0 0.0
    %2135 = vmatprep.subr.mxu0 0.0
    %2136 = vmatpush1.xpose.msra.mxu0 0.0
    %2137 = vmatprep.subr.mxu0 0.0
    %2138 = vmatpush1.xpose.msra.mxu0 0.0
    %2139 = vmatprep.subr.mxu0 0.0
    %2140 = vmatpush1.xpose.msra.mxu0 0.0
    %2141 = vmatprep.subr.mxu0 0.0
    %2142 = vmatpush1.xpose.msra.mxu0 0.0
    %2143 = vmatprep.subr.mxu0 0.0
    %2144 = vmatpush1.xpose.msra.mxu0 0.0
    %2145 = vmatprep.subr.mxu0 0.0
    %2146 = vmatpush1.xpose.msra.mxu0 0.0
    %2147 = vmatprep.subr.mxu0 0.0
    %2148 = vmatpush1.xpose.msra.mxu0 0.0
    %2149 = vmatprep.subr.mxu0 0.0
    %2150 = vmatpush1.xpose.msra.mxu0 0.0
    %2151 = vmatprep.subr.mxu0 0.0
    %2152 = vmatpush1.xpose.msra.mxu0 0.0
    %2153 = vmatprep.subr.mxu0 0.0
    %2154 = vmatpush1.xpose.msra.mxu0 0.0
    %2155 = vmatprep.subr.mxu0 0.0
    %2156 = vmatpush1.xpose.msra.mxu0 0.0
    %2157 = vmatprep.subr.mxu0 0.0
    %2158 = vmatpush1.xpose.msra.mxu0 0.0
    %2159 = vmatprep.subr.mxu0 0.0
    %2160 = vmatpush1.xpose.msra.mxu0 0.0
    %2161 = vmatprep.subr.mxu0 0.0
    %2162 = vmatpush1.xpose.msra.mxu0 %v2129
    %2163 = vmatprep.subr.mxu0 0.0
    %2164 = vmatpush2.xpose.msra.mxu0 0.0
    %2165 = vmatprep.subr.mxu0 0.0
    %2166 = vmatpush2.xpose.msra.mxu0 0.0
    %2167 = vmatprep.subr.mxu0 0.0
    %2168 = vmatpush2.xpose.msra.mxu0 0.0
    %2169 = vmatprep.subr.mxu0 0.0
    %2170 = vmatpush2.xpose.msra.mxu0 0.0
    %2171 = vmatprep.subr.mxu0 0.0
    %2172 = vmatpush2.xpose.msra.mxu0 0.0
    %2173 = vmatprep.subr.mxu0 0.0
    %2174 = vmatpush2.xpose.msra.mxu0 0.0
    %2175 = vmatprep.subr.mxu0 0.0
    %2176 = vmatpush2.xpose.msra.mxu0 0.0
    %2177 = vmatprep.subr.mxu0 0.0
    %2178 = vmatpush2.xpose.msra.mxu0 0.0
    %2179 = vmatprep.subr.mxu0 0.0
    %2180 = vmatpush2.xpose.msra.mxu0 0.0
    %2181 = vmatprep.subr.mxu0 0.0
    %2182 = vmatpush2.xpose.msra.mxu0 0.0
    %2183 = vmatprep.subr.mxu0 0.0
    %2184 = vmatpush2.xpose.msra.mxu0 0.0
    %2185 = vmatprep.subr.mxu0 0.0
    %2186 = vmatpush2.xpose.msra.mxu0 0.0
    %2187 = vmatprep.subr.mxu0 0.0
    %2188 = vmatpush2.xpose.msra.mxu0 0.0
    %2189 = vmatprep.subr.mxu0 0.0
    %2190 = vmatpush2.xpose.msra.mxu0 0.0
    %2191 = vmatprep.subr.mxu0 0.0
    %2192 = vmatpush2.xpose.msra.mxu0 0.0
    %2193 = vmatprep.subr.mxu0 0.0
    %2194 = vmatpush2.xpose.msra.mxu0 0.0
    %2195 = vmatprep.mubr.f32.mxu0 0.0
    %2196 = vmatmul.mubr.f32.gmra.mxu0 %v2127
    %v2197 = vpop.f32.mrf.mxu0
    %v2198 = vadd.f32 0.0, %v2197
    %v2199 = vpop.f32.mrf.mxu0
    %2200 = vdwg.mxu0
    %2201 = vrot.lane.b32.xlu0 %v2038, 96
    %v2202 = vpop.permute.xlu0 %2201
    %v2203 = vsel %vm197, %v2038, 0
    %v2205 = vsel %vm197, %v2202, 0
    %2207 = vmatprep.subr.mxu0 0.0
    %2208 = vmatpush1.xpose.msra.mxu0 0.0
    %2209 = vmatprep.subr.mxu0 0.0
    %2210 = vmatpush1.xpose.msra.mxu0 0.0
    %2211 = vmatprep.subr.mxu0 0.0
    %2212 = vmatpush1.xpose.msra.mxu0 0.0
    %2213 = vmatprep.subr.mxu0 0.0
    %2214 = vmatpush1.xpose.msra.mxu0 0.0
    %2215 = vmatprep.subr.mxu0 0.0
    %2216 = vmatpush1.xpose.msra.mxu0 0.0
    %2217 = vmatprep.subr.mxu0 0.0
    %2218 = vmatpush1.xpose.msra.mxu0 0.0
    %2219 = vmatprep.subr.mxu0 0.0
    %2220 = vmatpush1.xpose.msra.mxu0 0.0
    %2221 = vmatprep.subr.mxu0 0.0
    %2222 = vmatpush1.xpose.msra.mxu0 0.0
    %2223 = vmatprep.subr.mxu0 0.0
    %2224 = vmatpush1.xpose.msra.mxu0 0.0
    %2225 = vmatprep.subr.mxu0 0.0
    %2226 = vmatpush1.xpose.msra.mxu0 0.0
    %2227 = vmatprep.subr.mxu0 0.0
    %2228 = vmatpush1.xpose.msra.mxu0 0.0
    %2229 = vmatprep.subr.mxu0 0.0
    %2230 = vmatpush1.xpose.msra.mxu0 0.0
    %2231 = vmatprep.subr.mxu0 0.0
    %2232 = vmatpush1.xpose.msra.mxu0 0.0
    %2233 = vmatprep.subr.mxu0 0.0
    %2234 = vmatpush1.xpose.msra.mxu0 0.0
    %2235 = vmatprep.subr.mxu0 0.0
    %2236 = vmatpush1.xpose.msra.mxu0 0.0
    %2237 = vmatprep.subr.mxu0 0.0
    %2238 = vmatpush1.xpose.msra.mxu0 %v2205
    %2239 = vmatprep.subr.mxu0 0.0
    %2240 = vmatpush2.xpose.msra.mxu0 0.0
    %2241 = vmatprep.subr.mxu0 0.0
    %2242 = vmatpush2.xpose.msra.mxu0 0.0
    %2243 = vmatprep.subr.mxu0 0.0
    %2244 = vmatpush2.xpose.msra.mxu0 0.0
    %2245 = vmatprep.subr.mxu0 0.0
    %2246 = vmatpush2.xpose.msra.mxu0 0.0
    %2247 = vmatprep.subr.mxu0 0.0
    %2248 = vmatpush2.xpose.msra.mxu0 0.0
    %2249 = vmatprep.subr.mxu0 0.0
    %2250 = vmatpush2.xpose.msra.mxu0 0.0
    %2251 = vmatprep.subr.mxu0 0.0
    %2252 = vmatpush2.xpose.msra.mxu0 0.0
    %2253 = vmatprep.subr.mxu0 0.0
    %2254 = vmatpush2.xpose.msra.mxu0 0.0
    %2255 = vmatprep.subr.mxu0 0.0
    %2256 = vmatpush2.xpose.msra.mxu0 0.0
    %2257 = vmatprep.subr.mxu0 0.0
    %2258 = vmatpush2.xpose.msra.mxu0 0.0
    %2259 = vmatprep.subr.mxu0 0.0
    %2260 = vmatpush2.xpose.msra.mxu0 0.0
    %2261 = vmatprep.subr.mxu0 0.0
    %2262 = vmatpush2.xpose.msra.mxu0 0.0
    %2263 = vmatprep.subr.mxu0 0.0
    %2264 = vmatpush2.xpose.msra.mxu0 0.0
    %2265 = vmatprep.subr.mxu0 0.0
    %2266 = vmatpush2.xpose.msra.mxu0 0.0
    %2267 = vmatprep.subr.mxu0 0.0
    %2268 = vmatpush2.xpose.msra.mxu0 0.0
    %2269 = vmatprep.subr.mxu0 0.0
    %2270 = vmatpush2.xpose.msra.mxu0 0.0
    %2271 = vmatprep.mubr.f32.mxu0 0.0
    %2272 = vmatmul.mubr.f32.gmra.mxu0 %v2203
    %v2273 = vpop.f32.mrf.mxu0
    %v2274 = vadd.f32 0.0, %v2273
    %v2275 = vpop.f32.mrf.mxu0
    %2276 = vdwg.mxu0
    %2277 = vrot.lane.b32.xlu0 %v2040, 96
    %v2278 = vpop.permute.xlu0 %2277
    %v2279 = vsel %vm197, %v2040, 0
    %v2281 = vsel %vm197, %v2278, 0
    %2283 = vmatprep.subr.mxu0 0.0
    %2284 = vmatpush1.xpose.msra.mxu0 0.0
    %2285 = vmatprep.subr.mxu0 0.0
    %2286 = vmatpush1.xpose.msra.mxu0 0.0
    %2287 = vmatprep.subr.mxu0 0.0
    %2288 = vmatpush1.xpose.msra.mxu0 0.0
    %2289 = vmatprep.subr.mxu0 0.0
    %2290 = vmatpush1.xpose.msra.mxu0 0.0
    %2291 = vmatprep.subr.mxu0 0.0
    %2292 = vmatpush1.xpose.msra.mxu0 0.0
    %2293 = vmatprep.subr.mxu0 0.0
    %2294 = vmatpush1.xpose.msra.mxu0 0.0
    %2295 = vmatprep.subr.mxu0 0.0
    %2296 = vmatpush1.xpose.msra.mxu0 0.0
    %2297 = vmatprep.subr.mxu0 0.0
    %2298 = vmatpush1.xpose.msra.mxu0 0.0
    %2299 = vmatprep.subr.mxu0 0.0
    %2300 = vmatpush1.xpose.msra.mxu0 0.0
    %2301 = vmatprep.subr.mxu0 0.0
    %2302 = vmatpush1.xpose.msra.mxu0 0.0
    %2303 = vmatprep.subr.mxu0 0.0
    %2304 = vmatpush1.xpose.msra.mxu0 0.0
    %2305 = vmatprep.subr.mxu0 0.0
    %2306 = vmatpush1.xpose.msra.mxu0 0.0
    %2307 = vmatprep.subr.mxu0 0.0
    %2308 = vmatpush1.xpose.msra.mxu0 0.0
    %2309 = vmatprep.subr.mxu0 0.0
    %2310 = vmatpush1.xpose.msra.mxu0 0.0
    %2311 = vmatprep.subr.mxu0 0.0
    %2312 = vmatpush1.xpose.msra.mxu0 0.0
    %2313 = vmatprep.subr.mxu0 0.0
    %2314 = vmatpush1.xpose.msra.mxu0 %v2281
    %2315 = vmatprep.subr.mxu0 0.0
    %2316 = vmatpush2.xpose.msra.mxu0 0.0
    %2317 = vmatprep.subr.mxu0 0.0
    %2318 = vmatpush2.xpose.msra.mxu0 0.0
    %2319 = vmatprep.subr.mxu0 0.0
    %2320 = vmatpush2.xpose.msra.mxu0 0.0
    %2321 = vmatprep.subr.mxu0 0.0
    %2322 = vmatpush2.xpose.msra.mxu0 0.0
    %2323 = vmatprep.subr.mxu0 0.0
    %2324 = vmatpush2.xpose.msra.mxu0 0.0
    %2325 = vmatprep.subr.mxu0 0.0
    %2326 = vmatpush2.xpose.msra.mxu0 0.0
    %2327 = vmatprep.subr.mxu0 0.0
    %2328 = vmatpush2.xpose.msra.mxu0 0.0
    %2329 = vmatprep.subr.mxu0 0.0
    %2330 = vmatpush2.xpose.msra.mxu0 0.0
    %2331 = vmatprep.subr.mxu0 0.0
    %2332 = vmatpush2.xpose.msra.mxu0 0.0
    %2333 = vmatprep.subr.mxu0 0.0
    %2334 = vmatpush2.xpose.msra.mxu0 0.0
    %2335 = vmatprep.subr.mxu0 0.0
    %2336 = vmatpush2.xpose.msra.mxu0 0.0
    %2337 = vmatprep.subr.mxu0 0.0
    %2338 = vmatpush2.xpose.msra.mxu0 0.0
    %2339 = vmatprep.subr.mxu0 0.0
    %2340 = vmatpush2.xpose.msra.mxu0 0.0
    %2341 = vmatprep.subr.mxu0 0.0
    %2342 = vmatpush2.xpose.msra.mxu0 0.0
    %2343 = vmatprep.subr.mxu0 0.0
    %2344 = vmatpush2.xpose.msra.mxu0 0.0
    %2345 = vmatprep.subr.mxu0 0.0
    %2346 = vmatpush2.xpose.msra.mxu0 0.0
    %2347 = vmatprep.mubr.f32.mxu0 0.0
    %2348 = vmatmul.mubr.f32.gmra.mxu0 %v2279
    %v2349 = vpop.f32.mrf.mxu0
    %v2350 = vadd.f32 0.0, %v2349
    %v2351 = vpop.f32.mrf.mxu0
    %2352 = vdwg.mxu0
    %2353 = vrot.lane.b32.xlu0 %v2042, 96
    %v2354 = vpop.permute.xlu0 %2353
    %v2355 = vsel %vm197, %v2042, 0
    %v2357 = vsel %vm197, %v2354, 0
    %2359 = vmatprep.subr.mxu0 0.0
    %2360 = vmatpush1.xpose.msra.mxu0 0.0
    %2361 = vmatprep.subr.mxu0 0.0
    %2362 = vmatpush1.xpose.msra.mxu0 0.0
    %2363 = vmatprep.subr.mxu0 0.0
    %2364 = vmatpush1.xpose.msra.mxu0 0.0
    %2365 = vmatprep.subr.mxu0 0.0
    %2366 = vmatpush1.xpose.msra.mxu0 0.0
    %2367 = vmatprep.subr.mxu0 0.0
    %2368 = vmatpush1.xpose.msra.mxu0 0.0
    %2369 = vmatprep.subr.mxu0 0.0
    %2370 = vmatpush1.xpose.msra.mxu0 0.0
    %2371 = vmatprep.subr.mxu0 0.0
    %2372 = vmatpush1.xpose.msra.mxu0 0.0
    %2373 = vmatprep.subr.mxu0 0.0
    %2374 = vmatpush1.xpose.msra.mxu0 0.0
    %2375 = vmatprep.subr.mxu0 0.0
    %2376 = vmatpush1.xpose.msra.mxu0 0.0
    %2377 = vmatprep.subr.mxu0 0.0
    %2378 = vmatpush1.xpose.msra.mxu0 0.0
    %2379 = vmatprep.subr.mxu0 0.0
    %2380 = vmatpush1.xpose.msra.mxu0 0.0
    %2381 = vmatprep.subr.mxu0 0.0
    %2382 = vmatpush1.xpose.msra.mxu0 0.0
    %2383 = vmatprep.subr.mxu0 0.0
    %2384 = vmatpush1.xpose.msra.mxu0 0.0
    %2385 = vmatprep.subr.mxu0 0.0
    %2386 = vmatpush1.xpose.msra.mxu0 0.0
    %2387 = vmatprep.subr.mxu0 0.0
    %2388 = vmatpush1.xpose.msra.mxu0 0.0
    %2389 = vmatprep.subr.mxu0 0.0
    %2390 = vmatpush1.xpose.msra.mxu0 %v2357
    %2391 = vmatprep.subr.mxu0 0.0
    %2392 = vmatpush2.xpose.msra.mxu0 0.0
    %2393 = vmatprep.subr.mxu0 0.0
    %2394 = vmatpush2.xpose.msra.mxu0 0.0
    %2395 = vmatprep.subr.mxu0 0.0
    %2396 = vmatpush2.xpose.msra.mxu0 0.0
    %2397 = vmatprep.subr.mxu0 0.0
    %2398 = vmatpush2.xpose.msra.mxu0 0.0
    %2399 = vmatprep.subr.mxu0 0.0
    %2400 = vmatpush2.xpose.msra.mxu0 0.0
    %2401 = vmatprep.subr.mxu0 0.0
    %2402 = vmatpush2.xpose.msra.mxu0 0.0
    %2403 = vmatprep.subr.mxu0 0.0
    %2404 = vmatpush2.xpose.msra.mxu0 0.0
    %2405 = vmatprep.subr.mxu0 0.0
    %2406 = vmatpush2.xpose.msra.mxu0 0.0
    %2407 = vmatprep.subr.mxu0 0.0
    %2408 = vmatpush2.xpose.msra.mxu0 0.0
    %2409 = vmatprep.subr.mxu0 0.0
    %2410 = vmatpush2.xpose.msra.mxu0 0.0
    %2411 = vmatprep.subr.mxu0 0.0
    %2412 = vmatpush2.xpose.msra.mxu0 0.0
    %2413 = vmatprep.subr.mxu0 0.0
    %2414 = vmatpush2.xpose.msra.mxu0 0.0
    %2415 = vmatprep.subr.mxu0 0.0
    %2416 = vmatpush2.xpose.msra.mxu0 0.0
    %2417 = vmatprep.subr.mxu0 0.0
    %2418 = vmatpush2.xpose.msra.mxu0 0.0
    %2419 = vmatprep.subr.mxu0 0.0
    %2420 = vmatpush2.xpose.msra.mxu0 0.0
    %2421 = vmatprep.subr.mxu0 0.0
    %2422 = vmatpush2.xpose.msra.mxu0 0.0
    %2423 = vmatprep.mubr.f32.mxu0 0.0
    %2424 = vmatmul.mubr.f32.gmra.mxu0 %v2355
    %v2425 = vpop.f32.mrf.mxu0
    %v2426 = vadd.f32 0.0, %v2425
    %v2427 = vpop.f32.mrf.mxu0
    %2428 = vdwg.mxu0
    %2429 = vrot.lane.b32.xlu0 %v2044, 96
    %v2430 = vpop.permute.xlu0 %2429
    %v2431 = vsel %vm197, %v2044, 0
    %v2433 = vsel %vm197, %v2430, 0
    %2435 = vmatprep.subr.mxu0 0.0
    %2436 = vmatpush1.xpose.msra.mxu0 0.0
    %2437 = vmatprep.subr.mxu0 0.0
    %2438 = vmatpush1.xpose.msra.mxu0 0.0
    %2439 = vmatprep.subr.mxu0 0.0
    %2440 = vmatpush1.xpose.msra.mxu0 0.0
    %2441 = vmatprep.subr.mxu0 0.0
    %2442 = vmatpush1.xpose.msra.mxu0 0.0
    %2443 = vmatprep.subr.mxu0 0.0
    %2444 = vmatpush1.xpose.msra.mxu0 0.0
    %2445 = vmatprep.subr.mxu0 0.0
    %2446 = vmatpush1.xpose.msra.mxu0 0.0
    %2447 = vmatprep.subr.mxu0 0.0
    %2448 = vmatpush1.xpose.msra.mxu0 0.0
    %2449 = vmatprep.subr.mxu0 0.0
    %2450 = vmatpush1.xpose.msra.mxu0 0.0
    %2451 = vmatprep.subr.mxu0 0.0
    %2452 = vmatpush1.xpose.msra.mxu0 0.0
    %2453 = vmatprep.subr.mxu0 0.0
    %2454 = vmatpush1.xpose.msra.mxu0 0.0
    %2455 = vmatprep.subr.mxu0 0.0
    %2456 = vmatpush1.xpose.msra.mxu0 0.0
    %2457 = vmatprep.subr.mxu0 0.0
    %2458 = vmatpush1.xpose.msra.mxu0 0.0
    %2459 = vmatprep.subr.mxu0 0.0
    %2460 = vmatpush1.xpose.msra.mxu0 0.0
    %2461 = vmatprep.subr.mxu0 0.0
    %2462 = vmatpush1.xpose.msra.mxu0 0.0
    %2463 = vmatprep.subr.mxu0 0.0
    %2464 = vmatpush1.xpose.msra.mxu0 0.0
    %2465 = vmatprep.subr.mxu0 0.0
    %2466 = vmatpush1.xpose.msra.mxu0 %v2433
    %2467 = vmatprep.subr.mxu0 0.0
    %2468 = vmatpush2.xpose.msra.mxu0 0.0
    %2469 = vmatprep.subr.mxu0 0.0
    %2470 = vmatpush2.xpose.msra.mxu0 0.0
    %2471 = vmatprep.subr.mxu0 0.0
    %2472 = vmatpush2.xpose.msra.mxu0 0.0
    %2473 = vmatprep.subr.mxu0 0.0
    %2474 = vmatpush2.xpose.msra.mxu0 0.0
    %2475 = vmatprep.subr.mxu0 0.0
    %2476 = vmatpush2.xpose.msra.mxu0 0.0
    %2477 = vmatprep.subr.mxu0 0.0
    %2478 = vmatpush2.xpose.msra.mxu0 0.0
    %2479 = vmatprep.subr.mxu0 0.0
    %2480 = vmatpush2.xpose.msra.mxu0 0.0
    %2481 = vmatprep.subr.mxu0 0.0
    %2482 = vmatpush2.xpose.msra.mxu0 0.0
    %2483 = vmatprep.subr.mxu0 0.0
    %2484 = vmatpush2.xpose.msra.mxu0 0.0
    %2485 = vmatprep.subr.mxu0 0.0
    %2486 = vmatpush2.xpose.msra.mxu0 0.0
    %2487 = vmatprep.subr.mxu0 0.0
    %2488 = vmatpush2.xpose.msra.mxu0 0.0
    %2489 = vmatprep.subr.mxu0 0.0
    %2490 = vmatpush2.xpose.msra.mxu0 0.0
    %2491 = vmatprep.subr.mxu0 0.0
    %2492 = vmatpush2.xpose.msra.mxu0 0.0
    %2493 = vmatprep.subr.mxu0 0.0
    %2494 = vmatpush2.xpose.msra.mxu0 0.0
    %2495 = vmatprep.subr.mxu0 0.0
    %2496 = vmatpush2.xpose.msra.mxu0 0.0
    %2497 = vmatprep.subr.mxu0 0.0
    %2498 = vmatpush2.xpose.msra.mxu0 0.0
    %2499 = vmatprep.mubr.f32.mxu0 0.0
    %2500 = vmatmul.mubr.f32.gmra.mxu0 %v2431
    %v2501 = vpop.f32.mrf.mxu0
    %v2502 = vadd.f32 0.0, %v2501
    %v2503 = vpop.f32.mrf.mxu0
    %2504 = vdwg.mxu0
    %2505 = vrot.lane.b32.xlu0 %v2046, 96
    %v2506 = vpop.permute.xlu0 %2505
    %v2507 = vsel %vm197, %v2046, 0
    %v2509 = vsel %vm197, %v2506, 0
    %2511 = vmatprep.subr.mxu0 0.0
    %2512 = vmatpush1.xpose.msra.mxu0 0.0
    %2513 = vmatprep.subr.mxu0 0.0
    %2514 = vmatpush1.xpose.msra.mxu0 0.0
    %2515 = vmatprep.subr.mxu0 0.0
    %2516 = vmatpush1.xpose.msra.mxu0 0.0
    %2517 = vmatprep.subr.mxu0 0.0
    %2518 = vmatpush1.xpose.msra.mxu0 0.0
    %2519 = vmatprep.subr.mxu0 0.0
    %2520 = vmatpush1.xpose.msra.mxu0 0.0
    %2521 = vmatprep.subr.mxu0 0.0
    %2522 = vmatpush1.xpose.msra.mxu0 0.0
    %2523 = vmatprep.subr.mxu0 0.0
    %2524 = vmatpush1.xpose.msra.mxu0 0.0
    %2525 = vmatprep.subr.mxu0 0.0
    %2526 = vmatpush1.xpose.msra.mxu0 0.0
    %2527 = vmatprep.subr.mxu0 0.0
    %2528 = vmatpush1.xpose.msra.mxu0 0.0
    %2529 = vmatprep.subr.mxu0 0.0
    %2530 = vmatpush1.xpose.msra.mxu0 0.0
    %2531 = vmatprep.subr.mxu0 0.0
    %2532 = vmatpush1.xpose.msra.mxu0 0.0
    %2533 = vmatprep.subr.mxu0 0.0
    %2534 = vmatpush1.xpose.msra.mxu0 0.0
    %2535 = vmatprep.subr.mxu0 0.0
    %2536 = vmatpush1.xpose.msra.mxu0 0.0
    %2537 = vmatprep.subr.mxu0 0.0
    %2538 = vmatpush1.xpose.msra.mxu0 0.0
    %2539 = vmatprep.subr.mxu0 0.0
    %2540 = vmatpush1.xpose.msra.mxu0 0.0
    %2541 = vmatprep.subr.mxu0 0.0
    %2542 = vmatpush1.xpose.msra.mxu0 %v2509
    %2543 = vmatprep.subr.mxu0 0.0
    %2544 = vmatpush2.xpose.msra.mxu0 0.0
    %2545 = vmatprep.subr.mxu0 0.0
    %2546 = vmatpush2.xpose.msra.mxu0 0.0
    %2547 = vmatprep.subr.mxu0 0.0
    %2548 = vmatpush2.xpose.msra.mxu0 0.0
    %2549 = vmatprep.subr.mxu0 0.0
    %2550 = vmatpush2.xpose.msra.mxu0 0.0
    %2551 = vmatprep.subr.mxu0 0.0
    %2552 = vmatpush2.xpose.msra.mxu0 0.0
    %2553 = vmatprep.subr.mxu0 0.0
    %2554 = vmatpush2.xpose.msra.mxu0 0.0
    %2555 = vmatprep.subr.mxu0 0.0
    %2556 = vmatpush2.xpose.msra.mxu0 0.0
    %2557 = vmatprep.subr.mxu0 0.0
    %2558 = vmatpush2.xpose.msra.mxu0 0.0
    %2559 = vmatprep.subr.mxu0 0.0
    %2560 = vmatpush2.xpose.msra.mxu0 0.0
    %2561 = vmatprep.subr.mxu0 0.0
    %2562 = vmatpush2.xpose.msra.mxu0 0.0
    %2563 = vmatprep.subr.mxu0 0.0
    %2564 = vmatpush2.xpose.msra.mxu0 0.0
    %2565 = vmatprep.subr.mxu0 0.0
    %2566 = vmatpush2.xpose.msra.mxu0 0.0
    %2567 = vmatprep.subr.mxu0 0.0
    %2568 = vmatpush2.xpose.msra.mxu0 0.0
    %2569 = vmatprep.subr.mxu0 0.0
    %2570 = vmatpush2.xpose.msra.mxu0 0.0
    %2571 = vmatprep.subr.mxu0 0.0
    %2572 = vmatpush2.xpose.msra.mxu0 0.0
    %2573 = vmatprep.subr.mxu0 0.0
    %2574 = vmatpush2.xpose.msra.mxu0 0.0
    %2575 = vmatprep.mubr.f32.mxu0 0.0
    %2576 = vmatmul.mubr.f32.gmra.mxu0 %v2507
    %v2577 = vpop.f32.mrf.mxu0
    %v2578 = vadd.f32 0.0, %v2577
    %v2579 = vpop.f32.mrf.mxu0
    %2580 = vdwg.mxu0
    %2581 = vrot.lane.b32.xlu0 %v2048, 96
    %v2582 = vpop.permute.xlu0 %2581
    %v2583 = vsel %vm197, %v2048, 0
    %v2585 = vsel %vm197, %v2582, 0
    %2587 = vmatprep.subr.mxu0 0.0
    %2588 = vmatpush1.xpose.msra.mxu0 0.0
    %2589 = vmatprep.subr.mxu0 0.0
    %2590 = vmatpush1.xpose.msra.mxu0 0.0
    %2591 = vmatprep.subr.mxu0 0.0
    %2592 = vmatpush1.xpose.msra.mxu0 0.0
    %2593 = vmatprep.subr.mxu0 0.0
    %2594 = vmatpush1.xpose.msra.mxu0 0.0
    %2595 = vmatprep.subr.mxu0 0.0
    %2596 = vmatpush1.xpose.msra.mxu0 0.0
    %2597 = vmatprep.subr.mxu0 0.0
    %2598 = vmatpush1.xpose.msra.mxu0 0.0
    %2599 = vmatprep.subr.mxu0 0.0
    %2600 = vmatpush1.xpose.msra.mxu0 0.0
    %2601 = vmatprep.subr.mxu0 0.0
    %2602 = vmatpush1.xpose.msra.mxu0 0.0
    %2603 = vmatprep.subr.mxu0 0.0
    %2604 = vmatpush1.xpose.msra.mxu0 0.0
    %2605 = vmatprep.subr.mxu0 0.0
    %2606 = vmatpush1.xpose.msra.mxu0 0.0
    %2607 = vmatprep.subr.mxu0 0.0
    %2608 = vmatpush1.xpose.msra.mxu0 0.0
    %2609 = vmatprep.subr.mxu0 0.0
    %2610 = vmatpush1.xpose.msra.mxu0 0.0
    %2611 = vmatprep.subr.mxu0 0.0
    %2612 = vmatpush1.xpose.msra.mxu0 0.0
    %2613 = vmatprep.subr.mxu0 0.0
    %2614 = vmatpush1.xpose.msra.mxu0 0.0
    %2615 = vmatprep.subr.mxu0 0.0
    %2616 = vmatpush1.xpose.msra.mxu0 0.0
    %2617 = vmatprep.subr.mxu0 0.0
    %2618 = vmatpush1.xpose.msra.mxu0 %v2585
    %2619 = vmatprep.subr.mxu0 0.0
    %2620 = vmatpush2.xpose.msra.mxu0 0.0
    %2621 = vmatprep.subr.mxu0 0.0
    %2622 = vmatpush2.xpose.msra.mxu0 0.0
    %2623 = vmatprep.subr.mxu0 0.0
    %2624 = vmatpush2.xpose.msra.mxu0 0.0
    %2625 = vmatprep.subr.mxu0 0.0
    %2626 = vmatpush2.xpose.msra.mxu0 0.0
    %2627 = vmatprep.subr.mxu0 0.0
    %2628 = vmatpush2.xpose.msra.mxu0 0.0
    %2629 = vmatprep.subr.mxu0 0.0
    %2630 = vmatpush2.xpose.msra.mxu0 0.0
    %2631 = vmatprep.subr.mxu0 0.0
    %2632 = vmatpush2.xpose.msra.mxu0 0.0
    %2633 = vmatprep.subr.mxu0 0.0
    %2634 = vmatpush2.xpose.msra.mxu0 0.0
    %2635 = vmatprep.subr.mxu0 0.0
    %2636 = vmatpush2.xpose.msra.mxu0 0.0
    %2637 = vmatprep.subr.mxu0 0.0
    %2638 = vmatpush2.xpose.msra.mxu0 0.0
    %2639 = vmatprep.subr.mxu0 0.0
    %2640 = vmatpush2.xpose.msra.mxu0 0.0
    %2641 = vmatprep.subr.mxu0 0.0
    %2642 = vmatpush2.xpose.msra.mxu0 0.0
    %2643 = vmatprep.subr.mxu0 0.0
    %2644 = vmatpush2.xpose.msra.mxu0 0.0
    %2645 = vmatprep.subr.mxu0 0.0
    %2646 = vmatpush2.xpose.msra.mxu0 0.0
    %2647 = vmatprep.subr.mxu0 0.0
    %2648 = vmatpush2.xpose.msra.mxu0 0.0
    %2649 = vmatprep.subr.mxu0 0.0
    %2650 = vmatpush2.xpose.msra.mxu0 0.0
    %2651 = vmatprep.mubr.f32.mxu0 0.0
    %2652 = vmatmul.mubr.f32.gmra.mxu0 %v2583
    %v2653 = vpop.f32.mrf.mxu0
    %v2654 = vadd.f32 0.0, %v2653
    %v2655 = vpop.f32.mrf.mxu0
    %2656 = vdwg.mxu0
    %v2657 = vsel %vm197, %v2122, -inf
    %2658 = vmax.xlane.f32.xlu0 %v2657
    %v2659 = vpop.xlane.xlu0 %2658
    %v2660 = vsel %vm197, %v2198, -inf
    %2661 = vmax.xlane.f32.xlu0 %v2660
    %v2662 = vpop.xlane.xlu0 %2661
    %v2663 = vsel %vm197, %v2274, -inf
    %2664 = vmax.xlane.f32.xlu0 %v2663
    %v2665 = vpop.xlane.xlu0 %2664
    %v2666 = vsel %vm197, %v2350, -inf
    %2667 = vmax.xlane.f32.xlu0 %v2666
    %v2668 = vpop.xlane.xlu0 %2667
    %v2669 = vsel %vm197, %v2426, -inf
    %2670 = vmax.xlane.f32.xlu0 %v2669
    %v2671 = vpop.xlane.xlu0 %2670
    %v2672 = vsel %vm197, %v2502, -inf
    %2673 = vmax.xlane.f32.xlu0 %v2672
    %v2674 = vpop.xlane.xlu0 %2673
    %v2675 = vsel %vm197, %v2578, -inf
    %2676 = vmax.xlane.f32.xlu0 %v2675
    %v2677 = vpop.xlane.xlu0 %2676
    %v2678 = vsel %vm197, %v2654, -inf
    %2679 = vmax.xlane.f32.xlu0 %v2678
    %v2680 = vpop.xlane.xlu0 %2679
    %v2681 = vsub.f32 %v2122, %v2659
    %v2682 = vsub.f32 %v2198, %v2662
    %v2683 = vsub.f32 %v2274, %v2665
    %v2684 = vsub.f32 %v2350, %v2668
    %v2685 = vsub.f32 %v2426, %v2671
    %v2686 = vsub.f32 %v2502, %v2674
    %v2687 = vsub.f32 %v2578, %v2677
    %v2688 = vsub.f32 %v2654, %v2680
    %v2689 = vmul.f32 %v2681, 1.442695
    %v2690 = vpow.pop %v2689
    %v2691 = vmul.f32 %v2682, 1.442695
    %v2692 = vpow.pop %v2691
    %v2693 = vmul.f32 %v2683, 1.442695
    %v2694 = vpow.pop %v2693
    %v2695 = vmul.f32 %v2684, 1.442695
    %v2696 = vpow.pop %v2695
    %v2697 = vmul.f32 %v2685, 1.442695
    %v2698 = vpow.pop %v2697
    %v2699 = vmul.f32 %v2686, 1.442695
    %v2700 = vpow.pop %v2699
    %v2701 = vmul.f32 %v2687, 1.442695
    %v2702 = vpow.pop %v2701
    %v2703 = vmul.f32 %v2688, 1.442695
    %v2704 = vpow.pop %v2703
    %v2705 = vsel %vm197, %v2690, 0.0
    %2706 = vadd.xlane.f32.xlu0 %v2705
    %v2707 = vpop.xlane.xlu0 %2706
    %v2708 = vsel %vm197, %v2692, 0.0
    %2709 = vadd.xlane.f32.xlu0 %v2708
    %v2710 = vpop.xlane.xlu0 %2709
    %v2711 = vsel %vm197, %v2694, 0.0
    %2712 = vadd.xlane.f32.xlu0 %v2711
    %v2713 = vpop.xlane.xlu0 %2712
    %v2714 = vsel %vm197, %v2696, 0.0
    %2715 = vadd.xlane.f32.xlu0 %v2714
    %v2716 = vpop.xlane.xlu0 %2715
    %v2717 = vsel %vm197, %v2698, 0.0
    %2718 = vadd.xlane.f32.xlu0 %v2717
    %v2719 = vpop.xlane.xlu0 %2718
    %v2720 = vsel %vm197, %v2700, 0.0
    %2721 = vadd.xlane.f32.xlu0 %v2720
    %v2722 = vpop.xlane.xlu0 %2721
    %v2723 = vsel %vm197, %v2702, 0.0
    %2724 = vadd.xlane.f32.xlu0 %v2723
    %v2725 = vpop.xlane.xlu0 %2724
    %v2726 = vsel %vm197, %v2704, 0.0
    %2727 = vadd.xlane.f32.xlu0 %v2726
    %v2728 = vpop.xlane.xlu0 %2727
    %v2729 = vrcp.pop %v2707
    %v2730 = vrcp.pop %v2710
    %v2731 = vrcp.pop %v2713
    %v2732 = vrcp.pop %v2716
    %v2733 = vrcp.pop %v2719
    %v2734 = vrcp.pop %v2722
    %v2735 = vrcp.pop %v2725
    %v2736 = vrcp.pop %v2728
    %v2737 = vmul.f32 %v2690, %v2729
    %v2738 = vmul.f32 %v2692, %v2730
    %v2739 = vmul.f32 %v2694, %v2731
    %v2740 = vmul.f32 %v2696, %v2732
    %v2741 = vmul.f32 %v2698, %v2733
    %v2742 = vmul.f32 %v2700, %v2734
    %v2743 = vmul.f32 %v2702, %v2735
    %v2744 = vmul.f32 %v2704, %v2736
    %2745 = vrot.lane.b32.xlu0 %v2027, 64
    %v2746 = vpop.permute.xlu0 %2745
    %v2749 = vsel %vm197, %v2737, 0
    %2751 = vmatprep.subr.mxu0 0.0
    %2752 = vmatpush1.msra.mxu0 0.0
    %2753 = vmatprep.subr.mxu0 0.0
    %2754 = vmatpush1.msra.mxu0 0.0
    %2755 = vmatprep.subr.mxu0 0.0
    %2756 = vmatpush1.msra.mxu0 0.0
    %2757 = vmatprep.subr.mxu0 0.0
    %2758 = vmatpush1.msra.mxu0 0.0
    %2759 = vmatprep.subr.mxu0 0.0
    %2760 = vmatpush1.msra.mxu0 0.0
    %2761 = vmatprep.subr.mxu0 0.0
    %2762 = vmatpush1.msra.mxu0 0.0
    %2763 = vmatprep.subr.mxu0 0.0
    %2764 = vmatpush1.msra.mxu0 0.0
    %2765 = vmatprep.subr.mxu0 0.0
    %2766 = vmatpush1.msra.mxu0 0.0
    %2767 = vmatprep.subr.mxu0 0.0
    %2768 = vmatpush1.msra.mxu0 0.0
    %2769 = vmatprep.subr.mxu0 0.0
    %2770 = vmatpush1.msra.mxu0 0.0
    %2771 = vmatprep.subr.mxu0 0.0
    %2772 = vmatpush1.msra.mxu0 0.0
    %2773 = vmatprep.subr.mxu0 0.0
    %2774 = vmatpush1.msra.mxu0 0.0
    %2775 = vmatprep.subr.mxu0 0.0
    %2776 = vmatpush1.msra.mxu0 0.0
    %2777 = vmatprep.subr.mxu0 0.0
    %2778 = vmatpush1.msra.mxu0 0.0
    %2779 = vmatprep.subr.mxu0 0.0
    %2780 = vmatpush1.msra.mxu0 0.0
    %2781 = vmatprep.subr.mxu0 0.0
    %2782 = vmatpush1.msra.mxu0 %v2746
    %2783 = vmatprep.subr.mxu0 0.0
    %2784 = vmatpush2.msra.mxu0 0.0
    %2785 = vmatprep.subr.mxu0 0.0
    %2786 = vmatpush2.msra.mxu0 0.0
    %2787 = vmatprep.subr.mxu0 0.0
    %2788 = vmatpush2.msra.mxu0 0.0
    %2789 = vmatprep.subr.mxu0 0.0
    %2790 = vmatpush2.msra.mxu0 0.0
    %2791 = vmatprep.subr.mxu0 0.0
    %2792 = vmatpush2.msra.mxu0 0.0
    %2793 = vmatprep.subr.mxu0 0.0
    %2794 = vmatpush2.msra.mxu0 0.0
    %2795 = vmatprep.subr.mxu0 0.0
    %2796 = vmatpush2.msra.mxu0 0.0
    %2797 = vmatprep.subr.mxu0 0.0
    %2798 = vmatpush2.msra.mxu0 0.0
    %2799 = vmatprep.subr.mxu0 0.0
    %2800 = vmatpush2.msra.mxu0 0.0
    %2801 = vmatprep.subr.mxu0 0.0
    %2802 = vmatpush2.msra.mxu0 0.0
    %2803 = vmatprep.subr.mxu0 0.0
    %2804 = vmatpush2.msra.mxu0 0.0
    %2805 = vmatprep.subr.mxu0 0.0
    %2806 = vmatpush2.msra.mxu0 0.0
    %2807 = vmatprep.subr.mxu0 0.0
    %2808 = vmatpush2.msra.mxu0 0.0
    %2809 = vmatprep.subr.mxu0 0.0
    %2810 = vmatpush2.msra.mxu0 0.0
    %2811 = vmatprep.subr.mxu0 0.0
    %2812 = vmatpush2.msra.mxu0 0.0
    %2813 = vmatprep.subr.mxu0 0.0
    %2814 = vmatpush2.msra.mxu0 0.0
    %2815 = vmatprep.mubr.f32.mxu0 0.0
    %2816 = vmatmul.mubr.f32.gmra.mxu0 %v2749
    %v2817 = vpop.f32.mrf.mxu0
    %v2818 = vadd.f32 0.0, %v2817
    %v2819 = vpop.f32.mrf.mxu0
    %2820 = vdwg.mxu0
    %2821 = vrot.lane.b32.xlu0 %v2032, 64
    %v2822 = vpop.permute.xlu0 %2821
    %v2825 = vsel %vm197, %v2738, 0
    %2827 = vmatprep.subr.mxu0 0.0
    %2828 = vmatpush1.msra.mxu0 0.0
    %2829 = vmatprep.subr.mxu0 0.0
    %2830 = vmatpush1.msra.mxu0 0.0
    %2831 = vmatprep.subr.mxu0 0.0
    %2832 = vmatpush1.msra.mxu0 0.0
    %2833 = vmatprep.subr.mxu0 0.0
    %2834 = vmatpush1.msra.mxu0 0.0
    %2835 = vmatprep.subr.mxu0 0.0
    %2836 = vmatpush1.msra.mxu0 0.0
    %2837 = vmatprep.subr.mxu0 0.0
    %2838 = vmatpush1.msra.mxu0 0.0
    %2839 = vmatprep.subr.mxu0 0.0
    %2840 = vmatpush1.msra.mxu0 0.0
    %2841 = vmatprep.subr.mxu0 0.0
    %2842 = vmatpush1.msra.mxu0 0.0
    %2843 = vmatprep.subr.mxu0 0.0
    %2844 = vmatpush1.msra.mxu0 0.0
    %2845 = vmatprep.subr.mxu0 0.0
    %2846 = vmatpush1.msra.mxu0 0.0
    %2847 = vmatprep.subr.mxu0 0.0
    %2848 = vmatpush1.msra.mxu0 0.0
    %2849 = vmatprep.subr.mxu0 0.0
    %2850 = vmatpush1.msra.mxu0 0.0
    %2851 = vmatprep.subr.mxu0 0.0
    %2852 = vmatpush1.msra.mxu0 0.0
    %2853 = vmatprep.subr.mxu0 0.0
    %2854 = vmatpush1.msra.mxu0 0.0
    %2855 = vmatprep.subr.mxu0 0.0
    %2856 = vmatpush1.msra.mxu0 0.0
    %2857 = vmatprep.subr.mxu0 0.0
    %2858 = vmatpush1.msra.mxu0 %v2822
    %2859 = vmatprep.subr.mxu0 0.0
    %2860 = vmatpush2.msra.mxu0 0.0
    %2861 = vmatprep.subr.mxu0 0.0
    %2862 = vmatpush2.msra.mxu0 0.0
    %2863 = vmatprep.subr.mxu0 0.0
    %2864 = vmatpush2.msra.mxu0 0.0
    %2865 = vmatprep.subr.mxu0 0.0
    %2866 = vmatpush2.msra.mxu0 0.0
    %2867 = vmatprep.subr.mxu0 0.0
    %2868 = vmatpush2.msra.mxu0 0.0
    %2869 = vmatprep.subr.mxu0 0.0
    %2870 = vmatpush2.msra.mxu0 0.0
    %2871 = vmatprep.subr.mxu0 0.0
    %2872 = vmatpush2.msra.mxu0 0.0
    %2873 = vmatprep.subr.mxu0 0.0
    %2874 = vmatpush2.msra.mxu0 0.0
    %2875 = vmatprep.subr.mxu0 0.0
    %2876 = vmatpush2.msra.mxu0 0.0
    %2877 = vmatprep.subr.mxu0 0.0
    %2878 = vmatpush2.msra.mxu0 0.0
    %2879 = vmatprep.subr.mxu0 0.0
    %2880 = vmatpush2.msra.mxu0 0.0
    %2881 = vmatprep.subr.mxu0 0.0
    %2882 = vmatpush2.msra.mxu0 0.0
    %2883 = vmatprep.subr.mxu0 0.0
    %2884 = vmatpush2.msra.mxu0 0.0
    %2885 = vmatprep.subr.mxu0 0.0
    %2886 = vmatpush2.msra.mxu0 0.0
    %2887 = vmatprep.subr.mxu0 0.0
    %2888 = vmatpush2.msra.mxu0 0.0
    %2889 = vmatprep.subr.mxu0 0.0
    %2890 = vmatpush2.msra.mxu0 0.0
    %2891 = vmatprep.mubr.f32.mxu0 0.0
    %2892 = vmatmul.mubr.f32.gmra.mxu0 %v2825
    %v2893 = vpop.f32.mrf.mxu0
    %v2894 = vadd.f32 0.0, %v2893
    %v2895 = vpop.f32.mrf.mxu0
    %2896 = vdwg.mxu0
    %2897 = vrot.lane.b32.xlu0 %v2038, 64
    %v2898 = vpop.permute.xlu0 %2897
    %v2901 = vsel %vm197, %v2739, 0
    %2903 = vmatprep.subr.mxu0 0.0
    %2904 = vmatpush1.msra.mxu0 0.0
    %2905 = vmatprep.subr.mxu0 0.0
    %2906 = vmatpush1.msra.mxu0 0.0
    %2907 = vmatprep.subr.mxu0 0.0
    %2908 = vmatpush1.msra.mxu0 0.0
    %2909 = vmatprep.subr.mxu0 0.0
    %2910 = vmatpush1.msra.mxu0 0.0
    %2911 = vmatprep.subr.mxu0 0.0
    %2912 = vmatpush1.msra.mxu0 0.0
    %2913 = vmatprep.subr.mxu0 0.0
    %2914 = vmatpush1.msra.mxu0 0.0
    %2915 = vmatprep.subr.mxu0 0.0
    %2916 = vmatpush1.msra.mxu0 0.0
    %2917 = vmatprep.subr.mxu0 0.0
    %2918 = vmatpush1.msra.mxu0 0.0
    %2919 = vmatprep.subr.mxu0 0.0
    %2920 = vmatpush1.msra.mxu0 0.0
    %2921 = vmatprep.subr.mxu0 0.0
    %2922 = vmatpush1.msra.mxu0 0.0
    %2923 = vmatprep.subr.mxu0 0.0
    %2924 = vmatpush1.msra.mxu0 0.0
    %2925 = vmatprep.subr.mxu0 0.0
    %2926 = vmatpush1.msra.mxu0 0.0
    %2927 = vmatprep.subr.mxu0 0.0
    %2928 = vmatpush1.msra.mxu0 0.0
    %2929 = vmatprep.subr.mxu0 0.0
    %2930 = vmatpush1.msra.mxu0 0.0
    %2931 = vmatprep.subr.mxu0 0.0
    %2932 = vmatpush1.msra.mxu0 0.0
    %2933 = vmatprep.subr.mxu0 0.0
    %2934 = vmatpush1.msra.mxu0 %v2898
    %2935 = vmatprep.subr.mxu0 0.0
    %2936 = vmatpush2.msra.mxu0 0.0
    %2937 = vmatprep.subr.mxu0 0.0
    %2938 = vmatpush2.msra.mxu0 0.0
    %2939 = vmatprep.subr.mxu0 0.0
    %2940 = vmatpush2.msra.mxu0 0.0
    %2941 = vmatprep.subr.mxu0 0.0
    %2942 = vmatpush2.msra.mxu0 0.0
    %2943 = vmatprep.subr.mxu0 0.0
    %2944 = vmatpush2.msra.mxu0 0.0
    %2945 = vmatprep.subr.mxu0 0.0
    %2946 = vmatpush2.msra.mxu0 0.0
    %2947 = vmatprep.subr.mxu0 0.0
    %2948 = vmatpush2.msra.mxu0 0.0
    %2949 = vmatprep.subr.mxu0 0.0
    %2950 = vmatpush2.msra.mxu0 0.0
    %2951 = vmatprep.subr.mxu0 0.0
    %2952 = vmatpush2.msra.mxu0 0.0
    %2953 = vmatprep.subr.mxu0 0.0
    %2954 = vmatpush2.msra.mxu0 0.0
    %2955 = vmatprep.subr.mxu0 0.0
    %2956 = vmatpush2.msra.mxu0 0.0
    %2957 = vmatprep.subr.mxu0 0.0
    %2958 = vmatpush2.msra.mxu0 0.0
    %2959 = vmatprep.subr.mxu0 0.0
    %2960 = vmatpush2.msra.mxu0 0.0
    %2961 = vmatprep.subr.mxu0 0.0
    %2962 = vmatpush2.msra.mxu0 0.0
    %2963 = vmatprep.subr.mxu0 0.0
    %2964 = vmatpush2.msra.mxu0 0.0
    %2965 = vmatprep.subr.mxu0 0.0
    %2966 = vmatpush2.msra.mxu0 0.0
    %2967 = vmatprep.mubr.f32.mxu0 0.0
    %2968 = vmatmul.mubr.f32.gmra.mxu0 %v2901
    %v2969 = vpop.f32.mrf.mxu0
    %v2970 = vadd.f32 0.0, %v2969
    %v2971 = vpop.f32.mrf.mxu0
    %2972 = vdwg.mxu0
    %2973 = vrot.lane.b32.xlu0 %v2040, 64
    %v2974 = vpop.permute.xlu0 %2973
    %v2977 = vsel %vm197, %v2740, 0
    %2979 = vmatprep.subr.mxu0 0.0
    %2980 = vmatpush1.msra.mxu0 0.0
    %2981 = vmatprep.subr.mxu0 0.0
    %2982 = vmatpush1.msra.mxu0 0.0
    %2983 = vmatprep.subr.mxu0 0.0
    %2984 = vmatpush1.msra.mxu0 0.0
    %2985 = vmatprep.subr.mxu0 0.0
    %2986 = vmatpush1.msra.mxu0 0.0
    %2987 = vmatprep.subr.mxu0 0.0
    %2988 = vmatpush1.msra.mxu0 0.0
    %2989 = vmatprep.subr.mxu0 0.0
    %2990 = vmatpush1.msra.mxu0 0.0
    %2991 = vmatprep.subr.mxu0 0.0
    %2992 = vmatpush1.msra.mxu0 0.0
    %2993 = vmatprep.subr.mxu0 0.0
    %2994 = vmatpush1.msra.mxu0 0.0
    %2995 = vmatprep.subr.mxu0 0.0
    %2996 = vmatpush1.msra.mxu0 0.0
    %2997 = vmatprep.subr.mxu0 0.0
    %2998 = vmatpush1.msra.mxu0 0.0
    %2999 = vmatprep.subr.mxu0 0.0
    %3000 = vmatpush1.msra.mxu0 0.0
    %3001 = vmatprep.subr.mxu0 0.0
    %3002 = vmatpush1.msra.mxu0 0.0
    %3003 = vmatprep.subr.mxu0 0.0
    %3004 = vmatpush1.msra.mxu0 0.0
    %3005 = vmatprep.subr.mxu0 0.0
    %3006 = vmatpush1.msra.mxu0 0.0
    %3007 = vmatprep.subr.mxu0 0.0
    %3008 = vmatpush1.msra.mxu0 0.0
    %3009 = vmatprep.subr.mxu0 0.0
    %3010 = vmatpush1.msra.mxu0 %v2974
    %3011 = vmatprep.subr.mxu0 0.0
    %3012 = vmatpush2.msra.mxu0 0.0
    %3013 = vmatprep.subr.mxu0 0.0
    %3014 = vmatpush2.msra.mxu0 0.0
    %3015 = vmatprep.subr.mxu0 0.0
    %3016 = vmatpush2.msra.mxu0 0.0
    %3017 = vmatprep.subr.mxu0 0.0
    %3018 = vmatpush2.msra.mxu0 0.0
    %3019 = vmatprep.subr.mxu0 0.0
    %3020 = vmatpush2.msra.mxu0 0.0
    %3021 = vmatprep.subr.mxu0 0.0
    %3022 = vmatpush2.msra.mxu0 0.0
    %3023 = vmatprep.subr.mxu0 0.0
    %3024 = vmatpush2.msra.mxu0 0.0
    %3025 = vmatprep.subr.mxu0 0.0
    %3026 = vmatpush2.msra.mxu0 0.0
    %3027 = vmatprep.subr.mxu0 0.0
    %3028 = vmatpush2.msra.mxu0 0.0
    %3029 = vmatprep.subr.mxu0 0.0
    %3030 = vmatpush2.msra.mxu0 0.0
    %3031 = vmatprep.subr.mxu0 0.0
    %3032 = vmatpush2.msra.mxu0 0.0
    %3033 = vmatprep.subr.mxu0 0.0
    %3034 = vmatpush2.msra.mxu0 0.0
    %3035 = vmatprep.subr.mxu0 0.0
    %3036 = vmatpush2.msra.mxu0 0.0
    %3037 = vmatprep.subr.mxu0 0.0
    %3038 = vmatpush2.msra.mxu0 0.0
    %3039 = vmatprep.subr.mxu0 0.0
    %3040 = vmatpush2.msra.mxu0 0.0
    %3041 = vmatprep.subr.mxu0 0.0
    %3042 = vmatpush2.msra.mxu0 0.0
    %3043 = vmatprep.mubr.f32.mxu0 0.0
    %3044 = vmatmul.mubr.f32.gmra.mxu0 %v2977
    %v3045 = vpop.f32.mrf.mxu0
    %v3046 = vadd.f32 0.0, %v3045
    %v3047 = vpop.f32.mrf.mxu0
    %3048 = vdwg.mxu0
    %3049 = vrot.lane.b32.xlu0 %v2042, 64
    %v3050 = vpop.permute.xlu0 %3049
    %v3053 = vsel %vm197, %v2741, 0
    %3055 = vmatprep.subr.mxu0 0.0
    %3056 = vmatpush1.msra.mxu0 0.0
    %3057 = vmatprep.subr.mxu0 0.0
    %3058 = vmatpush1.msra.mxu0 0.0
    %3059 = vmatprep.subr.mxu0 0.0
    %3060 = vmatpush1.msra.mxu0 0.0
    %3061 = vmatprep.subr.mxu0 0.0
    %3062 = vmatpush1.msra.mxu0 0.0
    %3063 = vmatprep.subr.mxu0 0.0
    %3064 = vmatpush1.msra.mxu0 0.0
    %3065 = vmatprep.subr.mxu0 0.0
    %3066 = vmatpush1.msra.mxu0 0.0
    %3067 = vmatprep.subr.mxu0 0.0
    %3068 = vmatpush1.msra.mxu0 0.0
    %3069 = vmatprep.subr.mxu0 0.0
    %3070 = vmatpush1.msra.mxu0 0.0
    %3071 = vmatprep.subr.mxu0 0.0
    %3072 = vmatpush1.msra.mxu0 0.0
    %3073 = vmatprep.subr.mxu0 0.0
    %3074 = vmatpush1.msra.mxu0 0.0
    %3075 = vmatprep.subr.mxu0 0.0
    %3076 = vmatpush1.msra.mxu0 0.0
    %3077 = vmatprep.subr.mxu0 0.0
    %3078 = vmatpush1.msra.mxu0 0.0
    %3079 = vmatprep.subr.mxu0 0.0
    %3080 = vmatpush1.msra.mxu0 0.0
    %3081 = vmatprep.subr.mxu0 0.0
    %3082 = vmatpush1.msra.mxu0 0.0
    %3083 = vmatprep.subr.mxu0 0.0
    %3084 = vmatpush1.msra.mxu0 0.0
    %3085 = vmatprep.subr.mxu0 0.0
    %3086 = vmatpush1.msra.mxu0 %v3050
    %3087 = vmatprep.subr.mxu0 0.0
    %3088 = vmatpush2.msra.mxu0 0.0
    %3089 = vmatprep.subr.mxu0 0.0
    %3090 = vmatpush2.msra.mxu0 0.0
    %3091 = vmatprep.subr.mxu0 0.0
    %3092 = vmatpush2.msra.mxu0 0.0
    %3093 = vmatprep.subr.mxu0 0.0
    %3094 = vmatpush2.msra.mxu0 0.0
    %3095 = vmatprep.subr.mxu0 0.0
    %3096 = vmatpush2.msra.mxu0 0.0
    %3097 = vmatprep.subr.mxu0 0.0
    %3098 = vmatpush2.msra.mxu0 0.0
    %3099 = vmatprep.subr.mxu0 0.0
    %3100 = vmatpush2.msra.mxu0 0.0
    %3101 = vmatprep.subr.mxu0 0.0
    %3102 = vmatpush2.msra.mxu0 0.0
    %3103 = vmatprep.subr.mxu0 0.0
    %3104 = vmatpush2.msra.mxu0 0.0
    %3105 = vmatprep.subr.mxu0 0.0
    %3106 = vmatpush2.msra.mxu0 0.0
    %3107 = vmatprep.subr.mxu0 0.0
    %3108 = vmatpush2.msra.mxu0 0.0
    %3109 = vmatprep.subr.mxu0 0.0
    %3110 = vmatpush2.msra.mxu0 0.0
    %3111 = vmatprep.subr.mxu0 0.0
    %3112 = vmatpush2.msra.mxu0 0.0
    %3113 = vmatprep.subr.mxu0 0.0
    %3114 = vmatpush2.msra.mxu0 0.0
    %3115 = vmatprep.subr.mxu0 0.0
    %3116 = vmatpush2.msra.mxu0 0.0
    %3117 = vmatprep.subr.mxu0 0.0
    %3118 = vmatpush2.msra.mxu0 0.0
    %3119 = vmatprep.mubr.f32.mxu0 0.0
    %3120 = vmatmul.mubr.f32.gmra.mxu0 %v3053
    %v3121 = vpop.f32.mrf.mxu0
    %v3122 = vadd.f32 0.0, %v3121
    %v3123 = vpop.f32.mrf.mxu0
    %3124 = vdwg.mxu0
    %3125 = vrot.lane.b32.xlu0 %v2044, 64
    %v3126 = vpop.permute.xlu0 %3125
    %v3129 = vsel %vm197, %v2742, 0
    %3131 = vmatprep.subr.mxu0 0.0
    %3132 = vmatpush1.msra.mxu0 0.0
    %3133 = vmatprep.subr.mxu0 0.0
    %3134 = vmatpush1.msra.mxu0 0.0
    %3135 = vmatprep.subr.mxu0 0.0
    %3136 = vmatpush1.msra.mxu0 0.0
    %3137 = vmatprep.subr.mxu0 0.0
    %3138 = vmatpush1.msra.mxu0 0.0
    %3139 = vmatprep.subr.mxu0 0.0
    %3140 = vmatpush1.msra.mxu0 0.0
    %3141 = vmatprep.subr.mxu0 0.0
    %3142 = vmatpush1.msra.mxu0 0.0
    %3143 = vmatprep.subr.mxu0 0.0
    %3144 = vmatpush1.msra.mxu0 0.0
    %3145 = vmatprep.subr.mxu0 0.0
    %3146 = vmatpush1.msra.mxu0 0.0
    %3147 = vmatprep.subr.mxu0 0.0
    %3148 = vmatpush1.msra.mxu0 0.0
    %3149 = vmatprep.subr.mxu0 0.0
    %3150 = vmatpush1.msra.mxu0 0.0
    %3151 = vmatprep.subr.mxu0 0.0
    %3152 = vmatpush1.msra.mxu0 0.0
    %3153 = vmatprep.subr.mxu0 0.0
    %3154 = vmatpush1.msra.mxu0 0.0
    %3155 = vmatprep.subr.mxu0 0.0
    %3156 = vmatpush1.msra.mxu0 0.0
    %3157 = vmatprep.subr.mxu0 0.0
    %3158 = vmatpush1.msra.mxu0 0.0
    %3159 = vmatprep.subr.mxu0 0.0
    %3160 = vmatpush1.msra.mxu0 0.0
    %3161 = vmatprep.subr.mxu0 0.0
    %3162 = vmatpush1.msra.mxu0 %v3126
    %3163 = vmatprep.subr.mxu0 0.0
    %3164 = vmatpush2.msra.mxu0 0.0
    %3165 = vmatprep.subr.mxu0 0.0
    %3166 = vmatpush2.msra.mxu0 0.0
    %3167 = vmatprep.subr.mxu0 0.0
    %3168 = vmatpush2.msra.mxu0 0.0
    %3169 = vmatprep.subr.mxu0 0.0
    %3170 = vmatpush2.msra.mxu0 0.0
    %3171 = vmatprep.subr.mxu0 0.0
    %3172 = vmatpush2.msra.mxu0 0.0
    %3173 = vmatprep.subr.mxu0 0.0
    %3174 = vmatpush2.msra.mxu0 0.0
    %3175 = vmatprep.subr.mxu0 0.0
    %3176 = vmatpush2.msra.mxu0 0.0
    %3177 = vmatprep.subr.mxu0 0.0
    %3178 = vmatpush2.msra.mxu0 0.0
    %3179 = vmatprep.subr.mxu0 0.0
    %3180 = vmatpush2.msra.mxu0 0.0
    %3181 = vmatprep.subr.mxu0 0.0
    %3182 = vmatpush2.msra.mxu0 0.0
    %3183 = vmatprep.subr.mxu0 0.0
    %3184 = vmatpush2.msra.mxu0 0.0
    %3185 = vmatprep.subr.mxu0 0.0
    %3186 = vmatpush2.msra.mxu0 0.0
    %3187 = vmatprep.subr.mxu0 0.0
    %3188 = vmatpush2.msra.mxu0 0.0
    %3189 = vmatprep.subr.mxu0 0.0
    %3190 = vmatpush2.msra.mxu0 0.0
    %3191 = vmatprep.subr.mxu0 0.0
    %3192 = vmatpush2.msra.mxu0 0.0
    %3193 = vmatprep.subr.mxu0 0.0
    %3194 = vmatpush2.msra.mxu0 0.0
    %3195 = vmatprep.mubr.f32.mxu0 0.0
    %3196 = vmatmul.mubr.f32.gmra.mxu0 %v3129
    %v3197 = vpop.f32.mrf.mxu0
    %v3198 = vadd.f32 0.0, %v3197
    %v3199 = vpop.f32.mrf.mxu0
    %3200 = vdwg.mxu0
    %3201 = vrot.lane.b32.xlu0 %v2046, 64
    %v3202 = vpop.permute.xlu0 %3201
    %v3205 = vsel %vm197, %v2743, 0
    %3207 = vmatprep.subr.mxu0 0.0
    %3208 = vmatpush1.msra.mxu0 0.0
    %3209 = vmatprep.subr.mxu0 0.0
    %3210 = vmatpush1.msra.mxu0 0.0
    %3211 = vmatprep.subr.mxu0 0.0
    %3212 = vmatpush1.msra.mxu0 0.0
    %3213 = vmatprep.subr.mxu0 0.0
    %3214 = vmatpush1.msra.mxu0 0.0
    %3215 = vmatprep.subr.mxu0 0.0
    %3216 = vmatpush1.msra.mxu0 0.0
    %3217 = vmatprep.subr.mxu0 0.0
    %3218 = vmatpush1.msra.mxu0 0.0
    %3219 = vmatprep.subr.mxu0 0.0
    %3220 = vmatpush1.msra.mxu0 0.0
    %3221 = vmatprep.subr.mxu0 0.0
    %3222 = vmatpush1.msra.mxu0 0.0
    %3223 = vmatprep.subr.mxu0 0.0
    %3224 = vmatpush1.msra.mxu0 0.0
    %3225 = vmatprep.subr.mxu0 0.0
    %3226 = vmatpush1.msra.mxu0 0.0
    %3227 = vmatprep.subr.mxu0 0.0
    %3228 = vmatpush1.msra.mxu0 0.0
    %3229 = vmatprep.subr.mxu0 0.0
    %3230 = vmatpush1.msra.mxu0 0.0
    %3231 = vmatprep.subr.mxu0 0.0
    %3232 = vmatpush1.msra.mxu0 0.0
    %3233 = vmatprep.subr.mxu0 0.0
    %3234 = vmatpush1.msra.mxu0 0.0
    %3235 = vmatprep.subr.mxu0 0.0
    %3236 = vmatpush1.msra.mxu0 0.0
    %3237 = vmatprep.subr.mxu0 0.0
    %3238 = vmatpush1.msra.mxu0 %v3202
    %3239 = vmatprep.subr.mxu0 0.0
    %3240 = vmatpush2.msra.mxu0 0.0
    %3241 = vmatprep.subr.mxu0 0.0
    %3242 = vmatpush2.msra.mxu0 0.0
    %3243 = vmatprep.subr.mxu0 0.0
    %3244 = vmatpush2.msra.mxu0 0.0
    %3245 = vmatprep.subr.mxu0 0.0
    %3246 = vmatpush2.msra.mxu0 0.0
    %3247 = vmatprep.subr.mxu0 0.0
    %3248 = vmatpush2.msra.mxu0 0.0
    %3249 = vmatprep.subr.mxu0 0.0
    %3250 = vmatpush2.msra.mxu0 0.0
    %3251 = vmatprep.subr.mxu0 0.0
    %3252 = vmatpush2.msra.mxu0 0.0
    %3253 = vmatprep.subr.mxu0 0.0
    %3254 = vmatpush2.msra.mxu0 0.0
    %3255 = vmatprep.subr.mxu0 0.0
    %3256 = vmatpush2.msra.mxu0 0.0
    %3257 = vmatprep.subr.mxu0 0.0
    %3258 = vmatpush2.msra.mxu0 0.0
    %3259 = vmatprep.subr.mxu0 0.0
    %3260 = vmatpush2.msra.mxu0 0.0
    %3261 = vmatprep.subr.mxu0 0.0
    %3262 = vmatpush2.msra.mxu0 0.0
    %3263 = vmatprep.subr.mxu0 0.0
    %3264 = vmatpush2.msra.mxu0 0.0
    %3265 = vmatprep.subr.mxu0 0.0
    %3266 = vmatpush2.msra.mxu0 0.0
    %3267 = vmatprep.subr.mxu0 0.0
    %3268 = vmatpush2.msra.mxu0 0.0
    %3269 = vmatprep.subr.mxu0 0.0
    %3270 = vmatpush2.msra.mxu0 0.0
    %3271 = vmatprep.mubr.f32.mxu0 0.0
    %3272 = vmatmul.mubr.f32.gmra.mxu0 %v3205
    %v3273 = vpop.f32.mrf.mxu0
    %v3274 = vadd.f32 0.0, %v3273
    %v3275 = vpop.f32.mrf.mxu0
    %3276 = vdwg.mxu0
    %3277 = vrot.lane.b32.xlu0 %v2048, 64
    %v3278 = vpop.permute.xlu0 %3277
    %v3281 = vsel %vm197, %v2744, 0
    %3283 = vmatprep.subr.mxu0 0.0
    %3284 = vmatpush1.msra.mxu0 0.0
    %3285 = vmatprep.subr.mxu0 0.0
    %3286 = vmatpush1.msra.mxu0 0.0
    %3287 = vmatprep.subr.mxu0 0.0
    %3288 = vmatpush1.msra.mxu0 0.0
    %3289 = vmatprep.subr.mxu0 0.0
    %3290 = vmatpush1.msra.mxu0 0.0
    %3291 = vmatprep.subr.mxu0 0.0
    %3292 = vmatpush1.msra.mxu0 0.0
    %3293 = vmatprep.subr.mxu0 0.0
    %3294 = vmatpush1.msra.mxu0 0.0
    %3295 = vmatprep.subr.mxu0 0.0
    %3296 = vmatpush1.msra.mxu0 0.0
    %3297 = vmatprep.subr.mxu0 0.0
    %3298 = vmatpush1.msra.mxu0 0.0
    %3299 = vmatprep.subr.mxu0 0.0
    %3300 = vmatpush1.msra.mxu0 0.0
    %3301 = vmatprep.subr.mxu0 0.0
    %3302 = vmatpush1.msra.mxu0 0.0
    %3303 = vmatprep.subr.mxu0 0.0
    %3304 = vmatpush1.msra.mxu0 0.0
    %3305 = vmatprep.subr.mxu0 0.0
    %3306 = vmatpush1.msra.mxu0 0.0
    %3307 = vmatprep.subr.mxu0 0.0
    %3308 = vmatpush1.msra.mxu0 0.0
    %3309 = vmatprep.subr.mxu0 0.0
    %3310 = vmatpush1.msra.mxu0 0.0
    %3311 = vmatprep.subr.mxu0 0.0
    %3312 = vmatpush1.msra.mxu0 0.0
    %3313 = vmatprep.subr.mxu0 0.0
    %3314 = vmatpush1.msra.mxu0 %v3278
    %3315 = vmatprep.subr.mxu0 0.0
    %3316 = vmatpush2.msra.mxu0 0.0
    %3317 = vmatprep.subr.mxu0 0.0
    %3318 = vmatpush2.msra.mxu0 0.0
    %3319 = vmatprep.subr.mxu0 0.0
    %3320 = vmatpush2.msra.mxu0 0.0
    %3321 = vmatprep.subr.mxu0 0.0
    %3322 = vmatpush2.msra.mxu0 0.0
    %3323 = vmatprep.subr.mxu0 0.0
    %3324 = vmatpush2.msra.mxu0 0.0
    %3325 = vmatprep.subr.mxu0 0.0
    %3326 = vmatpush2.msra.mxu0 0.0
    %3327 = vmatprep.subr.mxu0 0.0
    %3328 = vmatpush2.msra.mxu0 0.0
    %3329 = vmatprep.subr.mxu0 0.0
    %3330 = vmatpush2.msra.mxu0 0.0
    %3331 = vmatprep.subr.mxu0 0.0
    %3332 = vmatpush2.msra.mxu0 0.0
    %3333 = vmatprep.subr.mxu0 0.0
    %3334 = vmatpush2.msra.mxu0 0.0
    %3335 = vmatprep.subr.mxu0 0.0
    %3336 = vmatpush2.msra.mxu0 0.0
    %3337 = vmatprep.subr.mxu0 0.0
    %3338 = vmatpush2.msra.mxu0 0.0
    %3339 = vmatprep.subr.mxu0 0.0
    %3340 = vmatpush2.msra.mxu0 0.0
    %3341 = vmatprep.subr.mxu0 0.0
    %3342 = vmatpush2.msra.mxu0 0.0
    %3343 = vmatprep.subr.mxu0 0.0
    %3344 = vmatpush2.msra.mxu0 0.0
    %3345 = vmatprep.subr.mxu0 0.0
    %3346 = vmatpush2.msra.mxu0 0.0
    %3347 = vmatprep.mubr.f32.mxu0 0.0
    %3348 = vmatmul.mubr.f32.gmra.mxu0 %v3281
    %v3349 = vpop.f32.mrf.mxu0
    %v3350 = vadd.f32 0.0, %v3349
    %v3351 = vpop.f32.mrf.mxu0
    %3352 = vdwg.mxu0
    %3355 = vrot.lane.b32.xlu0 %v2970, 8
    %v3356 = vpop.permute.xlu0 %3355
    %3357 = vrot.lane.b32.xlu0 %v3046, 8
    %v3358 = vpop.permute.xlu0 %3357
    %3363 = vrot.lane.b32.xlu0 %v3122, 16
    %v3364 = vpop.permute.xlu0 %3363
    %3365 = vrot.lane.b32.xlu0 %v3198, 16
    %v3366 = vpop.permute.xlu0 %3365
    %3371 = vrot.lane.b32.xlu0 %v3274, 24
    %v3372 = vpop.permute.xlu0 %3371
    %3373 = vrot.lane.b32.xlu0 %v3350, 24
    %v3374 = vpop.permute.xlu0 %3373
    %v3377 = vsel %vm197, %v2818, %v3356
    %v3378 = vsel %vm197, %v2894, %v3358
    %v3379 = vsel %vm1526, %v3377, %v3364
    %v3380 = vsel %vm1526, %v3378, %v3366
    %v3381 = vsel %vm1529, %v3379, %v3372
    %v3382 = vsel %vm1529, %v3380, %v3374
    %v3383 = vlaneseq
    %v3384 = vshrl.u32 %v3383, 7
    %v3385 = vsub.s32 0, %v3384
    %v3386 = vrot.slane %v1944, %v3385
    %3391 = vrot.lane.b32.xlu0 %v1928, 32
    %v3392 = vpop.permute.xlu0 %3391
    %3393 = vrot.lane.b32.xlu0 %v1929, 32
    %v3394 = vpop.permute.xlu0 %3393
    %3395 = vrot.lane.b32.xlu0 %v1930, 32
    %v3396 = vpop.permute.xlu0 %3395
    %3397 = vrot.lane.b32.xlu0 %v1931, 32
    %v3398 = vpop.permute.xlu0 %3397
    %v3404 = vsel %vm99, %v3381, 0
    %v3407 = vsel %vm99, %v3382, 0
    %3409 = vmatprep.subr.mxu0 0.0
    %3410 = vmatpush1.msra.mxu0 0.0
    %3411 = vmatprep.subr.mxu0 0.0
    %3412 = vmatpush1.msra.mxu0 0.0
    %3413 = vmatprep.subr.mxu0 0.0
    %3414 = vmatpush1.msra.mxu0 0.0
    %3415 = vmatprep.subr.mxu0 0.0
    %3416 = vmatpush1.msra.mxu0 0.0
    %3417 = vmatprep.subr.mxu0 0.0
    %3418 = vmatpush1.msra.mxu0 0.0
    %3419 = vmatprep.subr.mxu0 0.0
    %3420 = vmatpush1.msra.mxu0 0.0
    %3421 = vmatprep.subr.mxu0 0.0
    %3422 = vmatpush1.msra.mxu0 0.0
    %3423 = vmatprep.subr.mxu0 0.0
    %3424 = vmatpush1.msra.mxu0 0.0
    %3425 = vmatprep.subr.mxu0 0.0
    %3426 = vmatpush1.msra.mxu0 0.0
    %3427 = vmatprep.subr.mxu0 0.0
    %3428 = vmatpush1.msra.mxu0 0.0
    %3429 = vmatprep.subr.mxu0 0.0
    %3430 = vmatpush1.msra.mxu0 0.0
    %3431 = vmatprep.subr.mxu0 0.0
    %3432 = vmatpush1.msra.mxu0 0.0
    %3433 = vmatprep.subr.mxu0 0.0
    %3434 = vmatpush1.msra.mxu0 %v3398
    %3435 = vmatprep.subr.mxu0 0.0
    %3436 = vmatpush1.msra.mxu0 %v3396
    %3437 = vmatprep.subr.mxu0 0.0
    %3438 = vmatpush1.msra.mxu0 %v3394
    %3439 = vmatprep.subr.mxu0 0.0
    %3440 = vmatpush1.msra.mxu0 %v3392
    %3441 = vmatprep.subr.mxu0 0.0
    %3442 = vmatpush2.msra.mxu0 0.0
    %3443 = vmatprep.subr.mxu0 0.0
    %3444 = vmatpush2.msra.mxu0 0.0
    %3445 = vmatprep.subr.mxu0 0.0
    %3446 = vmatpush2.msra.mxu0 0.0
    %3447 = vmatprep.subr.mxu0 0.0
    %3448 = vmatpush2.msra.mxu0 0.0
    %3449 = vmatprep.subr.mxu0 0.0
    %3450 = vmatpush2.msra.mxu0 0.0
    %3451 = vmatprep.subr.mxu0 0.0
    %3452 = vmatpush2.msra.mxu0 0.0
    %3453 = vmatprep.subr.mxu0 0.0
    %3454 = vmatpush2.msra.mxu0 0.0
    %3455 = vmatprep.subr.mxu0 0.0
    %3456 = vmatpush2.msra.mxu0 0.0
    %3457 = vmatprep.subr.mxu0 0.0
    %3458 = vmatpush2.msra.mxu0 0.0
    %3459 = vmatprep.subr.mxu0 0.0
    %3460 = vmatpush2.msra.mxu0 0.0
    %3461 = vmatprep.subr.mxu0 0.0
    %3462 = vmatpush2.msra.mxu0 0.0
    %3463 = vmatprep.subr.mxu0 0.0
    %3464 = vmatpush2.msra.mxu0 0.0
    %3465 = vmatprep.subr.mxu0 0.0
    %3466 = vmatpush2.msra.mxu0 0.0
    %3467 = vmatprep.subr.mxu0 0.0
    %3468 = vmatpush2.msra.mxu0 0.0
    %3469 = vmatprep.subr.mxu0 0.0
    %3470 = vmatpush2.msra.mxu0 0.0
    %3471 = vmatprep.subr.mxu0 0.0
    %3472 = vmatpush2.msra.mxu0 0.0
    %3473 = vmatprep.mubr.f32.mxu0 0.0
    %3474 = vmatmul.mubr.f32.gmra.mxu0 %v3404
    %v3475 = vpop.f32.mrf.mxu0
    %v3476 = vadd.f32 %v3386, %v3475
    %v3477 = vpop.f32.mrf.mxu0
    %3478 = vmatprep.mubr.f32.mxu0 0.0
    %3479 = vmatmul.mubr.f32.gmra.mxu0 %v3407
    %v3480 = vpop.f32.mrf.mxu0
    %v3481 = vadd.f32 %v3386, %v3480
    %v3482 = vpop.f32.mrf.mxu0
    %3483 = vdwg.mxu0
    %v3484 = vadd.f32 %v1925, %v3476
    %v3485 = vadd.f32 %v1926, %v3481
    %v3486 = vsel %vm99, %v3484, 0.0
    %3487 = vadd.xlane.f32.xlu0 %v3486
    %v3488 = vpop.xlane.xlu0 %3487
    %v3489 = vsel %vm99, %v3485, 0.0
    %3490 = vadd.xlane.f32.xlu0 %v3489
    %v3491 = vpop.xlane.xlu0 %3490
    %v3492 = vmul.f32 %v3488, %v1641
    %v3493 = vmul.f32 %v3491, %v1641
    %v3494 = vmul.f32 %v3484, %v3484
    %v3495 = vmul.f32 %v3485, %v3485
    %v3496 = vsel %vm99, %v3494, 0.0
    %3497 = vadd.xlane.f32.xlu0 %v3496
    %v3498 = vpop.xlane.xlu0 %3497
    %v3499 = vsel %vm99, %v3495, 0.0
    %3500 = vadd.xlane.f32.xlu0 %v3499
    %v3501 = vpop.xlane.xlu0 %3500
    %v3502 = vmul.f32 %v3498, %v1641
    %v3503 = vmul.f32 %v3501, %v1641
    %v3504 = vmul.f32 %v3492, %v3492
    %v3505 = vmul.f32 %v3493, %v3493
    %v3506 = vsub.f32 %v3502, %v3504
    %v3507 = vsub.f32 %v3503, %v3505
    %v3508 = vsub.f32 %v3484, %v3492
    %v3509 = vsub.f32 %v3485, %v3493
    %v3510 = vadd.f32 %v3506, 1e-05
    %v3511 = vadd.f32 %v3507, 1e-05
    %v3512 = vrsqrt.pop %v3510
    %v3513 = vrsqrt.pop %v3511
    %v3514 = vmul.f32 %v3508, %v3512
    %v3515 = vmul.f32 %v3509, %v3513
    %v3516 = vlaneseq
    %v3517 = vshrl.u32 %v3516, 7
    %v3518 = vsub.s32 0, %v3517
    %v3519 = vrot.slane %v1946, %v3518
    %v3520 = vmul.f32 %v3514, %v3519
    %v3521 = vmul.f32 %v3515, %v3519
    %v3522 = vlaneseq
    %v3523 = vshrl.u32 %v3522, 7
    %v3524 = vsub.s32 0, %v3523
    %v3525 = vrot.slane %v1947, %v3524
    %v3526 = vadd.f32 %v3520, %v3525
    %v3527 = vadd.f32 %v3521, %v3525
    %v3528 = vlaneseq
    %v3529 = vshrl.u32 %v3528, 7
    %v3530 = vsub.s32 0, %v3529
    %v3531 = vrot.slane %v1943, %v3530
    %v3533 = vsel %vm99, %v3526, 0
    %v3536 = vsel %vm99, %v3527, 0
    %3538 = vmatprep.subr.mxu0 0.0
    %3539 = vmatpush1.msra.mxu0 0.0
    %3540 = vmatprep.subr.mxu0 0.0
    %3541 = vmatpush1.msra.mxu0 0.0
    %3542 = vmatprep.subr.mxu0 0.0
    %3543 = vmatpush1.msra.mxu0 0.0
    %3544 = vmatprep.subr.mxu0 0.0
    %3545 = vmatpush1.msra.mxu0 0.0
    %3546 = vmatprep.subr.mxu0 0.0
    %3547 = vmatpush1.msra.mxu0 0.0
    %3548 = vmatprep.subr.mxu0 0.0
    %3549 = vmatpush1.msra.mxu0 0.0
    %3550 = vmatprep.subr.mxu0 0.0
    %3551 = vmatpush1.msra.mxu0 0.0
    %3552 = vmatprep.subr.mxu0 0.0
    %3553 = vmatpush1.msra.mxu0 0.0
    %3554 = vmatprep.subr.mxu0 0.0
    %3555 = vmatpush1.msra.mxu0 0.0
    %3556 = vmatprep.subr.mxu0 0.0
    %3557 = vmatpush1.msra.mxu0 0.0
    %3558 = vmatprep.subr.mxu0 0.0
    %3559 = vmatpush1.msra.mxu0 0.0
    %3560 = vmatprep.subr.mxu0 0.0
    %3561 = vmatpush1.msra.mxu0 0.0
    %3562 = vmatprep.subr.mxu0 0.0
    %3563 = vmatpush1.msra.mxu0 %v1936
    %3564 = vmatprep.subr.mxu0 0.0
    %3565 = vmatpush1.msra.mxu0 %v1935
    %3566 = vmatprep.subr.mxu0 0.0
    %3567 = vmatpush1.msra.mxu0 %v1934
    %3568 = vmatprep.subr.mxu0 0.0
    %3569 = vmatpush1.msra.mxu0 %v1933
    %3570 = vmatprep.subr.mxu0 0.0
    %3571 = vmatpush2.msra.mxu0 0.0
    %3572 = vmatprep.subr.mxu0 0.0
    %3573 = vmatpush2.msra.mxu0 0.0
    %3574 = vmatprep.subr.mxu0 0.0
    %3575 = vmatpush2.msra.mxu0 0.0
    %3576 = vmatprep.subr.mxu0 0.0
    %3577 = vmatpush2.msra.mxu0 0.0
    %3578 = vmatprep.subr.mxu0 0.0
    %3579 = vmatpush2.msra.mxu0 0.0
    %3580 = vmatprep.subr.mxu0 0.0
    %3581 = vmatpush2.msra.mxu0 0.0
    %3582 = vmatprep.subr.mxu0 0.0
    %3583 = vmatpush2.msra.mxu0 0.0
    %3584 = vmatprep.subr.mxu0 0.0
    %3585 = vmatpush2.msra.mxu0 0.0
    %3586 = vmatprep.subr.mxu0 0.0
    %3587 = vmatpush2.msra.mxu0 0.0
    %3588 = vmatprep.subr.mxu0 0.0
    %3589 = vmatpush2.msra.mxu0 0.0
    %3590 = vmatprep.subr.mxu0 0.0
    %3591 = vmatpush2.msra.mxu0 0.0
    %3592 = vmatprep.subr.mxu0 0.0
    %3593 = vmatpush2.msra.mxu0 0.0
    %3594 = vmatprep.subr.mxu0 0.0
    %3595 = vmatpush2.msra.mxu0 0.0
    %3596 = vmatprep.subr.mxu0 0.0
    %3597 = vmatpush2.msra.mxu0 0.0
    %3598 = vmatprep.subr.mxu0 0.0
    %3599 = vmatpush2.msra.mxu0 0.0
    %3600 = vmatprep.subr.mxu0 0.0
    %3601 = vmatpush2.msra.mxu0 0.0
    %3602 = vmatprep.mubr.f32.mxu0 0.0
    %3603 = vmatmul.mubr.f32.gmra.mxu0 %v3533
    %v3604 = vpop.f32.mrf.mxu0
    %v3605 = vadd.f32 %v3531, %v3604
    %v3606 = vpop.f32.mrf.mxu0
    %3607 = vmatprep.mubr.f32.mxu0 0.0
    %3608 = vmatmul.mubr.f32.gmra.mxu0 %v3536
    %v3609 = vpop.f32.mrf.mxu0
    %v3610 = vadd.f32 %v3531, %v3609
    %v3611 = vpop.f32.mrf.mxu0
    %3612 = vdwg.mxu0
    %v3613 = vmax.f32 %v3605, 0.0
    %v3614 = vmax.f32 %v3610, 0.0
    %v3615 = vlaneseq
    %v3616 = vshrl.u32 %v3615, 7
    %v3617 = vsub.s32 0, %v3616
    %v3618 = vrot.slane %v1945, %v3617
    %3627 = vrot.lane.b32.xlu0 %v1933, 64
    %v3628 = vpop.permute.xlu0 %3627
    %3629 = vrot.lane.b32.xlu0 %v1934, 64
    %v3630 = vpop.permute.xlu0 %3629
    %3631 = vrot.lane.b32.xlu0 %v1935, 64
    %v3632 = vpop.permute.xlu0 %3631
    %3633 = vrot.lane.b32.xlu0 %v1936, 64
    %v3634 = vpop.permute.xlu0 %3633
    %3635 = vrot.lane.b32.xlu0 %v1937, 64
    %v3636 = vpop.permute.xlu0 %3635
    %3637 = vrot.lane.b32.xlu0 %v1938, 64
    %v3638 = vpop.permute.xlu0 %3637
    %3639 = vrot.lane.b32.xlu0 %v1939, 64
    %v3640 = vpop.permute.xlu0 %3639
    %3641 = vrot.lane.b32.xlu0 %v1940, 64
    %v3642 = vpop.permute.xlu0 %3641
    %v3652 = vsel %vm1801, %v3613, 0
    %v3655 = vsel %vm1801, %v3614, 0
    %3657 = vmatprep.subr.mxu0 0.0
    %3658 = vmatpush1.msra.mxu0 0.0
    %3659 = vmatprep.subr.mxu0 0.0
    %3660 = vmatpush1.msra.mxu0 0.0
    %3661 = vmatprep.subr.mxu0 0.0
    %3662 = vmatpush1.msra.mxu0 0.0
    %3663 = vmatprep.subr.mxu0 0.0
    %3664 = vmatpush1.msra.mxu0 0.0
    %3665 = vmatprep.subr.mxu0 0.0
    %3666 = vmatpush1.msra.mxu0 0.0
    %3667 = vmatprep.subr.mxu0 0.0
    %3668 = vmatpush1.msra.mxu0 0.0
    %3669 = vmatprep.subr.mxu0 0.0
    %3670 = vmatpush1.msra.mxu0 0.0
    %3671 = vmatprep.subr.mxu0 0.0
    %3672 = vmatpush1.msra.mxu0 0.0
    %3673 = vmatprep.subr.mxu0 0.0
    %3674 = vmatpush1.msra.mxu0 %v3642
    %3675 = vmatprep.subr.mxu0 0.0
    %3676 = vmatpush1.msra.mxu0 %v3640
    %3677 = vmatprep.subr.mxu0 0.0
    %3678 = vmatpush1.msra.mxu0 %v3638
    %3679 = vmatprep.subr.mxu0 0.0
    %3680 = vmatpush1.msra.mxu0 %v3636
    %3681 = vmatprep.subr.mxu0 0.0
    %3682 = vmatpush1.msra.mxu0 %v3634
    %3683 = vmatprep.subr.mxu0 0.0
    %3684 = vmatpush1.msra.mxu0 %v3632
    %3685 = vmatprep.subr.mxu0 0.0
    %3686 = vmatpush1.msra.mxu0 %v3630
    %3687 = vmatprep.subr.mxu0 0.0
    %3688 = vmatpush1.msra.mxu0 %v3628
    %3689 = vmatprep.subr.mxu0 0.0
    %3690 = vmatpush2.msra.mxu0 0.0
    %3691 = vmatprep.subr.mxu0 0.0
    %3692 = vmatpush2.msra.mxu0 0.0
    %3693 = vmatprep.subr.mxu0 0.0
    %3694 = vmatpush2.msra.mxu0 0.0
    %3695 = vmatprep.subr.mxu0 0.0
    %3696 = vmatpush2.msra.mxu0 0.0
    %3697 = vmatprep.subr.mxu0 0.0
    %3698 = vmatpush2.msra.mxu0 0.0
    %3699 = vmatprep.subr.mxu0 0.0
    %3700 = vmatpush2.msra.mxu0 0.0
    %3701 = vmatprep.subr.mxu0 0.0
    %3702 = vmatpush2.msra.mxu0 0.0
    %3703 = vmatprep.subr.mxu0 0.0
    %3704 = vmatpush2.msra.mxu0 0.0
    %3705 = vmatprep.subr.mxu0 0.0
    %3706 = vmatpush2.msra.mxu0 0.0
    %3707 = vmatprep.subr.mxu0 0.0
    %3708 = vmatpush2.msra.mxu0 0.0
    %3709 = vmatprep.subr.mxu0 0.0
    %3710 = vmatpush2.msra.mxu0 0.0
    %3711 = vmatprep.subr.mxu0 0.0
    %3712 = vmatpush2.msra.mxu0 0.0
    %3713 = vmatprep.subr.mxu0 0.0
    %3714 = vmatpush2.msra.mxu0 0.0
    %3715 = vmatprep.subr.mxu0 0.0
    %3716 = vmatpush2.msra.mxu0 0.0
    %3717 = vmatprep.subr.mxu0 0.0
    %3718 = vmatpush2.msra.mxu0 0.0
    %3719 = vmatprep.subr.mxu0 0.0
    %3720 = vmatpush2.msra.mxu0 0.0
    %3721 = vmatprep.mubr.f32.mxu0 0.0
    %3722 = vmatmul.mubr.f32.gmra.mxu0 %v3652
    %v3723 = vpop.f32.mrf.mxu0
    %v3724 = vadd.f32 %v3618, %v3723
    %v3725 = vpop.f32.mrf.mxu0
    %3726 = vmatprep.mubr.f32.mxu0 0.0
    %3727 = vmatmul.mubr.f32.gmra.mxu0 %v3655
    %v3728 = vpop.f32.mrf.mxu0
    %v3729 = vadd.f32 %v3618, %v3728
    %v3730 = vpop.f32.mrf.mxu0
    %3731 = vdwg.mxu0
    %v3732 = vadd.f32 %v3526, %v3724
    %v3733 = vadd.f32 %v3527, %v3729
    %v3734 = vsel %vm99, %v3732, 0.0
    %3735 = vadd.xlane.f32.xlu0 %v3734
    %v3736 = vpop.xlane.xlu0 %3735
    %v3737 = vsel %vm99, %v3733, 0.0
    %3738 = vadd.xlane.f32.xlu0 %v3737
    %v3739 = vpop.xlane.xlu0 %3738
    %v3740 = vmul.f32 %v3736, %v1641
    %v3741 = vmul.f32 %v3739, %v1641
    %v3742 = vmul.f32 %v3732, %v3732
    %v3743 = vmul.f32 %v3733, %v3733
    %v3744 = vsel %vm99, %v3742, 0.0
    %3745 = vadd.xlane.f32.xlu0 %v3744
    %v3746 = vpop.xlane.xlu0 %3745
    %v3747 = vsel %vm99, %v3743, 0.0
    %3748 = vadd.xlane.f32.xlu0 %v3747
    %v3749 = vpop.xlane.xlu0 %3748
    %v3750 = vmul.f32 %v3746, %v1641
    %v3751 = vmul.f32 %v3749, %v1641
    %v3752 = vmul.f32 %v3740, %v3740
    %v3753 = vmul.f32 %v3741, %v3741
    %v3754 = vsub.f32 %v3750, %v3752
    %v3755 = vsub.f32 %v3751, %v3753
    %v3756 = vsub.f32 %v3732, %v3740
    %v3757 = vsub.f32 %v3733, %v3741
    %v3758 = vadd.f32 %v3754, 1e-05
    %v3759 = vadd.f32 %v3755, 1e-05
    %v3760 = vrsqrt.pop %v3758
    %v3761 = vrsqrt.pop %v3759
    %v3762 = vmul.f32 %v3756, %v3760
    %v3763 = vmul.f32 %v3757, %v3761
    %v3764 = vlaneseq
    %v3765 = vshrl.u32 %v3764, 7
    %v3766 = vsub.s32 0, %v3765
    %v3767 = vrot.slane %v1948, %v3766
    %v3768 = vmul.f32 %v3762, %v3767
    %v3769 = vmul.f32 %v3763, %v3767
    %v3770 = vlaneseq
    %v3771 = vshrl.u32 %v3770, 7
    %v3772 = vsub.s32 0, %v3771
    %v3773 = vrot.slane %v1949, %v3772
    %v3774 = vadd.f32 %v3768, %v3773
    %v3775 = vadd.f32 %v3769, %v3773
    %3776 = vst.msk [vmem:[#allocation10] sm:$0xff] %vm99, %v3774
    %3777 = vst.msk [vmem:[#allocation10 + $0x8] sm:$0xff] %vm99, %v3775
    // Predicated region
    $region34: #{transformer_forward.1} parent=1 // pred_check
      _
    $region35: #{transformer_forward.1} parent=1 // pred_check_branch
      %3779 = sbr.rel (0) target = $region37
    $region36: #{transformer_forward.1} parent=1 // pred_region
      %s3781 = ssub.s32 256, 256
      %3782 = vsyncadd [#allocation4], %s3781
      %s3783 = sshll.u32 [#allocation10], 4
      %s3784 = int_to_ptr.vmem [resolvable:$true] %s3783
      %3789 = dma.vmem_to_hbm [thread:$0]  %s3784, 256, %s4, [#allocation4], 128, 128, 8
    $region37: #{transformer_forward.1} parent=1 // pred_fallthru
      _
    // Predicated region
    $region38: #{transformer_forward.1} parent=1 // pred_check
      _
    $region39: #{transformer_forward.1} parent=1 // pred_check_branch
      %3791 = sbr.rel (0) target = $region41
    $region40: #{transformer_forward.1} parent=1 // pred_region
      %3792 = dma.done [#allocation4], 256
    $region41: #{transformer_forward.1} parent=1 // pred_fallthru
      _
    %3793 = vsyncpa [#allocation3], 1
    %3794 = vsyncpa [#allocation6], 1
    %3795 = vsyncpa [#allocation9], 1
    %3796 = vsyncpa [#allocation4], 1

</llo_original>
